<compile_context>
chip_gen: v7x
topology: tpu7x:2x2x1
jax: 0.10.0
libtpu: 0.0.40
codegen_flags: <defaults>
</compile_context>

<pallas_src>
import math
import functools

import jax
import jax.numpy as jnp
from jax.experimental import pallas as pl
from jax.experimental.pallas import tpu as pltpu

# ----------------------------- model config ---------------------------------
INPUT_DIM = 32           # d_model
OUTPUT_DIM = 16
NHEAD = 4
HEAD_DIM = INPUT_DIM // NHEAD
NUM_LAYERS = 2
DIM_FEEDFORWARD = 2048   # PyTorch nn.TransformerEncoderLayer default
LN_EPS = 1e-5
BATCH = 2
SEQ = 8
OUT_PAD = 128            # lane-dense padded width for packed slabs / output
FF_CHUNK = 512           # FFN hidden-dim chunk size (4 chunks of 512)


def _layernorm(x, g, b):
    mu = jnp.mean(x, axis=-1, keepdims=True)
    var = jnp.mean((x - mu) ** 2, axis=-1, keepdims=True)
    return (x - mu) * jax.lax.rsqrt(var + LN_EPS) * g + b


# ------------------------------ fused kernel ---------------------------------
def fused_transformer_kernel(x_ref, hmask_ref, bmask_ref,
                             wqkv_ref, wo_ref, small_ref, w1_ref, w2_ref,
                             dec_ref, o_ref, x_scr,
                             *, nhead, bs, d, f, chunk):
    """One grid step = one encoder layer; decoder fused into the last step."""
    l = pl.program_id(0)

    @pl.when(l == 0)
    def _():
        x_scr[...] = x_ref[...]

    x = x_scr[...]                       # (bs, d) f32, carried across layers
    hmask = hmask_ref[...]               # (nhead*bs, d) head column masks, stacked
    bmask = bmask_ref[...]               # (nhead*bs, bs) additive batch mask

    # packed per-layer vectors: exactly one (8,128) vreg
    small = small_ref[0]
    qkv_b = small[0:1, :]                # [bq*scale | bk | bv | 0]
    bo    = small[1:2, 0:d]
    ln1_g = small[2:3, 0:d]
    ln1_b = small[3:4, 0:d]
    b2    = small[4:5, 0:d]
    ln2_g = small[5:6, 0:d]
    ln2_b = small[6:7, 0:d]

    # --- fused QKV projection: one MXU push + one bias add (scale pre-folded)
    qkv = jnp.dot(x, wqkv_ref[0], preferred_element_type=jnp.float32) + qkv_b
    q = qkv[:, 0:d]                      # already scaled by 1/sqrt(head_dim)
    k = qkv[:, d:2 * d]
    v = qkv[:, 2 * d:3 * d]

    # --- all heads stacked along sublanes: 2 MXU ops + 1 softmax total
    q_st = jnp.concatenate([q] * nhead, axis=0) * hmask          # (nhead*bs, d)
    s = jax.lax.dot_general(q_st, k, (((1,), (1,)), ((), ())),
                            preferred_element_type=jnp.float32)   # (nhead*bs, bs)
    s = s + bmask
    s = s - jnp.max(s, axis=-1, keepdims=True)
    p = jnp.exp(s)
    p = p * pl.reciprocal(jnp.sum(p, axis=-1, keepdims=True), approx=True)
    pv = jnp.dot(p, v, preferred_element_type=jnp.float32) * hmask
    attn = pv[0:bs]
    for h in range(1, nhead):            # sum head row-blocks (disjoint columns)
        attn = attn + pv[h * bs:(h + 1) * bs]

    attn = jnp.dot(attn, wo_ref[0], preferred_element_type=jnp.float32) + bo

    # --- residual + LayerNorm1 (post-norm; dropout = identity in eval)
    x1 = _layernorm(x + attn, ln1_g, ln1_b)

    # --- FFN (relu), hidden dim chunked; bf16 weights + bf16 epilogue, f32 acc
    x1_bf = x1.astype(jnp.bfloat16)
    ff = jnp.zeros((bs, d), jnp.float32)
    for c in range(f // chunk):
        c0, c1 = c * chunk, (c + 1) * chunk
        w1_c = w1_ref[0, 0:d, c0:c1]                 # (d, chunk)   bf16
        b1_c = w1_ref[0, d:d + 1, c0:c1]             # (1, chunk)   bf16
        w2_c = w2_ref[0, c0:c1, :]                   # (chunk, d)   bf16
        h_c = jnp.dot(x1_bf, w1_c, preferred_element_type=jnp.float32)
        h_c = jnp.maximum(h_c.astype(jnp.bfloat16) + b1_c, 0.0)
        ff = ff + jnp.dot(h_c, w2_c, preferred_element_type=jnp.float32)
    ff = ff + b2

    # --- residual + LayerNorm2; write carried activation
    xo = _layernorm(x1 + ff, ln2_g, ln2_b)
    x_scr[...] = xo

    # --- decoder on the final layer step: lane-dense 128-wide store
    @pl.when(l == pl.num_programs(0) - 1)
    def _():
        dec = dec_ref[...]                           # (40, 128): rows 0:d W, row d bias
        o_ref[...] = (jnp.dot(xo, dec[0:d, :], preferred_element_type=jnp.float32)
                      + dec[d:d + 1, :])


# ------------------------------ wrapper --------------------------------------
def transformer_model_forward(src, packed):
    # src: (batch, seq, d_model). PyTorch's permute(1,0,2)/permute back is a pure
    # layout change for the encoder; attention is per-batch-element, so we fold
    # (batch, seq) into rows and mask cross-batch attention additively instead.
    B, S, D = src.shape
    BS = B * S
    HBS = NHEAD * BS
    F = DIM_FEEDFORWARD
    x = src.reshape(BS, D)

    # head column masks, replicated per head row-block: (nhead*BS, D)
    row_head = (jnp.arange(HBS) // BS)[:, None]
    col_head = (jnp.arange(D) // HEAD_DIM)[None, :]
    hmask = (row_head == col_head).astype(jnp.float32)

    # additive batch block-diagonal mask, tiled over heads: (nhead*BS, BS)
    bid = jnp.arange(BS) // S
    row_bid = jnp.tile(bid, NHEAD)[:, None]
    bmask = jnp.where(row_bid == bid[None, :], 0.0, -1e30).astype(jnp.float32)

    kernel = functools.partial(fused_transformer_kernel,
                               nhead=NHEAD, bs=BS, d=D, f=F, chunk=FF_CHUNK)

    inputs = [x, hmask, bmask, packed["wqkv"], packed["wo"], packed["small"],
              packed["w1"], packed["w2"], packed["dec"]]

    # advisory cost estimate for the XLA scheduler
    flops_layer = (2 * BS * D * OUT_PAD          # fused qkv
                   + 2 * HBS * D * BS            # scores
                   + 2 * HBS * BS * D            # p @ v
                   + 2 * BS * D * D              # out proj
                   + 2 * (2 * BS * D * F))       # FFN
    flops = NUM_LAYERS * flops_layer + 2 * BS * D * OUT_PAD
    transcend = NUM_LAYERS * (HBS * BS + HBS + 4 * BS) + BS
    bytes_accessed = (sum(int(a.size) * a.dtype.itemsize for a in inputs)
                      + BS * OUT_PAD * 4)

    out = pl.pallas_call(
        kernel,
        out_shape=jax.ShapeDtypeStruct((BS, OUT_PAD), jnp.float32),
        grid=(NUM_LAYERS,),
        in_specs=[
            pl.BlockSpec((BS, D), lambda l: (0, 0)),            # x (only read at l=0)
            pl.BlockSpec((HBS, D), lambda l: (0, 0)),           # hmask
            pl.BlockSpec((HBS, BS), lambda l: (0, 0)),          # bmask
            pl.BlockSpec((1, D, OUT_PAD), lambda l: (l, 0, 0)),  # fused qkv weight
            pl.BlockSpec((1, D, D), lambda l: (l, 0, 0)),        # out-proj weight
            pl.BlockSpec((1, 8, OUT_PAD), lambda l: (l, 0, 0)),  # packed vectors slab
            pl.BlockSpec((1, 48, F), lambda l: (l, 0, 0)),       # w1 + b1 (bf16)
            pl.BlockSpec((1, F, D), lambda l: (l, 0, 0)),        # w2 (bf16)
            pl.BlockSpec((40, OUT_PAD), lambda l: (0, 0)),       # decoder W+b (padded)
        ],
        out_specs=pl.BlockSpec((BS, OUT_PAD), lambda l: (0, 0)),
        scratch_shapes=[pltpu.VMEM((BS, D), jnp.float32)],        # carried activation
        compiler_params=pltpu.CompilerParams(
            dimension_semantics=("arbitrary",)),
        cost_estimate=pl.CostEstimate(flops=flops, transcendentals=transcend,
                                      bytes_accessed=bytes_accessed),
    )(*inputs)

    return out[:, :OUTPUT_DIM].reshape(B, S, OUTPUT_DIM)


# --------------------------- parameter init / packing ------------------------
def init_params(key):
    D, F, O = INPUT_DIM, DIM_FEEDFORWARD, OUTPUT_DIM
    layer_params = []
    for l in range(NUM_LAYERS):
        ks = jax.random.split(jax.random.fold_in(key, l), 6)
        p = {
            # stored pre-transposed: y = x @ W_t + b
            "wq_t": 0.02 * jax.random.normal(ks[0], (D, D), jnp.float32),
            "wk_t": 0.02 * jax.random.normal(ks[1], (D, D), jnp.float32),
            "wv_t": 0.02 * jax.random.normal(ks[2], (D, D), jnp.float32),
            "bq": jnp.zeros((1, D), jnp.float32),
            "bk": jnp.zeros((1, D), jnp.float32),
            "bv": jnp.zeros((1, D), jnp.float32),
            "wo_t": 0.02 * jax.random.normal(ks[3], (D, D), jnp.float32),
            "bo": jnp.zeros((1, D), jnp.float32),
            "ln1_g": jnp.ones((1, D), jnp.float32),
            "ln1_b": jnp.zeros((1, D), jnp.float32),
            "w1_t": 0.02 * jax.random.normal(ks[4], (D, F), jnp.float32),
            "b1": jnp.zeros((1, F), jnp.float32),
            "w2_t": 0.02 * jax.random.normal(ks[5], (F, D), jnp.float32),
            "b2": jnp.zeros((1, D), jnp.float32),
            "ln2_g": jnp.ones((1, D), jnp.float32),
            "ln2_b": jnp.zeros((1, D), jnp.float32),
        }
        layer_params.append(p)
    kd = jax.random.fold_in(key, 999)
    dec_w_t = 0.02 * jax.random.normal(kd, (D, O), jnp.float32)
    dec_b = jnp.zeros((1, O), jnp.float32)
    return layer_params, dec_w_t, dec_b


def pack_params(layer_params, dec_w_t, dec_b):
    """One-time parameter transform: fold softmax scale, fuse QKV, pack slabs."""
    D, F, O = INPUT_DIM, DIM_FEEDFORWARD, OUTPUT_DIM
    scale = 1.0 / math.sqrt(HEAD_DIM)
    wqkv_l, wo_l, small_l, w1_l, w2_l = [], [], [], [], []
    for p in layer_params:
        wqkv = jnp.zeros((D, OUT_PAD), jnp.float32)
        wqkv = wqkv.at[:, 0:D].set(p["wq_t"] * scale)        # scale folded into q
        wqkv = wqkv.at[:, D:2 * D].set(p["wk_t"])
        wqkv = wqkv.at[:, 2 * D:3 * D].set(p["wv_t"])

        small = jnp.zeros((8, OUT_PAD), jnp.float32)
        small = small.at[0, 0:D].set(p["bq"][0] * scale)
        small = small.at[0, D:2 * D].set(p["bk"][0])
        small = small.at[0, 2 * D:3 * D].set(p["bv"][0])
        small = small.at[1, 0:D].set(p["bo"][0])
        small = small.at[2, 0:D].set(p["ln1_g"][0])
        small = small.at[3, 0:D].set(p["ln1_b"][0])
        small = small.at[4, 0:D].set(p["b2"][0])
        small = small.at[5, 0:D].set(p["ln2_g"][0])
        small = small.at[6, 0:D].set(p["ln2_b"][0])

        # bf16 FFN slab: rows 0:D = w1, row D = b1 (rest zero, rows padded to 48)
        w1s = jnp.zeros((48, F), jnp.bfloat16)
        w1s = w1s.at[0:D, :].set(p["w1_t"].astype(jnp.bfloat16))
        w1s = w1s.at[D, :].set(p["b1"][0].astype(jnp.bfloat16))

        wqkv_l.append(wqkv)
        wo_l.append(p["wo_t"])
        small_l.append(small)
        w1_l.append(w1s)
        w2_l.append(p["w2_t"].astype(jnp.bfloat16))

    dec = jnp.zeros((40, OUT_PAD), jnp.float32)
    dec = dec.at[0:D, 0:O].set(dec_w_t)
    dec = dec.at[D, 0:O].set(dec_b[0])

    return {
        "wqkv": jnp.stack(wqkv_l),    # (L, D, 128)  f32
        "wo": jnp.stack(wo_l),        # (L, D, D)    f32
        "small": jnp.stack(small_l),  # (L, 8, 128)  f32
        "w1": jnp.stack(w1_l),        # (L, 48, F)   bf16
        "w2": jnp.stack(w2_l),        # (L, F, D)    bf16
        "dec": dec,                   # (40, 128)    f32
    }


# --------------------------------- main ---------------------------------------
if __name__ == "__main__":
    key = jax.random.PRNGKey(0)
    layer_params, dec_w_t, dec_b = init_params(jax.random.fold_in(key, 1))
    packed = pack_params(layer_params, dec_w_t, dec_b)
    src = jax.random.normal(jax.random.fold_in(key, 2),
                            (BATCH, SEQ, INPUT_DIM), jnp.float32)

    fwd = jax.jit(transformer_model_forward)
    out = jax.block_until_ready(fwd(src, packed))
    assert out.shape == (BATCH, SEQ, OUTPUT_DIM), out.shape
    print("KERNEL_OK")
</pallas_src>

<mosaic_0001>
module attributes {stable_mosaic.version = 11 : i64} {
  func.func @fused_transformer_kernel(%arg0: i32, %arg1: memref<16x32xf32, #tpu.memory_space<vmem>>, %arg2: memref<64x32xf32, #tpu.memory_space<vmem>>, %arg3: memref<64x16xf32, #tpu.memory_space<vmem>>, %arg4: memref<1x32x128xf32, #tpu.memory_space<vmem>>, %arg5: memref<1x32x32xf32, #tpu.memory_space<vmem>>, %arg6: memref<1x8x128xf32, #tpu.memory_space<vmem>>, %arg7: memref<1x48x2048xbf16, #tpu.memory_space<vmem>>, %arg8: memref<1x2048x32xbf16, #tpu.memory_space<vmem>>, %arg9: memref<40x128xf32, #tpu.memory_space<vmem>>, %arg10: memref<16x128xf32, #tpu.memory_space<vmem>>, %arg11: memref<16x32xf32, #tpu.memory_space<vmem>>) attributes {dimension_semantics = [#tpu.dimension_semantics<arbitrary>], iteration_bounds = array<i64: 2>, scalar_prefetch = 0 : i64, scratch_operands = 1 : i64, tpu.core_type = #tpu.core_type<tc>, window_params = [{pipeline_mode = #tpu.pipeline_mode<synchronous>, transform_indices = @transform_0, window_bounds = array<i64: 16, 32>}, {pipeline_mode = #tpu.pipeline_mode<synchronous>, transform_indices = @transform_1, window_bounds = array<i64: 64, 32>}, {pipeline_mode = #tpu.pipeline_mode<synchronous>, transform_indices = @transform_2, window_bounds = array<i64: 64, 16>}, {transform_indices = @transform_3, window_bounds = array<i64: 1, 32, 128>}, {transform_indices = @transform_4, window_bounds = array<i64: 1, 32, 32>}, {transform_indices = @transform_5, window_bounds = array<i64: 1, 8, 128>}, {transform_indices = @transform_6, window_bounds = array<i64: 1, 48, 2048>}, {transform_indices = @transform_7, window_bounds = array<i64: 1, 2048, 32>}, {pipeline_mode = #tpu.pipeline_mode<synchronous>, transform_indices = @transform_8, window_bounds = array<i64: 40, 128>}, {pipeline_mode = #tpu.pipeline_mode<synchronous>, transform_indices = @transform_9, window_bounds = array<i64: 16, 128>}]} {
    %c0_i32 = arith.constant 0 : i32
    %0 = arith.cmpi eq, %arg0, %c0_i32 : i32
    %1 = arith.extui %0 : i1 to i32
    %c0_i32_0 = arith.constant 0 : i32
    %2 = arith.cmpi ne, %1, %c0_i32_0 : i32
    scf.if %2 {
      %c0_78 = arith.constant 0 : index
      %c0_79 = arith.constant 0 : index
      %161 = vector.load %arg1[%c0_78, %c0_79] : memref<16x32xf32, #tpu.memory_space<vmem>>, vector<16x32xf32>
      %c0_80 = arith.constant 0 : index
      %c0_81 = arith.constant 0 : index
      %162 = vector.load %arg11[%c0_80, %c0_81] : memref<16x32xf32, #tpu.memory_space<vmem>>, vector<16x32xf32>
      tpu.vector_store %arg11[%c0_80, %c0_81], %161 {strides = array<i32>} : memref<16x32xf32, #tpu.memory_space<vmem>>, vector<16x32xf32>,
    } else {
    }
    %c0 = arith.constant 0 : index
    %c0_1 = arith.constant 0 : index
    %3 = vector.load %arg11[%c0, %c0_1] : memref<16x32xf32, #tpu.memory_space<vmem>>, vector<16x32xf32>
    %c0_2 = arith.constant 0 : index
    %c0_3 = arith.constant 0 : index
    %4 = vector.load %arg2[%c0_2, %c0_3] : memref<64x32xf32, #tpu.memory_space<vmem>>, vector<64x32xf32>
    %c0_4 = arith.constant 0 : index
    %c0_5 = arith.constant 0 : index
    %5 = vector.load %arg3[%c0_4, %c0_5] : memref<64x16xf32, #tpu.memory_space<vmem>>, vector<64x16xf32>
    %c0_6 = arith.constant 0 : index
    %c0_7 = arith.constant 0 : index
    %c0_8 = arith.constant 0 : index
    %6 = vector.load %arg6[%c0_6, %c0_7, %c0_8] : memref<1x8x128xf32, #tpu.memory_space<vmem>>, vector<1x8x128xf32>
    %7 = vector.shape_cast %6 : vector<1x8x128xf32> to vector<8x128xf32>
    %8 = vector.extract_strided_slice %7 {offsets = [0, 0], sizes = [1, 128], strides = [1, 1]} : vector<8x128xf32> to vector<1x128xf32>
    %9 = vector.extract_strided_slice %7 {offsets = [1, 0], sizes = [1, 32], strides = [1, 1]} : vector<8x128xf32> to vector<1x32xf32>
    %10 = vector.extract_strided_slice %7 {offsets = [2, 0], sizes = [1, 32], strides = [1, 1]} : vector<8x128xf32> to vector<1x32xf32>
    %11 = vector.extract_strided_slice %7 {offsets = [3, 0], sizes = [1, 32], strides = [1, 1]} : vector<8x128xf32> to vector<1x32xf32>
    %12 = vector.extract_strided_slice %7 {offsets = [4, 0], sizes = [1, 32], strides = [1, 1]} : vector<8x128xf32> to vector<1x32xf32>
    %13 = vector.extract_strided_slice %7 {offsets = [5, 0], sizes = [1, 32], strides = [1, 1]} : vector<8x128xf32> to vector<1x32xf32>
    %14 = vector.extract_strided_slice %7 {offsets = [6, 0], sizes = [1, 32], strides = [1, 1]} : vector<8x128xf32> to vector<1x32xf32>
    %c0_9 = arith.constant 0 : index
    %c0_10 = arith.constant 0 : index
    %c0_11 = arith.constant 0 : index
    %15 = vector.load %arg4[%c0_9, %c0_10, %c0_11] : memref<1x32x128xf32, #tpu.memory_space<vmem>>, vector<1x32x128xf32>
    %16 = vector.shape_cast %15 : vector<1x32x128xf32> to vector<32x128xf32>
    %cst = arith.constant dense<0.000000e+00> : vector<16x128xf32>
    %17 = tpu.matmul %3, %16, %cst {dimension_numbers = #tpu.dot_dimension_numbers<[1], [0], [0], [1], [0, 0, 1, 1], [], []>} : vector<16x32xf32>, vector<32x128xf32>, vector<16x128xf32> -> vector<16x128xf32>
    %18 = vector.broadcast %8 : vector<1x128xf32> to vector<16x128xf32>
    %19 = arith.addf %17, %18 : vector<16x128xf32>
    %20 = vector.extract_strided_slice %19 {offsets = [0, 0], sizes = [16, 32], strides = [1, 1]} : vector<16x128xf32> to vector<16x32xf32>
    %21 = vector.extract_strided_slice %19 {offsets = [0, 32], sizes = [16, 32], strides = [1, 1]} : vector<16x128xf32> to vector<16x32xf32>
    %22 = vector.extract_strided_slice %19 {offsets = [0, 64], sizes = [16, 32], strides = [1, 1]} : vector<16x128xf32> to vector<16x32xf32>
    %23 = tpu.concatenate %20, %20, %20, %20 in 0 : vector<16x32xf32>, vector<16x32xf32>, vector<16x32xf32>, vector<16x32xf32> -> vector<64x32xf32>
    %24 = arith.mulf %23, %4 : vector<64x32xf32>
    %cst_12 = arith.constant dense<0.000000e+00> : vector<64x16xf32>
    %25 = tpu.matmul %24, %21, %cst_12 {dimension_numbers = #tpu.dot_dimension_numbers<[1], [1], [0], [0], [0, 0, 1, 0], [], []>} : vector<64x32xf32>, vector<16x32xf32>, vector<64x16xf32> -> vector<64x16xf32>
    %26 = arith.addf %25, %5 : vector<64x16xf32>
    %cst_13 = arith.constant dense<0xFF800000> : vector<64xf32>
    %27 = vector.multi_reduction <maximumf>, %26, %cst_13 [1] : vector<64x16xf32> to vector<64xf32>
    %28 = vector.shape_cast %27 : vector<64xf32> to vector<64x1xf32>
    %29 = vector.broadcast %28 : vector<64x1xf32> to vector<64x16xf32>
    %30 = arith.subf %26, %29 : vector<64x16xf32>
    %31 = math.exp %30 : vector<64x16xf32>
    %cst_14 = arith.constant dense<0.000000e+00> : vector<64xf32>
    %32 = vector.multi_reduction <add>, %31, %cst_14 [1] : vector<64x16xf32> to vector<64xf32>
    %33 = vector.shape_cast %32 : vector<64xf32> to vector<64x1xf32>
    %34 = tpu.reciprocal %33 {approx = true} : vector<64x1xf32> -> vector<64x1xf32>
    %35 = vector.broadcast %34 : vector<64x1xf32> to vector<64x16xf32>
    %36 = arith.mulf %31, %35 : vector<64x16xf32>
    %cst_15 = arith.constant dense<0.000000e+00> : vector<64x32xf32>
    %37 = tpu.matmul %36, %22, %cst_15 {dimension_numbers = #tpu.dot_dimension_numbers<[1], [0], [0], [1], [0, 0, 1, 1], [], []>} : vector<64x16xf32>, vector<16x32xf32>, vector<64x32xf32> -> vector<64x32xf32>
    %38 = arith.mulf %37, %4 : vector<64x32xf32>
    %39 = vector.extract_strided_slice %38 {offsets = [0, 0], sizes = [16, 32], strides = [1, 1]} : vector<64x32xf32> to vector<16x32xf32>
    %40 = vector.extract_strided_slice %38 {offsets = [16, 0], sizes = [16, 32], strides = [1, 1]} : vector<64x32xf32> to vector<16x32xf32>
    %41 = arith.addf %39, %40 : vector<16x32xf32>
    %42 = vector.extract_strided_slice %38 {offsets = [32, 0], sizes = [16, 32], strides = [1, 1]} : vector<64x32xf32> to vector<16x32xf32>
    %43 = arith.addf %41, %42 : vector<16x32xf32>
    %44 = vector.extract_strided_slice %38 {offsets = [48, 0], sizes = [16, 32], strides = [1, 1]} : vector<64x32xf32> to vector<16x32xf32>
    %45 = arith.addf %43, %44 : vector<16x32xf32>
    %c0_16 = arith.constant 0 : index
    %c0_17 = arith.constant 0 : index
    %c0_18 = arith.constant 0 : index
    %46 = vector.load %arg5[%c0_16, %c0_17, %c0_18] : memref<1x32x32xf32, #tpu.memory_space<vmem>>, vector<1x32x32xf32>
    %47 = vector.shape_cast %46 : vector<1x32x32xf32> to vector<32x32xf32>
    %cst_19 = arith.constant dense<0.000000e+00> : vector<16x32xf32>
    %48 = tpu.matmul %45, %47, %cst_19 {dimension_numbers = #tpu.dot_dimension_numbers<[1], [0], [0], [1], [0, 0, 1, 1], [], []>} : vector<16x32xf32>, vector<32x32xf32>, vector<16x32xf32> -> vector<16x32xf32>
    %49 = vector.broadcast %9 : vector<1x32xf32> to vector<16x32xf32>
    %50 = arith.addf %48, %49 : vector<16x32xf32>
    %51 = arith.addf %3, %50 : vector<16x32xf32>
    %cst_20 = arith.constant dense<0.000000e+00> : vector<16xf32>
    %52 = vector.multi_reduction <add>, %51, %cst_20 [1] : vector<16x32xf32> to vector<16xf32>
    %53 = vector.shape_cast %52 : vector<16xf32> to vector<16x1xf32>
    %cst_21 = arith.constant 3.200000e+01 : f32
    %54 = vector.broadcast %cst_21 : f32 to vector<16x1xf32>
    %55 = arith.divf %53, %54 : vector<16x1xf32>
    %56 = vector.broadcast %55 : vector<16x1xf32> to vector<16x32xf32>
    %57 = arith.subf %51, %56 : vector<16x32xf32>
    %58 = arith.mulf %57, %57 : vector<16x32xf32>
    %cst_22 = arith.constant dense<0.000000e+00> : vector<16xf32>
    %59 = vector.multi_reduction <add>, %58, %cst_22 [1] : vector<16x32xf32> to vector<16xf32>
    %60 = vector.shape_cast %59 : vector<16xf32> to vector<16x1xf32>
    %cst_23 = arith.constant 3.200000e+01 : f32
    %61 = vector.broadcast %cst_23 : f32 to vector<16x1xf32>
    %62 = arith.divf %60, %61 : vector<16x1xf32>
    %63 = vector.broadcast %55 : vector<16x1xf32> to vector<16x32xf32>
    %64 = arith.subf %51, %63 : vector<16x32xf32>
    %cst_24 = arith.constant 9.99999974E-6 : f32
    %65 = vector.broadcast %cst_24 : f32 to vector<16x1xf32>
    %66 = arith.addf %62, %65 : vector<16x1xf32>
    %67 = math.rsqrt %66 : vector<16x1xf32>
    %68 = vector.broadcast %67 : vector<16x1xf32> to vector<16x32xf32>
    %69 = arith.mulf %64, %68 : vector<16x32xf32>
    %70 = vector.broadcast %10 : vector<1x32xf32> to vector<16x32xf32>
    %71 = arith.mulf %69, %70 : vector<16x32xf32>
    %72 = vector.broadcast %11 : vector<1x32xf32> to vector<16x32xf32>
    %73 = arith.addf %71, %72 : vector<16x32xf32>
    %74 = arith.truncf %73 : vector<16x32xf32> to vector<16x32xbf16>
    %cst_25 = arith.constant 0.000000e+00 : f32
    %75 = vector.broadcast %cst_25 : f32 to vector<16x32xf32>
    %c0_26 = arith.constant 0 : index
    %c0_27 = arith.constant 0 : index
    %c0_28 = arith.constant 0 : index
    %76 = vector.load %arg7[%c0_26, %c0_27, %c0_28] : memref<1x48x2048xbf16, #tpu.memory_space<vmem>>, vector<1x32x512xbf16>
    %77 = vector.shape_cast %76 : vector<1x32x512xbf16> to vector<32x512xbf16>
    %c0_29 = arith.constant 0 : index
    %c32 = arith.constant 32 : index
    %c0_30 = arith.constant 0 : index
    %78 = vector.load %arg7[%c0_29, %c32, %c0_30] : memref<1x48x2048xbf16, #tpu.memory_space<vmem>>, vector<1x1x512xbf16>
    %79 = vector.shape_cast %78 : vector<1x1x512xbf16> to vector<1x512xbf16>
    %c0_31 = arith.constant 0 : index
    %c0_32 = arith.constant 0 : index
    %c0_33 = arith.constant 0 : index
    %80 = vector.load %arg8[%c0_31, %c0_32, %c0_33] : memref<1x2048x32xbf16, #tpu.memory_space<vmem>>, vector<1x512x32xbf16>
    %81 = vector.shape_cast %80 : vector<1x512x32xbf16> to vector<512x32xbf16>
    %cst_34 = arith.constant dense<0.000000e+00> : vector<16x512xf32>
    %82 = tpu.matmul %74, %77, %cst_34 {dimension_numbers = #tpu.dot_dimension_numbers<[1], [0], [0], [1], [0, 0, 1, 1], [], []>} : vector<16x32xbf16>, vector<32x512xbf16>, vector<16x512xf32> -> vector<16x512xf32>
    %83 = arith.truncf %82 : vector<16x512xf32> to vector<16x512xbf16>
    %84 = vector.broadcast %79 : vector<1x512xbf16> to vector<16x512xbf16>
    %85 = arith.addf %83, %84 : vector<16x512xbf16>
    %cst_35 = arith.constant 0.000000e+00 : bf16
    %86 = vector.broadcast %cst_35 : bf16 to vector<16x512xbf16>
    %87 = arith.maximumf %85, %86 : vector<16x512xbf16>
    %cst_36 = arith.constant dense<0.000000e+00> : vector<16x32xf32>
    %88 = tpu.matmul %87, %81, %cst_36 {dimension_numbers = #tpu.dot_dimension_numbers<[1], [0], [0], [1], [0, 0, 1, 1], [], []>} : vector<16x512xbf16>, vector<512x32xbf16>, vector<16x32xf32> -> vector<16x32xf32>
    %89 = arith.addf %75, %88 : vector<16x32xf32>
    %c0_37 = arith.constant 0 : index
    %c0_38 = arith.constant 0 : index
    %c512 = arith.constant 512 : index
    %90 = vector.load %arg7[%c0_37, %c0_38, %c512] : memref<1x48x2048xbf16, #tpu.memory_space<vmem>>, vector<1x32x512xbf16>
    %91 = vector.shape_cast %90 : vector<1x32x512xbf16> to vector<32x512xbf16>
    %c0_39 = arith.constant 0 : index
    %c32_40 = arith.constant 32 : index
    %c512_41 = arith.constant 512 : index
    %92 = vector.load %arg7[%c0_39, %c32_40, %c512_41] : memref<1x48x2048xbf16, #tpu.memory_space<vmem>>, vector<1x1x512xbf16>
    %93 = vector.shape_cast %92 : vector<1x1x512xbf16> to vector<1x512xbf16>
    %c0_42 = arith.constant 0 : index
    %c512_43 = arith.constant 512 : index
    %c0_44 = arith.constant 0 : index
    %94 = vector.load %arg8[%c0_42, %c512_43, %c0_44] : memref<1x2048x32xbf16, #tpu.memory_space<vmem>>, vector<1x512x32xbf16>
    %95 = vector.shape_cast %94 : vector<1x512x32xbf16> to vector<512x32xbf16>
    %cst_45 = arith.constant dense<0.000000e+00> : vector<16x512xf32>
    %96 = tpu.matmul %74, %91, %cst_45 {dimension_numbers = #tpu.dot_dimension_numbers<[1], [0], [0], [1], [0, 0, 1, 1], [], []>} : vector<16x32xbf16>, vector<32x512xbf16>, vector<16x512xf32> -> vector<16x512xf32>
    %97 = arith.truncf %96 : vector<16x512xf32> to vector<16x512xbf16>
    %98 = vector.broadcast %93 : vector<1x512xbf16> to vector<16x512xbf16>
    %99 = arith.addf %97, %98 : vector<16x512xbf16>
    %cst_46 = arith.constant 0.000000e+00 : bf16
    %100 = vector.broadcast %cst_46 : bf16 to vector<16x512xbf16>
    %101 = arith.maximumf %99, %100 : vector<16x512xbf16>
    %cst_47 = arith.constant dense<0.000000e+00> : vector<16x32xf32>
    %102 = tpu.matmul %101, %95, %cst_47 {dimension_numbers = #tpu.dot_dimension_numbers<[1], [0], [0], [1], [0, 0, 1, 1], [], []>} : vector<16x512xbf16>, vector<512x32xbf16>, vector<16x32xf32> -> vector<16x32xf32>
    %103 = arith.addf %89, %102 : vector<16x32xf32>
    %c0_48 = arith.constant 0 : index
    %c0_49 = arith.constant 0 : index
    %c1024 = arith.constant 1024 : index
    %104 = vector.load %arg7[%c0_48, %c0_49, %c1024] : memref<1x48x2048xbf16, #tpu.memory_space<vmem>>, vector<1x32x512xbf16>
    %105 = vector.shape_cast %104 : vector<1x32x512xbf16> to vector<32x512xbf16>
    %c0_50 = arith.constant 0 : index
    %c32_51 = arith.constant 32 : index
    %c1024_52 = arith.constant 1024 : index
    %106 = vector.load %arg7[%c0_50, %c32_51, %c1024_52] : memref<1x48x2048xbf16, #tpu.memory_space<vmem>>, vector<1x1x512xbf16>
    %107 = vector.shape_cast %106 : vector<1x1x512xbf16> to vector<1x512xbf16>
    %c0_53 = arith.constant 0 : index
    %c1024_54 = arith.constant 1024 : index
    %c0_55 = arith.constant 0 : index
    %108 = vector.load %arg8[%c0_53, %c1024_54, %c0_55] : memref<1x2048x32xbf16, #tpu.memory_space<vmem>>, vector<1x512x32xbf16>
    %109 = vector.shape_cast %108 : vector<1x512x32xbf16> to vector<512x32xbf16>
    %cst_56 = arith.constant dense<0.000000e+00> : vector<16x512xf32>
    %110 = tpu.matmul %74, %105, %cst_56 {dimension_numbers = #tpu.dot_dimension_numbers<[1], [0], [0], [1], [0, 0, 1, 1], [], []>} : vector<16x32xbf16>, vector<32x512xbf16>, vector<16x512xf32> -> vector<16x512xf32>
    %111 = arith.truncf %110 : vector<16x512xf32> to vector<16x512xbf16>
    %112 = vector.broadcast %107 : vector<1x512xbf16> to vector<16x512xbf16>
    %113 = arith.addf %111, %112 : vector<16x512xbf16>
    %cst_57 = arith.constant 0.000000e+00 : bf16
    %114 = vector.broadcast %cst_57 : bf16 to vector<16x512xbf16>
    %115 = arith.maximumf %113, %114 : vector<16x512xbf16>
    %cst_58 = arith.constant dense<0.000000e+00> : vector<16x32xf32>
    %116 = tpu.matmul %115, %109, %cst_58 {dimension_numbers = #tpu.dot_dimension_numbers<[1], [0], [0], [1], [0, 0, 1, 1], [], []>} : vector<16x512xbf16>, vector<512x32xbf16>, vector<16x32xf32> -> vector<16x32xf32>
    %117 = arith.addf %103, %116 : vector<16x32xf32>
    %c0_59 = arith.constant 0 : index
    %c0_60 = arith.constant 0 : index
    %c1536 = arith.constant 1536 : index
    %118 = vector.load %arg7[%c0_59, %c0_60, %c1536] : memref<1x48x2048xbf16, #tpu.memory_space<vmem>>, vector<1x32x512xbf16>
    %119 = vector.shape_cast %118 : vector<1x32x512xbf16> to vector<32x512xbf16>
    %c0_61 = arith.constant 0 : index
    %c32_62 = arith.constant 32 : index
    %c1536_63 = arith.constant 1536 : index
    %120 = vector.load %arg7[%c0_61, %c32_62, %c1536_63] : memref<1x48x2048xbf16, #tpu.memory_space<vmem>>, vector<1x1x512xbf16>
    %121 = vector.shape_cast %120 : vector<1x1x512xbf16> to vector<1x512xbf16>
    %c0_64 = arith.constant 0 : index
    %c1536_65 = arith.constant 1536 : index
    %c0_66 = arith.constant 0 : index
    %122 = vector.load %arg8[%c0_64, %c1536_65, %c0_66] : memref<1x2048x32xbf16, #tpu.memory_space<vmem>>, vector<1x512x32xbf16>
    %123 = vector.shape_cast %122 : vector<1x512x32xbf16> to vector<512x32xbf16>
    %cst_67 = arith.constant dense<0.000000e+00> : vector<16x512xf32>
    %124 = tpu.matmul %74, %119, %cst_67 {dimension_numbers = #tpu.dot_dimension_numbers<[1], [0], [0], [1], [0, 0, 1, 1], [], []>} : vector<16x32xbf16>, vector<32x512xbf16>, vector<16x512xf32> -> vector<16x512xf32>
    %125 = arith.truncf %124 : vector<16x512xf32> to vector<16x512xbf16>
    %126 = vector.broadcast %121 : vector<1x512xbf16> to vector<16x512xbf16>
    %127 = arith.addf %125, %126 : vector<16x512xbf16>
    %cst_68 = arith.constant 0.000000e+00 : bf16
    %128 = vector.broadcast %cst_68 : bf16 to vector<16x512xbf16>
    %129 = arith.maximumf %127, %128 : vector<16x512xbf16>
    %cst_69 = arith.constant dense<0.000000e+00> : vector<16x32xf32>
    %130 = tpu.matmul %129, %123, %cst_69 {dimension_numbers = #tpu.dot_dimension_numbers<[1], [0], [0], [1], [0, 0, 1, 1], [], []>} : vector<16x512xbf16>, vector<512x32xbf16>, vector<16x32xf32> -> vector<16x32xf32>
    %131 = arith.addf %117, %130 : vector<16x32xf32>
    %132 = vector.broadcast %12 : vector<1x32xf32> to vector<16x32xf32>
    %133 = arith.addf %131, %132 : vector<16x32xf32>
    %134 = arith.addf %73, %133 : vector<16x32xf32>
    %cst_70 = arith.constant dense<0.000000e+00> : vector<16xf32>
    %135 = vector.multi_reduction <add>, %134, %cst_70 [1] : vector<16x32xf32> to vector<16xf32>
    %136 = vector.shape_cast %135 : vector<16xf32> to vector<16x1xf32>
    %cst_71 = arith.constant 3.200000e+01 : f32
    %137 = vector.broadcast %cst_71 : f32 to vector<16x1xf32>
    %138 = arith.divf %136, %137 : vector<16x1xf32>
    %139 = vector.broadcast %138 : vector<16x1xf32> to vector<16x32xf32>
    %140 = arith.subf %134, %139 : vector<16x32xf32>
    %141 = arith.mulf %140, %140 : vector<16x32xf32>
    %cst_72 = arith.constant dense<0.000000e+00> : vector<16xf32>
    %142 = vector.multi_reduction <add>, %141, %cst_72 [1] : vector<16x32xf32> to vector<16xf32>
    %143 = vector.shape_cast %142 : vector<16xf32> to vector<16x1xf32>
    %cst_73 = arith.constant 3.200000e+01 : f32
    %144 = vector.broadcast %cst_73 : f32 to vector<16x1xf32>
    %145 = arith.divf %143, %144 : vector<16x1xf32>
    %146 = vector.broadcast %138 : vector<16x1xf32> to vector<16x32xf32>
    %147 = arith.subf %134, %146 : vector<16x32xf32>
    %cst_74 = arith.constant 9.99999974E-6 : f32
    %148 = vector.broadcast %cst_74 : f32 to vector<16x1xf32>
    %149 = arith.addf %145, %148 : vector<16x1xf32>
    %150 = math.rsqrt %149 : vector<16x1xf32>
    %151 = vector.broadcast %150 : vector<16x1xf32> to vector<16x32xf32>
    %152 = arith.mulf %147, %151 : vector<16x32xf32>
    %153 = vector.broadcast %13 : vector<1x32xf32> to vector<16x32xf32>
    %154 = arith.mulf %152, %153 : vector<16x32xf32>
    %155 = vector.broadcast %14 : vector<1x32xf32> to vector<16x32xf32>
    %156 = arith.addf %154, %155 : vector<16x32xf32>
    %c0_75 = arith.constant 0 : index
    %c0_76 = arith.constant 0 : index
    %157 = vector.load %arg11[%c0_75, %c0_76] : memref<16x32xf32, #tpu.memory_space<vmem>>, vector<16x32xf32>
    tpu.vector_store %arg11[%c0_75, %c0_76], %156 {strides = array<i32>} : memref<16x32xf32, #tpu.memory_space<vmem>>, vector<16x32xf32>,
    %c1_i32 = arith.constant 1 : i32
    %158 = arith.cmpi eq, %arg0, %c1_i32 : i32
    %159 = arith.extui %158 : i1 to i32
    %c0_i32_77 = arith.constant 0 : i32
    %160 = arith.cmpi ne, %159, %c0_i32_77 : i32
    scf.if %160 {
      %c0_78 = arith.constant 0 : index
      %c0_79 = arith.constant 0 : index
      %161 = vector.load %arg9[%c0_78, %c0_79] : memref<40x128xf32, #tpu.memory_space<vmem>>, vector<40x128xf32>
      %162 = vector.extract_strided_slice %161 {offsets = [0, 0], sizes = [32, 128], strides = [1, 1]} : vector<40x128xf32> to vector<32x128xf32>
      %cst_80 = arith.constant dense<0.000000e+00> : vector<16x128xf32>
      %163 = tpu.matmul %156, %162, %cst_80 {dimension_numbers = #tpu.dot_dimension_numbers<[1], [0], [0], [1], [0, 0, 1, 1], [], []>} : vector<16x32xf32>, vector<32x128xf32>, vector<16x128xf32> -> vector<16x128xf32>
      %164 = vector.extract_strided_slice %161 {offsets = [32, 0], sizes = [1, 128], strides = [1, 1]} : vector<40x128xf32> to vector<1x128xf32>
      %165 = vector.broadcast %164 : vector<1x128xf32> to vector<16x128xf32>
      %166 = arith.addf %163, %165 : vector<16x128xf32>
      %c0_81 = arith.constant 0 : index
      %c0_82 = arith.constant 0 : index
      %167 = vector.load %arg10[%c0_81, %c0_82] : memref<16x128xf32, #tpu.memory_space<vmem>>, vector<16x128xf32>
      tpu.vector_store %arg10[%c0_81, %c0_82], %166 {strides = array<i32>} : memref<16x128xf32, #tpu.memory_space<vmem>>, vector<16x128xf32>,
    } else {
    }
    return
  }
  func.func @transform_0(%arg0: i32) -> (i32, i32) {
    %c0_i32 = arith.constant 0 : i32
    %c0_i32_0 = arith.constant 0 : i32
    %c0_i32_1 = arith.constant 0 : i32
    return %c0_i32, %c0_i32_0 : i32, i32
  }
  func.func @transform_1(%arg0: i32) -> (i32, i32) {
    %c0_i32 = arith.constant 0 : i32
    %c0_i32_0 = arith.constant 0 : i32
    %c0_i32_1 = arith.constant 0 : i32
    return %c0_i32, %c0_i32_0 : i32, i32
  }
  func.func @transform_2(%arg0: i32) -> (i32, i32) {
    %c0_i32 = arith.constant 0 : i32
    %c0_i32_0 = arith.constant 0 : i32
    %c0_i32_1 = arith.constant 0 : i32
    return %c0_i32, %c0_i32_0 : i32, i32
  }
  func.func @transform_3(%arg0: i32) -> (i32, i32, i32) {
    %c0_i32 = arith.constant 0 : i32
    %c0_i32_0 = arith.constant 0 : i32
    %c0_i32_1 = arith.constant 0 : i32
    return %arg0, %c0_i32, %c0_i32_0 : i32, i32, i32
  }
  func.func @transform_4(%arg0: i32) -> (i32, i32, i32) {
    %c0_i32 = arith.constant 0 : i32
    %c0_i32_0 = arith.constant 0 : i32
    %c0_i32_1 = arith.constant 0 : i32
    return %arg0, %c0_i32, %c0_i32_0 : i32, i32, i32
  }
  func.func @transform_5(%arg0: i32) -> (i32, i32, i32) {
    %c0_i32 = arith.constant 0 : i32
    %c0_i32_0 = arith.constant 0 : i32
    %c0_i32_1 = arith.constant 0 : i32
    return %arg0, %c0_i32, %c0_i32_0 : i32, i32, i32
  }
  func.func @transform_6(%arg0: i32) -> (i32, i32, i32) {
    %c0_i32 = arith.constant 0 : i32
    %c0_i32_0 = arith.constant 0 : i32
    %c0_i32_1 = arith.constant 0 : i32
    return %arg0, %c0_i32, %c0_i32_0 : i32, i32, i32
  }
  func.func @transform_7(%arg0: i32) -> (i32, i32, i32) {
    %c0_i32 = arith.constant 0 : i32
    %c0_i32_0 = arith.constant 0 : i32
    %c0_i32_1 = arith.constant 0 : i32
    return %arg0, %c0_i32, %c0_i32_0 : i32, i32, i32
  }
  func.func @transform_8(%arg0: i32) -> (i32, i32) {
    %c0_i32 = arith.constant 0 : i32
    %c0_i32_0 = arith.constant 0 : i32
    %c0_i32_1 = arith.constant 0 : i32
    return %c0_i32, %c0_i32_0 : i32, i32
  }
  func.func @transform_9(%arg0: i32) -> (i32, i32) {
    %c0_i32 = arith.constant 0 : i32
    %c0_i32_0 = arith.constant 0 : i32
    %c0_i32_1 = arith.constant 0 : i32
    return %c0_i32, %c0_i32_0 : i32, i32
  }
}

</mosaic_0001>

<llo_original>
// kernel: tile.8
$region0: #{tile.8}
  #allocation0 [shape = 's32[1]{0}', space=sflag, size = 0x4, scoped, tag = 'scoped memory for tile.8']
  %s0 = inlined_call_operand.vmem [shape: s32[16], index: 0, kind: input, shape index: {}]
  %s1 = inlined_call_operand.vmem [shape: s32[4,16], index: 1, kind: output, shape index: {}]
  // Predicated region
  $region2: #{tile.8} parent=0 // pred_check
    _
  $region3: #{tile.8} parent=0 // pred_check_branch
    %3 = sbr.rel (0) target = $region5
  $region4: #{tile.8} parent=0 // pred_region
    _
  $region5: #{tile.8} parent=0 // pred_fallthru
    _
  %v4 = vld [vmem:[%s0] ss:$0 sm:$0xff]
  %5 = vst [vmem:[%s1] sm:$0xf] %v4

// kernel: eq.22
$region0: #{eq.22}
  %s0 = inlined_call_operand.vmem [shape: s32[4,16], index: 0, kind: input, shape index: {}]
  %s1 = inlined_call_operand.vmem [shape: s32[64], index: 1, kind: output, shape index: {}]
  $region1: #{eq.22} parent=0
    #allocation0 [shape = 'u8[4096]{0}', space=vmem, size = 0x1000, scoped, tag = 'scoped mem for output reshape']
    #allocation1 [shape = 'u8[4096]{0}', space=vmem, size = 0x1000, scoped, tag = 'scoped mem for input reshape']
    %s3 = sshllo.u32 0, 4
    %v4 = vld [vmem:[%s0] sm:%s3]
    %5 = vst [vmem:[#allocation1] sm:%s3] %v4
    %v6 = vld [vmem:[#allocation1] sm:$0x1]
    %vm7 = vcmask 130048
    %8 = vst.msk [vmem:[#allocation0] sm:$0x1] %vm7, %v6
    %s9 = scalar_lea.vmem [#allocation1], 3
    %v10 = vld [vmem:[%s9] sm:$0x1]
    %11 = vrot.lane.b32.xlu0 %v10, 48
    %v12 = vpop.permute.xlu0 %11
    %vm13 = vcmask 523648
    %14 = vst.msk [vmem:[#allocation0] sm:$0x1] %vm13, %v12
    %s15 = scalar_lea.vmem [#allocation1], 2
    %v16 = vld [vmem:[%s15] sm:$0x1]
    %17 = vrot.lane.b32.xlu0 %v16, 32
    %v18 = vpop.permute.xlu0 %17
    %vm19 = vcmask 392448
    %20 = vst.msk [vmem:[#allocation0] sm:$0x1] %vm19, %v18
    %s21 = scalar_lea.vmem [#allocation1], 1
    %v22 = vld [vmem:[%s21] sm:$0x1]
    %23 = vrot.lane.b32.xlu0 %v22, 16
    %v24 = vpop.permute.xlu0 %23
    %vm25 = vcmask 261248
    %26 = vst.msk [vmem:[#allocation0] sm:$0x1] %vm25, %v24
    %s28 = sshllo.u32 0, 1
    %v30 = vld [vmem:[#allocation0] sm:%s28]
    %s31 = sshllo.u32 0, 1
    %32 = vst [vmem:[%s1] sm:%s31] %v30

// kernel: transformer_model_forward.1
$region0: #{transformer_model_forward.1}
  #allocation0 [shape = 'u32[]', space=smem, size = 0x4, offset = 0x4, fixed_abs, tag = 'smem constant byte address 0x4 - core index']
  #allocation1 [shape = 'u32[144,128]{1,0:T(1,128)}', space=vmem, size = 0x12000, scoped, tag = 'internal scratch']
  #allocation2 [shape = 'f32[16,32]{1,0:T(8,128)}', space=vmem, size = 0x2000, scoped, tag = 'scratch operand']
  %s0 = inlined_call_operand.vmem [shape: f32[16,32], index: 0, kind: input, shape index: {}]
  %s1 = inlined_call_operand.vmem [shape: f32[64,32], index: 1, kind: input, shape index: {}]
  %s2 = inlined_call_operand.vmem [shape: f32[64,16], index: 2, kind: input, shape index: {}]
  %s3 = inlined_call_operand.vmem [shape: f32[2,32,128], index: 3, kind: input, shape index: {}]
  %s4 = inlined_call_operand.vmem [shape: f32[2,32,32], index: 4, kind: input, shape index: {}]
  %s5 = inlined_call_operand.vmem [shape: f32[2,8,128], index: 5, kind: input, shape index: {}]
  %s6 = inlined_call_operand.vmem [shape: bf16[2,48,2048], index: 6, kind: input, shape index: {}]
  %s7 = inlined_call_operand.vmem [shape: bf16[2,2048,32], index: 7, kind: input, shape index: {}]
  %s8 = inlined_call_operand.vmem [shape: f32[40,128], index: 8, kind: input, shape index: {}]
  %s9 = inlined_call_operand.vmem [shape: f32[16,128], index: 9, kind: output, shape index: {}]
  %s10 = sld [smem:[#allocation0]]
  $region77: #{transformer_model_forward.1} parent=0
    _
  %s12 = ssub.s32 1, %s10
  %s13 = scalar_select 0, %s12, %s10
  loop: start=0, step=1, limit=4
  $region2: #{transformer_model_forward.1} parent=0 // loop_pre_header
    _
  $region3: #{transformer_model_forward.1} parent=0 // loop_header
    %s15 = sphi 0, %s19
    %p16 = scmp.ge.s32.totalorder %s15, 4
    %s23 = sphi 0, %s23
    %s25 = sphi 0, %s23
    %s26 = sphi 0, %s25
    %s40 = sphi 0, %s26
    %s44 = sphi 0, %s44
    %s46 = sphi 0, %s44
    %s47 = sphi 0, %s46
    %s61 = sphi 0, %s47
    %s65 = sphi 0, %s65
    %s67 = sphi 0, %s65
    %s68 = sphi 0, %s67
    %s82 = sphi 0, %s68
    %s88 = sphi 0, %s90
    %s91 = sphi 0, %s88
    %s92 = sphi 0, %s91
    %s108 = sphi 0, %s92
    %s114 = sphi 0, %s116
    %s117 = sphi 0, %s114
    %s118 = sphi 0, %s117
    %s134 = sphi 0, %s118
    %s140 = sphi 0, %s142
    %s143 = sphi 0, %s140
    %s144 = sphi 0, %s143
    %s160 = sphi 0, %s144
    %s166 = sphi 0, %s168
    %s169 = sphi 0, %s166
    %s170 = sphi 0, %s169
    %s186 = sphi 0, %s170
    %s192 = sphi 0, %s194
    %s195 = sphi 0, %s192
    %s196 = sphi 0, %s195
    %s212 = sphi 0, %s196
    %s216 = sphi 0, %s216
    %s218 = sphi 0, %s216
    %s219 = sphi 0, %s218
    %s233 = sphi 0, %s219
    %s237 = sphi 0, %s237
    %s239 = sphi 0, %s237
    %s240 = sphi 0, %s239
    %s254 = sphi 0, %s240
  $region4: #{transformer_model_forward.1} parent=0 // loop_header_branch
    %18 = sbr.rel (%p16) target = $region8
  $region5: #{transformer_model_forward.1} parent=0 // loop_body
    %s20 = ssub.s32 %s15, 1
    %s21 = ssub.s32 %s15, 2
    %s22 = sadd.s32 %s15, 1
    %s24 = sadd.s32 %s23, 1
    %p27 = scmp.eq.s32.totalorder %s15, 1
    %p28 = scmp.ne.s32.totalorder %s23, %s25
    %p29 = scmp.eq.s32.totalorder %s15, 0
    %p30 = por %p28, %p29
    %p31 = scmp.ne.s32.totalorder %s23, %s25
    %p32 = scmp.eq.s32.totalorder %s20, 1
    %p33 = por %p31, %p32
    %p34 = scmp.ne.s32.totalorder %s25, %s26
    %p35 = scmp.eq.s32.totalorder %s20, 0
    %p36 = por %p34, %p35
    %p37 = scmp.ne.s32.totalorder %s25, %s26
    %p38 = scmp.eq.s32.totalorder %s21, 1
    %p39 = por %p37, %p38
    %p41 = scmp.ne.s32.totalorder %s26, %s40
    %p42 = scmp.eq.s32.totalorder %s21, 0
    %p43 = por %p41, %p42
    %s45 = sadd.s32 %s44, 1
    %p48 = scmp.eq.s32.totalorder %s15, 1
    %p49 = scmp.ne.s32.totalorder %s44, %s46
    %p50 = scmp.eq.s32.totalorder %s15, 0
    %p51 = por %p49, %p50
    %p52 = scmp.ne.s32.totalorder %s44, %s46
    %p53 = scmp.eq.s32.totalorder %s20, 1
    %p54 = por %p52, %p53
    %p55 = scmp.ne.s32.totalorder %s46, %s47
    %p56 = scmp.eq.s32.totalorder %s20, 0
    %p57 = por %p55, %p56
    %p58 = scmp.ne.s32.totalorder %s46, %s47
    %p59 = scmp.eq.s32.totalorder %s21, 1
    %p60 = por %p58, %p59
    %p62 = scmp.ne.s32.totalorder %s47, %s61
    %p63 = scmp.eq.s32.totalorder %s21, 0
    %p64 = por %p62, %p63
    %s66 = sadd.s32 %s65, 1
    %p69 = scmp.eq.s32.totalorder %s15, 1
    %p70 = scmp.ne.s32.totalorder %s65, %s67
    %p71 = scmp.eq.s32.totalorder %s15, 0
    %p72 = por %p70, %p71
    %p73 = scmp.ne.s32.totalorder %s65, %s67
    %p74 = scmp.eq.s32.totalorder %s20, 1
    %p75 = por %p73, %p74
    %p76 = scmp.ne.s32.totalorder %s67, %s68
    %p77 = scmp.eq.s32.totalorder %s20, 0
    %p78 = por %p76, %p77
    %p79 = scmp.ne.s32.totalorder %s67, %s68
    %p80 = scmp.eq.s32.totalorder %s21, 1
    %p81 = por %p79, %p80
    %p83 = scmp.ne.s32.totalorder %s68, %s82
    %p84 = scmp.eq.s32.totalorder %s21, 0
    %p85 = por %p83, %p84
    %s86 = ssub.s32 %s15, %s22
    %p87 = scmp.eq.s32.totalorder %s86, 0
    %s89 = sadd.s32 %s88, 1
    %s90 = scalar_select %p87, %s88, %s89
    %p93 = pneg %p87
    %p94 = scmp.eq.s32.totalorder %s15, 1
    %p95 = por %p93, %p94
    %p96 = scmp.ne.s32.totalorder %s88, %s91
    %p97 = scmp.eq.s32.totalorder %s15, 0
    %p98 = por %p96, %p97
    %p99 = scmp.ne.s32.totalorder %s88, %s91
    %p100 = scmp.eq.s32.totalorder %s20, 1
    %p101 = por %p99, %p100
    %p102 = scmp.ne.s32.totalorder %s91, %s92
    %p103 = scmp.eq.s32.totalorder %s20, 0
    %p104 = por %p102, %p103
    %p105 = scmp.ne.s32.totalorder %s91, %s92
    %p106 = scmp.eq.s32.totalorder %s21, 1
    %p107 = por %p105, %p106
    %p109 = scmp.ne.s32.totalorder %s92, %s108
    %p110 = scmp.eq.s32.totalorder %s21, 0
    %p111 = por %p109, %p110
    %s112 = ssub.s32 %s15, %s22
    %p113 = scmp.eq.s32.totalorder %s112, 0
    %s115 = sadd.s32 %s114, 1
    %s116 = scalar_select %p113, %s114, %s115
    %p119 = pneg %p113
    %p120 = scmp.eq.s32.totalorder %s15, 1
    %p121 = por %p119, %p120
    %p122 = scmp.ne.s32.totalorder %s114, %s117
    %p123 = scmp.eq.s32.totalorder %s15, 0
    %p124 = por %p122, %p123
    %p125 = scmp.ne.s32.totalorder %s114, %s117
    %p126 = scmp.eq.s32.totalorder %s20, 1
    %p127 = por %p125, %p126
    %p128 = scmp.ne.s32.totalorder %s117, %s118
    %p129 = scmp.eq.s32.totalorder %s20, 0
    %p130 = por %p128, %p129
    %p131 = scmp.ne.s32.totalorder %s117, %s118
    %p132 = scmp.eq.s32.totalorder %s21, 1
    %p133 = por %p131, %p132
    %p135 = scmp.ne.s32.totalorder %s118, %s134
    %p136 = scmp.eq.s32.totalorder %s21, 0
    %p137 = por %p135, %p136
    %s138 = ssub.s32 %s15, %s22
    %p139 = scmp.eq.s32.totalorder %s138, 0
    %s141 = sadd.s32 %s140, 1
    %s142 = scalar_select %p139, %s140, %s141
    %p145 = pneg %p139
    %p146 = scmp.eq.s32.totalorder %s15, 1
    %p147 = por %p145, %p146
    %p148 = scmp.ne.s32.totalorder %s140, %s143
    %p149 = scmp.eq.s32.totalorder %s15, 0
    %p150 = por %p148, %p149
    %p151 = scmp.ne.s32.totalorder %s140, %s143
    %p152 = scmp.eq.s32.totalorder %s20, 1
    %p153 = por %p151, %p152
    %p154 = scmp.ne.s32.totalorder %s143, %s144
    %p155 = scmp.eq.s32.totalorder %s20, 0
    %p156 = por %p154, %p155
    %p157 = scmp.ne.s32.totalorder %s143, %s144
    %p158 = scmp.eq.s32.totalorder %s21, 1
    %p159 = por %p157, %p158
    %p161 = scmp.ne.s32.totalorder %s144, %s160
    %p162 = scmp.eq.s32.totalorder %s21, 0
    %p163 = por %p161, %p162
    %s164 = ssub.s32 %s15, %s22
    %p165 = scmp.eq.s32.totalorder %s164, 0
    %s167 = sadd.s32 %s166, 1
    %s168 = scalar_select %p165, %s166, %s167
    %p171 = pneg %p165
    %p172 = scmp.eq.s32.totalorder %s15, 1
    %p173 = por %p171, %p172
    %p174 = scmp.ne.s32.totalorder %s166, %s169
    %p175 = scmp.eq.s32.totalorder %s15, 0
    %p176 = por %p174, %p175
    %p177 = scmp.ne.s32.totalorder %s166, %s169
    %p178 = scmp.eq.s32.totalorder %s20, 1
    %p179 = por %p177, %p178
    %p180 = scmp.ne.s32.totalorder %s169, %s170
    %p181 = scmp.eq.s32.totalorder %s20, 0
    %p182 = por %p180, %p181
    %p183 = scmp.ne.s32.totalorder %s169, %s170
    %p184 = scmp.eq.s32.totalorder %s21, 1
    %p185 = por %p183, %p184
    %p187 = scmp.ne.s32.totalorder %s170, %s186
    %p188 = scmp.eq.s32.totalorder %s21, 0
    %p189 = por %p187, %p188
    %s190 = ssub.s32 %s15, %s22
    %p191 = scmp.eq.s32.totalorder %s190, 0
    %s193 = sadd.s32 %s192, 1
    %s194 = scalar_select %p191, %s192, %s193
    %p197 = pneg %p191
    %p198 = scmp.eq.s32.totalorder %s15, 1
    %p199 = por %p197, %p198
    %p200 = scmp.ne.s32.totalorder %s192, %s195
    %p201 = scmp.eq.s32.totalorder %s15, 0
    %p202 = por %p200, %p201
    %p203 = scmp.ne.s32.totalorder %s192, %s195
    %p204 = scmp.eq.s32.totalorder %s20, 1
    %p205 = por %p203, %p204
    %p206 = scmp.ne.s32.totalorder %s195, %s196
    %p207 = scmp.eq.s32.totalorder %s20, 0
    %p208 = por %p206, %p207
    %p209 = scmp.ne.s32.totalorder %s195, %s196
    %p210 = scmp.eq.s32.totalorder %s21, 1
    %p211 = por %p209, %p210
    %p213 = scmp.ne.s32.totalorder %s196, %s212
    %p214 = scmp.eq.s32.totalorder %s21, 0
    %p215 = por %p213, %p214
    %s217 = sadd.s32 %s216, 1
    %p220 = scmp.eq.s32.totalorder %s15, 1
    %p221 = scmp.ne.s32.totalorder %s216, %s218
    %p222 = scmp.eq.s32.totalorder %s15, 0
    %p223 = por %p221, %p222
    %p224 = scmp.ne.s32.totalorder %s216, %s218
    %p225 = scmp.eq.s32.totalorder %s20, 1
    %p226 = por %p224, %p225
    %p227 = scmp.ne.s32.totalorder %s218, %s219
    %p228 = scmp.eq.s32.totalorder %s20, 0
    %p229 = por %p227, %p228
    %p230 = scmp.ne.s32.totalorder %s218, %s219
    %p231 = scmp.eq.s32.totalorder %s21, 1
    %p232 = por %p230, %p231
    %p234 = scmp.ne.s32.totalorder %s219, %s233
    %p235 = scmp.eq.s32.totalorder %s21, 0
    %p236 = por %p234, %p235
    %s238 = sadd.s32 %s237, 1
    %p241 = scmp.eq.s32.totalorder %s15, 1
    %p242 = scmp.ne.s32.totalorder %s237, %s239
    %p243 = scmp.eq.s32.totalorder %s15, 0
    %p244 = por %p242, %p243
    %p245 = scmp.ne.s32.totalorder %s237, %s239
    %p246 = scmp.eq.s32.totalorder %s20, 1
    %p247 = por %p245, %p246
    %p248 = scmp.ne.s32.totalorder %s239, %s240
    %p249 = scmp.eq.s32.totalorder %s20, 0
    %p250 = por %p248, %p249
    %p251 = scmp.ne.s32.totalorder %s239, %s240
    %p252 = scmp.eq.s32.totalorder %s21, 1
    %p253 = por %p251, %p252
    %p255 = scmp.ne.s32.totalorder %s240, %s254
    %p256 = scmp.eq.s32.totalorder %s21, 0
    %p257 = por %p255, %p256
    %p258 = scmp.le.s32.totalorder 1, %s15
    %p259 = scmp.lt.s32.totalorder %s15, 3
    %p260 = pnand %p258, %p259
    %p261 = pneg %p260
    // Predicated region
    $region9: #{transformer_model_forward.1} parent=5 // pred_check
      _
    $region10: #{transformer_model_forward.1} parent=5 // pred_check_branch
      %263 = sbr.rel (%p260) target = $region12
    $region11: #{transformer_model_forward.1} parent=5 // pred_region
      %s264 = ssub.s32 %s15, 1
      // Predicated region
      $region13: #{transformer_model_forward.1} parent=11 // pred_check
        %p265 = pneg %p36
      $region14: #{transformer_model_forward.1} parent=11 // pred_check_branch
        %267 = sbr.rel (%p265) target = $region16
      $region15: #{transformer_model_forward.1} parent=11 // pred_region
        _
      $region16: #{transformer_model_forward.1} parent=11 // pred_fallthru
        _
      // Predicated region
      $region17: #{transformer_model_forward.1} parent=11 // pred_check
        %p268 = pneg %p57
      $region18: #{transformer_model_forward.1} parent=11 // pred_check_branch
        %270 = sbr.rel (%p268) target = $region20
      $region19: #{transformer_model_forward.1} parent=11 // pred_region
        _
      $region20: #{transformer_model_forward.1} parent=11 // pred_fallthru
        _
      // Predicated region
      $region21: #{transformer_model_forward.1} parent=11 // pred_check
        %p271 = pneg %p78
      $region22: #{transformer_model_forward.1} parent=11 // pred_check_branch
        %273 = sbr.rel (%p271) target = $region24
      $region23: #{transformer_model_forward.1} parent=11 // pred_region
        _
      $region24: #{transformer_model_forward.1} parent=11 // pred_fallthru
        _
      // Predicated region
      $region25: #{transformer_model_forward.1} parent=11 // pred_check
        %p274 = pneg %p229
      $region26: #{transformer_model_forward.1} parent=11 // pred_check_branch
        %276 = sbr.rel (%p274) target = $region28
      $region27: #{transformer_model_forward.1} parent=11 // pred_region
        _
      $region28: #{transformer_model_forward.1} parent=11 // pred_fallthru
        _
    $region12: #{transformer_model_forward.1} parent=5 // pred_fallthru
      _
    %p277 = scmp.lt.s32.totalorder %s15, 2
    // Predicated region
    $region29: #{transformer_model_forward.1} parent=5 // pred_check
      %p278 = pneg %p277
    $region30: #{transformer_model_forward.1} parent=5 // pred_check_branch
      %280 = sbr.rel (%p278) target = $region32
    $region31: #{transformer_model_forward.1} parent=5 // pred_region
      // Predicated region
      $region33: #{transformer_model_forward.1} parent=31 // pred_check
        %p281 = pneg %p98
      $region34: #{transformer_model_forward.1} parent=31 // pred_check_branch
        %283 = sbr.rel (%p281) target = $region36
      $region35: #{transformer_model_forward.1} parent=31 // pred_region
        %p284 = scmp.lt.s32.totalorder %s15, 1
        %s285 = scalar_select %p284, %s15, 1
        %s286 = smul.addr %s285, 4
        %s287 = smul.addr %s286, 8
        %s288 = scalar_lea.vmem %s3, %s287
      $region36: #{transformer_model_forward.1} parent=31 // pred_fallthru
        _
      // Predicated region
      $region37: #{transformer_model_forward.1} parent=31 // pred_check
        %p289 = pneg %p124
      $region38: #{transformer_model_forward.1} parent=31 // pred_check_branch
        %291 = sbr.rel (%p289) target = $region40
      $region39: #{transformer_model_forward.1} parent=31 // pred_region
        %p292 = scmp.lt.s32.totalorder %s15, 1
        %s293 = scalar_select %p292, %s15, 1
        %s294 = smul.addr %s293, 4
        %s295 = smul.addr %s294, 8
        %s296 = scalar_lea.vmem %s4, %s295
      $region40: #{transformer_model_forward.1} parent=31 // pred_fallthru
        _
      // Predicated region
      $region41: #{transformer_model_forward.1} parent=31 // pred_check
        %p297 = pneg %p150
      $region42: #{transformer_model_forward.1} parent=31 // pred_check_branch
        %299 = sbr.rel (%p297) target = $region44
      $region43: #{transformer_model_forward.1} parent=31 // pred_region
        %p300 = scmp.lt.s32.totalorder %s15, 1
        %s301 = scalar_select %p300, %s15, 1
        %s302 = smul.addr %s301, 8
        %s303 = scalar_lea.vmem %s5, %s302
      $region44: #{transformer_model_forward.1} parent=31 // pred_fallthru
        _
      // Predicated region
      $region45: #{transformer_model_forward.1} parent=31 // pred_check
        %p304 = pneg %p176
      $region46: #{transformer_model_forward.1} parent=31 // pred_check_branch
        %306 = sbr.rel (%p304) target = $region48
      $region47: #{transformer_model_forward.1} parent=31 // pred_region
        %p307 = scmp.lt.s32.totalorder %s15, 1
        %s308 = scalar_select %p307, %s15, 1
        %s309 = smul.addr %s308, 96
        %s310 = smul.addr %s309, 4
        %s311 = scalar_lea.vmem %s6, %s310
      $region48: #{transformer_model_forward.1} parent=31 // pred_fallthru
        _
      // Predicated region
      $region49: #{transformer_model_forward.1} parent=31 // pred_check
        %p312 = pneg %p202
      $region50: #{transformer_model_forward.1} parent=31 // pred_check_branch
        %314 = sbr.rel (%p312) target = $region52
      $region51: #{transformer_model_forward.1} parent=31 // pred_region
        %p315 = scmp.lt.s32.totalorder %s15, 1
        %s316 = scalar_select %p315, %s15, 1
        %s317 = smul.addr %s316, 256
        %s318 = smul.addr %s317, 4
        %s319 = scalar_lea.vmem %s7, %s318
      $region52: #{transformer_model_forward.1} parent=31 // pred_fallthru
        _
    $region32: #{transformer_model_forward.1} parent=5 // pred_fallthru
      _
    %p320 = scmp.le.s32.totalorder 1, %s15
    %p321 = scmp.lt.s32.totalorder %s15, 3
    %p322 = pnand %p320, %p321
    %p323 = pneg %p322
    // Predicated region
    $region53: #{transformer_model_forward.1} parent=5 // pred_check
      _
    $region54: #{transformer_model_forward.1} parent=5 // pred_check_branch
      %325 = sbr.rel (%p322) target = $region56
    $region55: #{transformer_model_forward.1} parent=5 // pred_region
      %s326 = ssub.s32 %s15, 1
      %p327 = pneg %p36
      %p328 = pneg %p33
      %p329 = pneg %p57
      %p330 = pneg %p54
      %p331 = pneg %p78
      %p332 = pneg %p75
      %p333 = scmp.lt.s32.totalorder %s20, 1
      %s334 = scalar_select %p333, %s20, 1
      %s335 = smul.addr %s334, 4
      %s336 = smul.addr %s335, 8
      %s337 = scalar_lea.vmem %s3, %s336
      %p338 = pneg %p104
      %p339 = pneg %p101
      %p340 = scmp.lt.s32.totalorder %s20, 1
      %s341 = scalar_select %p340, %s20, 1
      %s342 = smul.addr %s341, 4
      %s343 = smul.addr %s342, 8
      %s344 = scalar_lea.vmem %s4, %s343
      %p345 = pneg %p130
      %p346 = pneg %p127
      %p347 = scmp.lt.s32.totalorder %s20, 1
      %s348 = scalar_select %p347, %s20, 1
      %s349 = smul.addr %s348, 8
      %s350 = scalar_lea.vmem %s5, %s349
      %p351 = pneg %p156
      %p352 = pneg %p153
      %p353 = scmp.lt.s32.totalorder %s20, 1
      %s354 = scalar_select %p353, %s20, 1
      %s355 = smul.addr %s354, 96
      %s356 = smul.addr %s355, 4
      %s357 = scalar_lea.vmem %s6, %s356
      %p358 = pneg %p182
      %p359 = pneg %p179
      %p360 = scmp.lt.s32.totalorder %s20, 1
      %s361 = scalar_select %p360, %s20, 1
      %s362 = smul.addr %s361, 256
      %s363 = smul.addr %s362, 4
      %s364 = scalar_lea.vmem %s7, %s363
      %p365 = pneg %p208
      %p366 = pneg %p205
      %p367 = pneg %p229
      %p368 = pneg %p226
      %p369 = pneg %p250
      %p370 = pneg %p247
      %p371 = scmp.lt.s32.totalorder %s20, 1
      %s372 = scalar_select %p371, %s20, 1
      %s373 = smul.addr %s372, 4
      %s374 = smul.addr %s373, 8
      %s375 = scalar_lea.vmem %s3, %s374
      %p376 = scmp.lt.s32.totalorder %s20, 1
      %s377 = scalar_select %p376, %s20, 1
      %s378 = smul.addr %s377, 4
      %s379 = smul.addr %s378, 8
      %s380 = scalar_lea.vmem %s4, %s379
      %p381 = scmp.lt.s32.totalorder %s20, 1
      %s382 = scalar_select %p381, %s20, 1
      %s383 = smul.addr %s382, 8
      %s384 = scalar_lea.vmem %s5, %s383
      %p385 = scmp.lt.s32.totalorder %s20, 1
      %s386 = scalar_select %p385, %s20, 1
      %s387 = smul.addr %s386, 96
      %s388 = smul.addr %s387, 4
      %s389 = scalar_lea.vmem %s6, %s388
      %p390 = scmp.lt.s32.totalorder %s20, 1
      %s391 = scalar_select %p390, %s20, 1
      %s392 = smul.addr %s391, 256
      %s393 = smul.addr %s392, 4
      %s394 = scalar_lea.vmem %s7, %s393
      %p396 = scmp.eq.s32.totalorder %s20, 0
      // Predicated region
      $region57: #{transformer_model_forward.1} parent=55 // pred_check
        %p397 = pneg %p396
      $region58: #{transformer_model_forward.1} parent=55 // pred_check_branch
        %399 = sbr.rel (%p397) target = $region60
      $region59: #{transformer_model_forward.1} parent=55 // pred_region
        %v400 = vld [vmem:[%s0] sm:$0xff]
        %v401 = vld [vmem:[%s0 + $0x8] sm:$0xff]
        %vm402 = vcmask 261120
        %403 = vst.msk [vmem:[#allocation2] sm:$0xff] %vm402, %v400
        %404 = vst.msk [vmem:[#allocation2 + $0x8] sm:$0xff] %vm402, %v401
      $region60: #{transformer_model_forward.1} parent=55 // pred_fallthru
        _
      %v405 = vld [vmem:[#allocation2] sm:$0xff]
      %v406 = vld [vmem:[#allocation2 + $0x8] sm:$0xff]
      %v407 = vld [vmem:[%s1] sm:$0xff]
      %v408 = vld [vmem:[%s1 + $0x8] sm:$0xff]
      %v409 = vld [vmem:[%s1 + $0x10] sm:$0xff]
      %v410 = vld [vmem:[%s1 + $0x18] sm:$0xff]
      %v411 = vld [vmem:[%s1 + $0x20] sm:$0xff]
      %v412 = vld [vmem:[%s1 + $0x28] sm:$0xff]
      %v413 = vld [vmem:[%s1 + $0x30] sm:$0xff]
      %v414 = vld [vmem:[%s1 + $0x38] sm:$0xff]
      %v415 = vld [vmem:[%s2] sm:$0xff]
      %v416 = vld [vmem:[%s2 + $0x8] sm:$0xff]
      %v417 = vld [vmem:[%s2 + $0x10] sm:$0xff]
      %v418 = vld [vmem:[%s2 + $0x18] sm:$0xff]
      %v419 = vld [vmem:[%s2 + $0x20] sm:$0xff]
      %v420 = vld [vmem:[%s2 + $0x28] sm:$0xff]
      %v421 = vld [vmem:[%s2 + $0x30] sm:$0xff]
      %v422 = vld [vmem:[%s2 + $0x38] sm:$0xff]
      %v423 = vld [vmem:[%s384] sm:$0xff]
      %v424 = vld [vmem:[%s375] sm:$0xff]
      %v425 = vld [vmem:[%s375 + $0x8] sm:$0xff]
      %v426 = vld [vmem:[%s375 + $0x10] sm:$0xff]
      %v427 = vld [vmem:[%s375 + $0x18] sm:$0xff]
      %v428 = vlaneseq
      %v429 = vshrl.u32 %v428, 7
      %v430 = vsub.s32 0, %v429
      %v431 = vrot.slane %v423, %v430
      %vm432 = vcmask 261120
      %v434 = vsel %vm432, %v405, 0
      %v437 = vsel %vm432, %v406, 0
      %439 = vmatprep.subr.mxu0 0.0
      %440 = vmatpush1.msra.mxu0 %v424
      %441 = vmatprep.subr.mxu0 0.0
      %442 = vmatpush1.msra.mxu0 %v425
      %443 = vmatprep.subr.mxu0 0.0
      %444 = vmatpush1.msra.mxu0 %v426
      %445 = vmatprep.subr.mxu0 0.0
      %446 = vmatpush1.msra.mxu0 %v427
      %447 = vmatprep.subr.mxu0 0.0
      %448 = vmatpush1.msra.mxu0 0.0
      %449 = vmatprep.subr.mxu0 0.0
      %450 = vmatpush1.msra.mxu0 0.0
      %451 = vmatprep.subr.mxu0 0.0
      %452 = vmatpush1.msra.mxu0 0.0
      %453 = vmatprep.subr.mxu0 0.0
      %454 = vmatpush1.msra.mxu0 0.0
      %455 = vmatprep.subr.mxu0 0.0
      %456 = vmatpush1.msra.mxu0 0.0
      %457 = vmatprep.subr.mxu0 0.0
      %458 = vmatpush1.msra.mxu0 0.0
      %459 = vmatprep.subr.mxu0 0.0
      %460 = vmatpush1.msra.mxu0 0.0
      %461 = vmatprep.subr.mxu0 0.0
      %462 = vmatpush1.msra.mxu0 0.0
      %463 = vmatprep.subr.mxu0 0.0
      %464 = vmatpush1.msra.mxu0 0.0
      %465 = vmatprep.subr.mxu0 0.0
      %466 = vmatpush1.msra.mxu0 0.0
      %467 = vmatprep.subr.mxu0 0.0
      %468 = vmatpush1.msra.mxu0 0.0
      %469 = vmatprep.subr.mxu0 0.0
      %470 = vmatpush1.msra.mxu0 0.0
      %471 = vmatprep.subr.mxu0 0.0
      %472 = vmatpush1.msra.mxu0 0.0
      %473 = vmatprep.subr.mxu0 0.0
      %474 = vmatpush1.msra.mxu0 0.0
      %475 = vmatprep.subr.mxu0 0.0
      %476 = vmatpush1.msra.mxu0 0.0
      %477 = vmatprep.subr.mxu0 0.0
      %478 = vmatpush1.msra.mxu0 0.0
      %479 = vmatprep.subr.mxu0 0.0
      %480 = vmatpush1.msra.mxu0 0.0
      %481 = vmatprep.subr.mxu0 0.0
      %482 = vmatpush1.msra.mxu0 0.0
      %483 = vmatprep.subr.mxu0 0.0
      %484 = vmatpush1.msra.mxu0 0.0
      %485 = vmatprep.subr.mxu0 0.0
      %486 = vmatpush1.msra.mxu0 0.0
      %487 = vmatprep.subr.mxu0 0.0
      %488 = vmatpush1.msra.mxu0 0.0
      %489 = vmatprep.subr.mxu0 0.0
      %490 = vmatpush1.msra.mxu0 0.0
      %491 = vmatprep.subr.mxu0 0.0
      %492 = vmatpush1.msra.mxu0 0.0
      %493 = vmatprep.subr.mxu0 0.0
      %494 = vmatpush1.msra.mxu0 0.0
      %495 = vmatprep.subr.mxu0 0.0
      %496 = vmatpush1.msra.mxu0 0.0
      %497 = vmatprep.subr.mxu0 0.0
      %498 = vmatpush1.msra.mxu0 0.0
      %499 = vmatprep.subr.mxu0 0.0
      %500 = vmatpush1.msra.mxu0 0.0
      %501 = vmatprep.subr.mxu0 0.0
      %502 = vmatpush1.msra.mxu0 0.0
      %503 = vmatprep.mubr.f32.mxu0 0.0
      %504 = vmatmul.mubr.f32.gmra.mrb[0].mxu0 %v434
      %v505 = vpop.f32.mrb[0].mxu0
      %v506 = vadd.f32 %v431, %v505
      %v507 = vpop.f32.mrb[0].mxu0
      %508 = vmatprep.mubr.f32.mxu0 0.0
      %509 = vmatmul.mubr.f32.gmra.mrb[0].mxu0 %v437
      %v510 = vpop.f32.mrb[0].mxu0
      %v511 = vadd.f32 %v431, %v510
      %v512 = vpop.f32.mrb[0].mxu0
      %513 = vdwg.mxu0
      %v514 = vmul.f32 %v506, %v407
      %v515 = vmul.f32 %v511, %v408
      %v516 = vmul.f32 %v506, %v409
      %v517 = vmul.f32 %v511, %v410
      %v518 = vmul.f32 %v506, %v411
      %v519 = vmul.f32 %v511, %v412
      %v520 = vmul.f32 %v506, %v413
      %v521 = vmul.f32 %v511, %v414
      %524 = vrot.lane.b32.xlu0 %v506, 96
      %v525 = vpop.permute.xlu0 %524
      %526 = vrot.lane.b32.xlu0 %v511, 96
      %v527 = vpop.permute.xlu0 %526
      %v529 = vsel %vm432, %v514, 0
      %v532 = vsel %vm432, %v515, 0
      %v535 = vsel %vm432, %v516, 0
      %v538 = vsel %vm432, %v517, 0
      %v541 = vsel %vm432, %v518, 0
      %v544 = vsel %vm432, %v519, 0
      %v547 = vsel %vm432, %v520, 0
      %v550 = vsel %vm432, %v521, 0
      %v552 = vsel %vm432, %v525, 0
      %v554 = vsel %vm432, %v527, 0
      %556 = vmatprep.subr.mxu0 0.0
      %557 = vmatpush1.xpose.msra.mxu0 %v552
      %558 = vmatprep.subr.mxu0 0.0
      %559 = vmatpush1.xpose.msra.mxu0 %v554
      %560 = vmatprep.subr.mxu0 0.0
      %561 = vmatpush1.xpose.msra.mxu0 0.0
      %562 = vmatprep.subr.mxu0 0.0
      %563 = vmatpush1.xpose.msra.mxu0 0.0
      %564 = vmatprep.subr.mxu0 0.0
      %565 = vmatpush1.xpose.msra.mxu0 0.0
      %566 = vmatprep.subr.mxu0 0.0
      %567 = vmatpush1.xpose.msra.mxu0 0.0
      %568 = vmatprep.subr.mxu0 0.0
      %569 = vmatpush1.xpose.msra.mxu0 0.0
      %570 = vmatprep.subr.mxu0 0.0
      %571 = vmatpush1.xpose.msra.mxu0 0.0
      %572 = vmatprep.subr.mxu0 0.0
      %573 = vmatpush1.xpose.msra.mxu0 0.0
      %574 = vmatprep.subr.mxu0 0.0
      %575 = vmatpush1.xpose.msra.mxu0 0.0
      %576 = vmatprep.subr.mxu0 0.0
      %577 = vmatpush1.xpose.msra.mxu0 0.0
      %578 = vmatprep.subr.mxu0 0.0
      %579 = vmatpush1.xpose.msra.mxu0 0.0
      %580 = vmatprep.subr.mxu0 0.0
      %581 = vmatpush1.xpose.msra.mxu0 0.0
      %582 = vmatprep.subr.mxu0 0.0
      %583 = vmatpush1.xpose.msra.mxu0 0.0
      %584 = vmatprep.subr.mxu0 0.0
      %585 = vmatpush1.xpose.msra.mxu0 0.0
      %586 = vmatprep.subr.mxu0 0.0
      %587 = vmatpush1.xpose.msra.mxu0 0.0
      %588 = vmatprep.subr.mxu0 0.0
      %589 = vmatpush1.xpose.msra.mxu0 0.0
      %590 = vmatprep.subr.mxu0 0.0
      %591 = vmatpush1.xpose.msra.mxu0 0.0
      %592 = vmatprep.subr.mxu0 0.0
      %593 = vmatpush1.xpose.msra.mxu0 0.0
      %594 = vmatprep.subr.mxu0 0.0
      %595 = vmatpush1.xpose.msra.mxu0 0.0
      %596 = vmatprep.subr.mxu0 0.0
      %597 = vmatpush1.xpose.msra.mxu0 0.0
      %598 = vmatprep.subr.mxu0 0.0
      %599 = vmatpush1.xpose.msra.mxu0 0.0
      %600 = vmatprep.subr.mxu0 0.0
      %601 = vmatpush1.xpose.msra.mxu0 0.0
      %602 = vmatprep.subr.mxu0 0.0
      %603 = vmatpush1.xpose.msra.mxu0 0.0
      %604 = vmatprep.subr.mxu0 0.0
      %605 = vmatpush1.xpose.msra.mxu0 0.0
      %606 = vmatprep.subr.mxu0 0.0
      %607 = vmatpush1.xpose.msra.mxu0 0.0
      %608 = vmatprep.subr.mxu0 0.0
      %609 = vmatpush1.xpose.msra.mxu0 0.0
      %610 = vmatprep.subr.mxu0 0.0
      %611 = vmatpush1.xpose.msra.mxu0 0.0
      %612 = vmatprep.subr.mxu0 0.0
      %613 = vmatpush1.xpose.msra.mxu0 0.0
      %614 = vmatprep.subr.mxu0 0.0
      %615 = vmatpush1.xpose.msra.mxu0 0.0
      %616 = vmatprep.subr.mxu0 0.0
      %617 = vmatpush1.xpose.msra.mxu0 0.0
      %618 = vmatprep.subr.mxu0 0.0
      %619 = vmatpush1.xpose.msra.mxu0 0.0
      %620 = vmatprep.mubr.f32.mxu0 0.0
      %621 = vmatmul.mubr.f32.gmra.mrb[0].mxu0 %v529
      %v622 = vpop.f32.mrb[0].mxu0
      %v623 = vadd.f32 %v415, %v622
      %v624 = vpop.f32.mrb[0].mxu0
      %625 = vmatprep.mubr.f32.mxu0 0.0
      %626 = vmatmul.mubr.f32.gmra.mrb[0].mxu0 %v532
      %v627 = vpop.f32.mrb[0].mxu0
      %v628 = vadd.f32 %v416, %v627
      %v629 = vpop.f32.mrb[0].mxu0
      %630 = vmatprep.mubr.f32.mxu0 0.0
      %631 = vmatmul.mubr.f32.gmra.mrb[0].mxu0 %v535
      %v632 = vpop.f32.mrb[0].mxu0
      %v633 = vadd.f32 %v417, %v632
      %v634 = vpop.f32.mrb[0].mxu0
      %635 = vmatprep.mubr.f32.mxu0 0.0
      %636 = vmatmul.mubr.f32.gmra.mrb[0].mxu0 %v538
      %v637 = vpop.f32.mrb[0].mxu0
      %v638 = vadd.f32 %v418, %v637
      %v639 = vpop.f32.mrb[0].mxu0
      %640 = vmatprep.mubr.f32.mxu0 0.0
      %641 = vmatmul.mubr.f32.gmra.mrb[0].mxu0 %v541
      %v642 = vpop.f32.mrb[0].mxu0
      %v643 = vadd.f32 %v419, %v642
      %v644 = vpop.f32.mrb[0].mxu0
      %645 = vmatprep.mubr.f32.mxu0 0.0
      %646 = vmatmul.mubr.f32.gmra.mrb[0].mxu0 %v544
      %v647 = vpop.f32.mrb[0].mxu0
      %v648 = vadd.f32 %v420, %v647
      %v649 = vpop.f32.mrb[0].mxu0
      %650 = vmatprep.mubr.f32.mxu0 0.0
      %651 = vmatmul.mubr.f32.gmra.mrb[0].mxu0 %v547
      %v652 = vpop.f32.mrb[0].mxu0
      %v653 = vadd.f32 %v421, %v652
      %v654 = vpop.f32.mrb[0].mxu0
      %655 = vmatprep.mubr.f32.mxu0 0.0
      %656 = vmatmul.mubr.f32.gmra.mrb[0].mxu0 %v550
      %v657 = vpop.f32.mrb[0].mxu0
      %v658 = vadd.f32 %v422, %v657
      %v659 = vpop.f32.mrb[0].mxu0
      %660 = vdwg.mxu0
      %vm661 = vcmask 130048
      %v662 = vsel %vm661, %v623, -inf
      %663 = vmax.xlane.f32.xlu0 %v662
      %v664 = vpop.xlane.xlu0 %663
      %v665 = vsel %vm661, %v628, -inf
      %666 = vmax.xlane.f32.xlu0 %v665
      %v667 = vpop.xlane.xlu0 %666
      %v668 = vsel %vm661, %v633, -inf
      %669 = vmax.xlane.f32.xlu0 %v668
      %v670 = vpop.xlane.xlu0 %669
      %v671 = vsel %vm661, %v638, -inf
      %672 = vmax.xlane.f32.xlu0 %v671
      %v673 = vpop.xlane.xlu0 %672
      %v674 = vsel %vm661, %v643, -inf
      %675 = vmax.xlane.f32.xlu0 %v674
      %v676 = vpop.xlane.xlu0 %675
      %v677 = vsel %vm661, %v648, -inf
      %678 = vmax.xlane.f32.xlu0 %v677
      %v679 = vpop.xlane.xlu0 %678
      %v680 = vsel %vm661, %v653, -inf
      %681 = vmax.xlane.f32.xlu0 %v680
      %v682 = vpop.xlane.xlu0 %681
      %v683 = vsel %vm661, %v658, -inf
      %684 = vmax.xlane.f32.xlu0 %v683
      %v685 = vpop.xlane.xlu0 %684
      %v686 = vsub.f32 %v623, %v664
      %v687 = vsub.f32 %v628, %v667
      %v688 = vsub.f32 %v633, %v670
      %v689 = vsub.f32 %v638, %v673
      %v690 = vsub.f32 %v643, %v676
      %v691 = vsub.f32 %v648, %v679
      %v692 = vsub.f32 %v653, %v682
      %v693 = vsub.f32 %v658, %v685
      %v694 = vmul.f32 %v686, 1.442695
      %v695 = vpow.pop %v694
      %v696 = vmul.f32 %v687, 1.442695
      %v697 = vpow.pop %v696
      %v698 = vmul.f32 %v688, 1.442695
      %v699 = vpow.pop %v698
      %v700 = vmul.f32 %v689, 1.442695
      %v701 = vpow.pop %v700
      %v702 = vmul.f32 %v690, 1.442695
      %v703 = vpow.pop %v702
      %v704 = vmul.f32 %v691, 1.442695
      %v705 = vpow.pop %v704
      %v706 = vmul.f32 %v692, 1.442695
      %v707 = vpow.pop %v706
      %v708 = vmul.f32 %v693, 1.442695
      %v709 = vpow.pop %v708
      %v710 = vsel %vm661, %v695, 0.0
      %711 = vadd.xlane.f32.xlu0 %v710
      %v712 = vpop.xlane.xlu0 %711
      %v713 = vsel %vm661, %v697, 0.0
      %714 = vadd.xlane.f32.xlu0 %v713
      %v715 = vpop.xlane.xlu0 %714
      %v716 = vsel %vm661, %v699, 0.0
      %717 = vadd.xlane.f32.xlu0 %v716
      %v718 = vpop.xlane.xlu0 %717
      %v719 = vsel %vm661, %v701, 0.0
      %720 = vadd.xlane.f32.xlu0 %v719
      %v721 = vpop.xlane.xlu0 %720
      %v722 = vsel %vm661, %v703, 0.0
      %723 = vadd.xlane.f32.xlu0 %v722
      %v724 = vpop.xlane.xlu0 %723
      %v725 = vsel %vm661, %v705, 0.0
      %726 = vadd.xlane.f32.xlu0 %v725
      %v727 = vpop.xlane.xlu0 %726
      %v728 = vsel %vm661, %v707, 0.0
      %729 = vadd.xlane.f32.xlu0 %v728
      %v730 = vpop.xlane.xlu0 %729
      %v731 = vsel %vm661, %v709, 0.0
      %732 = vadd.xlane.f32.xlu0 %v731
      %v733 = vpop.xlane.xlu0 %732
      %v734 = vrcp.pop %v712
      %v735 = vrcp.pop %v715
      %v736 = vrcp.pop %v718
      %v737 = vrcp.pop %v721
      %v738 = vrcp.pop %v724
      %v739 = vrcp.pop %v727
      %v740 = vrcp.pop %v730
      %v741 = vrcp.pop %v733
      %v742 = vmul.f32 %v695, %v734
      %v743 = vmul.f32 %v697, %v735
      %v744 = vmul.f32 %v699, %v736
      %v745 = vmul.f32 %v701, %v737
      %v746 = vmul.f32 %v703, %v738
      %v747 = vmul.f32 %v705, %v739
      %v748 = vmul.f32 %v707, %v740
      %v749 = vmul.f32 %v709, %v741
      %750 = vrot.lane.b32.xlu0 %v506, 64
      %v751 = vpop.permute.xlu0 %750
      %752 = vrot.lane.b32.xlu0 %v511, 64
      %v753 = vpop.permute.xlu0 %752
      %v757 = vsel %vm661, %v742, 0
      %v760 = vsel %vm661, %v743, 0
      %v763 = vsel %vm661, %v744, 0
      %v766 = vsel %vm661, %v745, 0
      %v769 = vsel %vm661, %v746, 0
      %v772 = vsel %vm661, %v747, 0
      %v775 = vsel %vm661, %v748, 0
      %v778 = vsel %vm661, %v749, 0
      %780 = vmatprep.subr.mxu0 0.0
      %781 = vmatpush1.msra.mxu0 %v751
      %782 = vmatprep.subr.mxu0 0.0
      %783 = vmatpush1.msra.mxu0 %v753
      %784 = vmatprep.subr.mxu0 0.0
      %785 = vmatpush1.msra.mxu0 0.0
      %786 = vmatprep.subr.mxu0 0.0
      %787 = vmatpush1.msra.mxu0 0.0
      %788 = vmatprep.subr.mxu0 0.0
      %789 = vmatpush1.msra.mxu0 0.0
      %790 = vmatprep.subr.mxu0 0.0
      %791 = vmatpush1.msra.mxu0 0.0
      %792 = vmatprep.subr.mxu0 0.0
      %793 = vmatpush1.msra.mxu0 0.0
      %794 = vmatprep.subr.mxu0 0.0
      %795 = vmatpush1.msra.mxu0 0.0
      %796 = vmatprep.subr.mxu0 0.0
      %797 = vmatpush1.msra.mxu0 0.0
      %798 = vmatprep.subr.mxu0 0.0
      %799 = vmatpush1.msra.mxu0 0.0
      %800 = vmatprep.subr.mxu0 0.0
      %801 = vmatpush1.msra.mxu0 0.0
      %802 = vmatprep.subr.mxu0 0.0
      %803 = vmatpush1.msra.mxu0 0.0
      %804 = vmatprep.subr.mxu0 0.0
      %805 = vmatpush1.msra.mxu0 0.0
      %806 = vmatprep.subr.mxu0 0.0
      %807 = vmatpush1.msra.mxu0 0.0
      %808 = vmatprep.subr.mxu0 0.0
      %809 = vmatpush1.msra.mxu0 0.0
      %810 = vmatprep.subr.mxu0 0.0
      %811 = vmatpush1.msra.mxu0 0.0
      %812 = vmatprep.subr.mxu0 0.0
      %813 = vmatpush1.msra.mxu0 0.0
      %814 = vmatprep.subr.mxu0 0.0
      %815 = vmatpush1.msra.mxu0 0.0
      %816 = vmatprep.subr.mxu0 0.0
      %817 = vmatpush1.msra.mxu0 0.0
      %818 = vmatprep.subr.mxu0 0.0
      %819 = vmatpush1.msra.mxu0 0.0
      %820 = vmatprep.subr.mxu0 0.0
      %821 = vmatpush1.msra.mxu0 0.0
      %822 = vmatprep.subr.mxu0 0.0
      %823 = vmatpush1.msra.mxu0 0.0
      %824 = vmatprep.subr.mxu0 0.0
      %825 = vmatpush1.msra.mxu0 0.0
      %826 = vmatprep.subr.mxu0 0.0
      %827 = vmatpush1.msra.mxu0 0.0
      %828 = vmatprep.subr.mxu0 0.0
      %829 = vmatpush1.msra.mxu0 0.0
      %830 = vmatprep.subr.mxu0 0.0
      %831 = vmatpush1.msra.mxu0 0.0
      %832 = vmatprep.subr.mxu0 0.0
      %833 = vmatpush1.msra.mxu0 0.0
      %834 = vmatprep.subr.mxu0 0.0
      %835 = vmatpush1.msra.mxu0 0.0
      %836 = vmatprep.subr.mxu0 0.0
      %837 = vmatpush1.msra.mxu0 0.0
      %838 = vmatprep.subr.mxu0 0.0
      %839 = vmatpush1.msra.mxu0 0.0
      %840 = vmatprep.subr.mxu0 0.0
      %841 = vmatpush1.msra.mxu0 0.0
      %842 = vmatprep.subr.mxu0 0.0
      %843 = vmatpush1.msra.mxu0 0.0
      %844 = vmatprep.mubr.f32.mxu0 0.0
      %845 = vmatmul.mubr.f32.gmra.mrb[0].mxu0 %v757
      %v846 = vpop.f32.mrb[0].mxu0
      %v847 = vadd.f32 0.0, %v846
      %v848 = vpop.f32.mrb[0].mxu0
      %849 = vmatprep.mubr.f32.mxu0 0.0
      %850 = vmatmul.mubr.f32.gmra.mrb[0].mxu0 %v760
      %v851 = vpop.f32.mrb[0].mxu0
      %v852 = vadd.f32 0.0, %v851
      %v853 = vpop.f32.mrb[0].mxu0
      %854 = vmatprep.mubr.f32.mxu0 0.0
      %855 = vmatmul.mubr.f32.gmra.mrb[0].mxu0 %v763
      %v856 = vpop.f32.mrb[0].mxu0
      %v857 = vadd.f32 0.0, %v856
      %v858 = vpop.f32.mrb[0].mxu0
      %859 = vmatprep.mubr.f32.mxu0 0.0
      %860 = vmatmul.mubr.f32.gmra.mrb[0].mxu0 %v766
      %v861 = vpop.f32.mrb[0].mxu0
      %v862 = vadd.f32 0.0, %v861
      %v863 = vpop.f32.mrb[0].mxu0
      %864 = vmatprep.mubr.f32.mxu0 0.0
      %865 = vmatmul.mubr.f32.gmra.mrb[0].mxu0 %v769
      %v866 = vpop.f32.mrb[0].mxu0
      %v867 = vadd.f32 0.0, %v866
      %v868 = vpop.f32.mrb[0].mxu0
      %869 = vmatprep.mubr.f32.mxu0 0.0
      %870 = vmatmul.mubr.f32.gmra.mrb[0].mxu0 %v772
      %v871 = vpop.f32.mrb[0].mxu0
      %v872 = vadd.f32 0.0, %v871
      %v873 = vpop.f32.mrb[0].mxu0
      %874 = vmatprep.mubr.f32.mxu0 0.0
      %875 = vmatmul.mubr.f32.gmra.mrb[0].mxu0 %v775
      %v876 = vpop.f32.mrb[0].mxu0
      %v877 = vadd.f32 0.0, %v876
      %v878 = vpop.f32.mrb[0].mxu0
      %879 = vmatprep.mubr.f32.mxu0 0.0
      %880 = vmatmul.mubr.f32.gmra.mrb[0].mxu0 %v778
      %v881 = vpop.f32.mrb[0].mxu0
      %v882 = vadd.f32 0.0, %v881
      %v883 = vpop.f32.mrb[0].mxu0
      %884 = vdwg.mxu0
      %v885 = vmul.f32 %v847, %v407
      %v886 = vmul.f32 %v852, %v408
      %v887 = vmul.f32 %v857, %v409
      %v888 = vmul.f32 %v862, %v410
      %v889 = vmul.f32 %v867, %v411
      %v890 = vmul.f32 %v872, %v412
      %v891 = vmul.f32 %v877, %v413
      %v892 = vmul.f32 %v882, %v414
      %v893 = vadd.f32 %v885, %v887
      %v894 = vadd.f32 %v886, %v888
      %v895 = vadd.f32 %v893, %v889
      %v896 = vadd.f32 %v894, %v890
      %v897 = vadd.f32 %v895, %v891
      %v898 = vadd.f32 %v896, %v892
      %v899 = vld [vmem:[%s380] sm:$0xff]
      %v900 = vld [vmem:[%s380 + $0x8] sm:$0xff]
      %v901 = vld [vmem:[%s380 + $0x10] sm:$0xff]
      %v902 = vld [vmem:[%s380 + $0x18] sm:$0xff]
      %v903 = vlaneseq
      %v904 = vshrl.u32 %v903, 7
      %v905 = vsub.s32 1, %v904
      %v906 = vrot.slane %v423, %v905
      %v908 = vsel %vm432, %v897, 0
      %v911 = vsel %vm432, %v898, 0
      %913 = vmatprep.subr.mxu0 0.0
      %914 = vmatpush1.msra.mxu0 %v899
      %915 = vmatprep.subr.mxu0 0.0
      %916 = vmatpush1.msra.mxu0 %v900
      %917 = vmatprep.subr.mxu0 0.0
      %918 = vmatpush1.msra.mxu0 %v901
      %919 = vmatprep.subr.mxu0 0.0
      %920 = vmatpush1.msra.mxu0 %v902
      %921 = vmatprep.subr.mxu0 0.0
      %922 = vmatpush1.msra.mxu0 0.0
      %923 = vmatprep.subr.mxu0 0.0
      %924 = vmatpush1.msra.mxu0 0.0
      %925 = vmatprep.subr.mxu0 0.0
      %926 = vmatpush1.msra.mxu0 0.0
      %927 = vmatprep.subr.mxu0 0.0
      %928 = vmatpush1.msra.mxu0 0.0
      %929 = vmatprep.subr.mxu0 0.0
      %930 = vmatpush1.msra.mxu0 0.0
      %931 = vmatprep.subr.mxu0 0.0
      %932 = vmatpush1.msra.mxu0 0.0
      %933 = vmatprep.subr.mxu0 0.0
      %934 = vmatpush1.msra.mxu0 0.0
      %935 = vmatprep.subr.mxu0 0.0
      %936 = vmatpush1.msra.mxu0 0.0
      %937 = vmatprep.subr.mxu0 0.0
      %938 = vmatpush1.msra.mxu0 0.0
      %939 = vmatprep.subr.mxu0 0.0
      %940 = vmatpush1.msra.mxu0 0.0
      %941 = vmatprep.subr.mxu0 0.0
      %942 = vmatpush1.msra.mxu0 0.0
      %943 = vmatprep.subr.mxu0 0.0
      %944 = vmatpush1.msra.mxu0 0.0
      %945 = vmatprep.subr.mxu0 0.0
      %946 = vmatpush1.msra.mxu0 0.0
      %947 = vmatprep.subr.mxu0 0.0
      %948 = vmatpush1.msra.mxu0 0.0
      %949 = vmatprep.subr.mxu0 0.0
      %950 = vmatpush1.msra.mxu0 0.0
      %951 = vmatprep.subr.mxu0 0.0
      %952 = vmatpush1.msra.mxu0 0.0
      %953 = vmatprep.subr.mxu0 0.0
      %954 = vmatpush1.msra.mxu0 0.0
      %955 = vmatprep.subr.mxu0 0.0
      %956 = vmatpush1.msra.mxu0 0.0
      %957 = vmatprep.subr.mxu0 0.0
      %958 = vmatpush1.msra.mxu0 0.0
      %959 = vmatprep.subr.mxu0 0.0
      %960 = vmatpush1.msra.mxu0 0.0
      %961 = vmatprep.subr.mxu0 0.0
      %962 = vmatpush1.msra.mxu0 0.0
      %963 = vmatprep.subr.mxu0 0.0
      %964 = vmatpush1.msra.mxu0 0.0
      %965 = vmatprep.subr.mxu0 0.0
      %966 = vmatpush1.msra.mxu0 0.0
      %967 = vmatprep.subr.mxu0 0.0
      %968 = vmatpush1.msra.mxu0 0.0
      %969 = vmatprep.subr.mxu0 0.0
      %970 = vmatpush1.msra.mxu0 0.0
      %971 = vmatprep.subr.mxu0 0.0
      %972 = vmatpush1.msra.mxu0 0.0
      %973 = vmatprep.subr.mxu0 0.0
      %974 = vmatpush1.msra.mxu0 0.0
      %975 = vmatprep.subr.mxu0 0.0
      %976 = vmatpush1.msra.mxu0 0.0
      %977 = vmatprep.mubr.f32.mxu0 0.0
      %978 = vmatmul.mubr.f32.gmra.mrb[0].mxu0 %v908
      %v979 = vpop.f32.mrb[0].mxu0
      %v980 = vadd.f32 %v906, %v979
      %v981 = vpop.f32.mrb[0].mxu0
      %982 = vmatprep.mubr.f32.mxu0 0.0
      %983 = vmatmul.mubr.f32.gmra.mrb[0].mxu0 %v911
      %v984 = vpop.f32.mrb[0].mxu0
      %v985 = vadd.f32 %v906, %v984
      %v986 = vpop.f32.mrb[0].mxu0
      %987 = vdwg.mxu0
      %v988 = vadd.f32 %v405, %v980
      %v989 = vadd.f32 %v406, %v985
      %v990 = vsel %vm432, %v988, 0.0
      %991 = vadd.xlane.f32.xlu0 %v990
      %v992 = vpop.xlane.xlu0 %991
      %v993 = vsel %vm432, %v989, 0.0
      %994 = vadd.xlane.f32.xlu0 %v993
      %v995 = vpop.xlane.xlu0 %994
      %v996 = vrcp.pop 32.0
      %v997 = vmul.f32 %v992, %v996
      %v998 = vmul.f32 %v995, %v996
      %v999 = vsub.f32 %v988, %v997
      %v1000 = vsub.f32 %v989, %v998
      %v1001 = vmul.f32 %v999, %v999
      %v1002 = vmul.f32 %v1000, %v1000
      %v1003 = vsel %vm432, %v1001, 0.0
      %1004 = vadd.xlane.f32.xlu0 %v1003
      %v1005 = vpop.xlane.xlu0 %1004
      %v1006 = vsel %vm432, %v1002, 0.0
      %1007 = vadd.xlane.f32.xlu0 %v1006
      %v1008 = vpop.xlane.xlu0 %1007
      %v1009 = vmul.f32 %v1005, %v996
      %v1010 = vmul.f32 %v1008, %v996
      %v1011 = vadd.f32 %v1009, 1e-05
      %v1012 = vadd.f32 %v1010, 1e-05
      %v1013 = vrsqrt.pop %v1011
      %v1014 = vrsqrt.pop %v1012
      %v1015 = vmul.f32 %v999, %v1013
      %v1016 = vmul.f32 %v1000, %v1014
      %v1017 = vlaneseq
      %v1018 = vshrl.u32 %v1017, 7
      %v1019 = vsub.s32 2, %v1018
      %v1020 = vrot.slane %v423, %v1019
      %v1021 = vmul.f32 %v1015, %v1020
      %v1022 = vmul.f32 %v1016, %v1020
      %v1023 = vlaneseq
      %v1024 = vshrl.u32 %v1023, 7
      %v1025 = vsub.s32 3, %v1024
      %v1026 = vrot.slane %v423, %v1025
      %v1027 = vadd.f32 %v1021, %v1026
      %v1028 = vadd.f32 %v1022, %v1026
      %v1029 = vpack.c.bf16 %v1028, %v1027
      %v1030 = vld [vmem:[%s389] sm:$0xff]
      %v1031 = vld [vmem:[%s389 + $0x8] sm:$0xff]
      %v1032 = vld [vmem:[%s389 + $0x40] sm:$0xff]
      %v1033 = vld [vmem:[%s389 + $0x48] sm:$0xff]
      %v1034 = vld [vmem:[%s389 + $0x80] sm:$0xff]
      %v1035 = vld [vmem:[%s389 + $0x88] sm:$0xff]
      %v1036 = vld [vmem:[%s389 + $0xc0] sm:$0xff]
      %v1037 = vld [vmem:[%s389 + $0xc8] sm:$0xff]
      %v1038 = vld [vmem:[%s389 + $0x100] sm:$0x11]
      %v1039 = vld [vmem:[%s389 + $0x108] sm:$0x11]
      %v1040 = vld [vmem:[%s394] sm:$0xf]
      %v1041 = vld [vmem:[%s394 + $0x4] sm:$0xf]
      %v1042 = vld [vmem:[%s394 + $0x8] sm:$0xf]
      %v1043 = vld [vmem:[%s394 + $0xc] sm:$0xf]
      %v1044 = vld [vmem:[%s394 + $0x10] sm:$0xf]
      %v1045 = vld [vmem:[%s394 + $0x14] sm:$0xf]
      %v1046 = vld [vmem:[%s394 + $0x18] sm:$0xf]
      %v1047 = vld [vmem:[%s394 + $0x1c] sm:$0xf]
      %v1048 = vld [vmem:[%s394 + $0x20] sm:$0xf]
      %v1049 = vld [vmem:[%s394 + $0x24] sm:$0xf]
      %v1050 = vld [vmem:[%s394 + $0x28] sm:$0xf]
      %v1051 = vld [vmem:[%s394 + $0x2c] sm:$0xf]
      %v1052 = vld [vmem:[%s394 + $0x30] sm:$0xf]
      %v1053 = vld [vmem:[%s394 + $0x34] sm:$0xf]
      %v1054 = vld [vmem:[%s394 + $0x38] sm:$0xf]
      %v1055 = vld [vmem:[%s394 + $0x3c] sm:$0xf]
      %v1056 = vld [vmem:[%s394 + $0x40] sm:$0xf]
      %v1057 = vld [vmem:[%s394 + $0x44] sm:$0xf]
      %v1058 = vld [vmem:[%s394 + $0x48] sm:$0xf]
      %v1059 = vld [vmem:[%s394 + $0x4c] sm:$0xf]
      %v1060 = vld [vmem:[%s394 + $0x50] sm:$0xf]
      %v1061 = vld [vmem:[%s394 + $0x54] sm:$0xf]
      %v1062 = vld [vmem:[%s394 + $0x58] sm:$0xf]
      %v1063 = vld [vmem:[%s394 + $0x5c] sm:$0xf]
      %v1064 = vld [vmem:[%s394 + $0x60] sm:$0xf]
      %v1065 = vld [vmem:[%s394 + $0x64] sm:$0xf]
      %v1066 = vld [vmem:[%s394 + $0x68] sm:$0xf]
      %v1067 = vld [vmem:[%s394 + $0x6c] sm:$0xf]
      %v1068 = vld [vmem:[%s394 + $0x70] sm:$0xf]
      %v1069 = vld [vmem:[%s394 + $0x74] sm:$0xf]
      %v1070 = vld [vmem:[%s394 + $0x78] sm:$0xf]
      %v1071 = vld [vmem:[%s394 + $0x7c] sm:$0xf]
      %v1072 = vld [vmem:[%s394 + $0x80] sm:$0xf]
      %v1073 = vld [vmem:[%s394 + $0x84] sm:$0xf]
      %v1074 = vld [vmem:[%s394 + $0x88] sm:$0xf]
      %v1075 = vld [vmem:[%s394 + $0x8c] sm:$0xf]
      %v1076 = vld [vmem:[%s394 + $0x90] sm:$0xf]
      %v1077 = vld [vmem:[%s394 + $0x94] sm:$0xf]
      %v1078 = vld [vmem:[%s394 + $0x98] sm:$0xf]
      %v1079 = vld [vmem:[%s394 + $0x9c] sm:$0xf]
      %v1080 = vld [vmem:[%s394 + $0xa0] sm:$0xf]
      %v1081 = vld [vmem:[%s394 + $0xa4] sm:$0xf]
      %v1082 = vld [vmem:[%s394 + $0xa8] sm:$0xf]
      %v1083 = vld [vmem:[%s394 + $0xac] sm:$0xf]
      %v1084 = vld [vmem:[%s394 + $0xb0] sm:$0xf]
      %v1085 = vld [vmem:[%s394 + $0xb4] sm:$0xf]
      %v1086 = vld [vmem:[%s394 + $0xb8] sm:$0xf]
      %v1087 = vld [vmem:[%s394 + $0xbc] sm:$0xf]
      %v1088 = vld [vmem:[%s394 + $0xc0] sm:$0xf]
      %v1089 = vld [vmem:[%s394 + $0xc4] sm:$0xf]
      %v1090 = vld [vmem:[%s394 + $0xc8] sm:$0xf]
      %v1091 = vld [vmem:[%s394 + $0xcc] sm:$0xf]
      %v1092 = vld [vmem:[%s394 + $0xd0] sm:$0xf]
      %v1093 = vld [vmem:[%s394 + $0xd4] sm:$0xf]
      %v1094 = vld [vmem:[%s394 + $0xd8] sm:$0xf]
      %v1095 = vld [vmem:[%s394 + $0xdc] sm:$0xf]
      %v1096 = vld [vmem:[%s394 + $0xe0] sm:$0xf]
      %v1097 = vld [vmem:[%s394 + $0xe4] sm:$0xf]
      %v1098 = vld [vmem:[%s394 + $0xe8] sm:$0xf]
      %v1099 = vld [vmem:[%s394 + $0xec] sm:$0xf]
      %v1100 = vld [vmem:[%s394 + $0xf0] sm:$0xf]
      %v1101 = vld [vmem:[%s394 + $0xf4] sm:$0xf]
      %v1102 = vld [vmem:[%s394 + $0xf8] sm:$0xf]
      %v1103 = vld [vmem:[%s394 + $0xfc] sm:$0xf]
      %v1112 = vunpack.c.l.b16 %v1030
      %v1113 = vunpack.c.h.b16 %v1030
      %v1114 = vunpack.c.l.b16 %v1031
      %v1115 = vunpack.c.h.b16 %v1031
      %v1116 = vunpack.c.l.b16 %v1032
      %v1117 = vunpack.c.h.b16 %v1032
      %v1118 = vunpack.c.l.b16 %v1033
      %v1119 = vunpack.c.h.b16 %v1033
      %v1120 = vunpack.c.l.b16 %v1034
      %v1121 = vunpack.c.h.b16 %v1034
      %v1122 = vunpack.c.l.b16 %v1035
      %v1123 = vunpack.c.h.b16 %v1035
      %v1124 = vunpack.c.l.b16 %v1036
      %v1125 = vunpack.c.h.b16 %v1036
      %v1126 = vunpack.c.l.b16 %v1037
      %v1127 = vunpack.c.h.b16 %v1037
      %v1128 = vpack.c.b16 %v1116, %v1112
      %v1129 = vpack.c.b16 %v1117, %v1113
      %v1130 = vpack.c.b16 %v1118, %v1114
      %v1131 = vpack.c.b16 %v1119, %v1115
      %v1132 = vpack.c.b16 %v1124, %v1120
      %v1133 = vpack.c.b16 %v1125, %v1121
      %v1134 = vpack.c.b16 %v1126, %v1122
      %v1135 = vpack.c.b16 %v1127, %v1123
      %v1145 = vsel %vm432, %v1029, 0
      %1147 = vmatprep.subr.bf16.mxu0 %v1129
      %1148 = vmatpush1.bf16.msra.mxu0 %v1128
      %1149 = vmatprep.subr.bf16.mxu0 %v1133
      %1150 = vmatpush1.bf16.msra.mxu0 %v1132
      %1151 = vmatprep.subr.bf16.mxu0 0
      %1152 = vmatpush1.bf16.msra.mxu0 0
      %1153 = vmatprep.subr.bf16.mxu0 0
      %1154 = vmatpush1.bf16.msra.mxu0 0
      %1155 = vmatprep.subr.bf16.mxu0 0
      %1156 = vmatpush1.bf16.msra.mxu0 0
      %1157 = vmatprep.subr.bf16.mxu0 0
      %1158 = vmatpush1.bf16.msra.mxu0 0
      %1159 = vmatprep.subr.bf16.mxu0 0
      %1160 = vmatpush1.bf16.msra.mxu0 0
      %1161 = vmatprep.subr.bf16.mxu0 0
      %1162 = vmatpush1.bf16.msra.mxu0 0
      %1163 = vmatprep.subr.bf16.mxu0 0
      %1164 = vmatpush1.bf16.msra.mxu0 0
      %1165 = vmatprep.subr.bf16.mxu0 0
      %1166 = vmatpush1.bf16.msra.mxu0 0
      %1167 = vmatprep.subr.bf16.mxu0 0
      %1168 = vmatpush1.bf16.msra.mxu0 0
      %1169 = vmatprep.subr.bf16.mxu0 0
      %1170 = vmatpush1.bf16.msra.mxu0 0
      %1171 = vmatprep.subr.bf16.mxu0 0
      %1172 = vmatpush1.bf16.msra.mxu0 0
      %1173 = vmatprep.subr.bf16.mxu0 0
      %1174 = vmatpush1.bf16.msra.mxu0 0
      %1175 = vmatprep.subr.bf16.mxu0 0
      %1176 = vmatpush1.bf16.msra.mxu0 0
      %1177 = vmatprep.subr.bf16.mxu0 0
      %1178 = vmatpush1.bf16.msra.mxu0 0
      %1179 = vmatprep.mubr.bf16.mxu0 0
      %1180 = vmatmul.mubr.bf16.gmra.mrb[0].mxu0 %v1145
      %v1181 = vpop.f32.mrb[0].mxu0
      %v1182 = vadd.f32 0.0, %v1181
      %v1183 = vpop.f32.mrb[0].mxu0
      %v1184 = vadd.f32 0.0, %v1183
      %v1185 = vpop.f32.mrb[0].mxu0
      %v1186 = vadd.f32 0.0, %v1185
      %v1187 = vpop.f32.mrb[0].mxu0
      %v1188 = vadd.f32 0.0, %v1187
      %1189 = vdwg.mxu0
      %1190 = vmatprep.subr.bf16.mxu0 %v1131
      %1191 = vmatpush1.bf16.msra.mxu0 %v1130
      %1192 = vmatprep.subr.bf16.mxu0 %v1135
      %1193 = vmatpush1.bf16.msra.mxu0 %v1134
      %1194 = vmatprep.subr.bf16.mxu0 0
      %1195 = vmatpush1.bf16.msra.mxu0 0
      %1196 = vmatprep.subr.bf16.mxu0 0
      %1197 = vmatpush1.bf16.msra.mxu0 0
      %1198 = vmatprep.subr.bf16.mxu0 0
      %1199 = vmatpush1.bf16.msra.mxu0 0
      %1200 = vmatprep.subr.bf16.mxu0 0
      %1201 = vmatpush1.bf16.msra.mxu0 0
      %1202 = vmatprep.subr.bf16.mxu0 0
      %1203 = vmatpush1.bf16.msra.mxu0 0
      %1204 = vmatprep.subr.bf16.mxu0 0
      %1205 = vmatpush1.bf16.msra.mxu0 0
      %1206 = vmatprep.subr.bf16.mxu0 0
      %1207 = vmatpush1.bf16.msra.mxu0 0
      %1208 = vmatprep.subr.bf16.mxu0 0
      %1209 = vmatpush1.bf16.msra.mxu0 0
      %1210 = vmatprep.subr.bf16.mxu0 0
      %1211 = vmatpush1.bf16.msra.mxu0 0
      %1212 = vmatprep.subr.bf16.mxu0 0
      %1213 = vmatpush1.bf16.msra.mxu0 0
      %1214 = vmatprep.subr.bf16.mxu0 0
      %1215 = vmatpush1.bf16.msra.mxu0 0
      %1216 = vmatprep.subr.bf16.mxu0 0
      %1217 = vmatpush1.bf16.msra.mxu0 0
      %1218 = vmatprep.subr.bf16.mxu0 0
      %1219 = vmatpush1.bf16.msra.mxu0 0
      %1220 = vmatprep.subr.bf16.mxu0 0
      %1221 = vmatpush1.bf16.msra.mxu0 0
      %1222 = vmatprep.mubr.bf16.mxu0 0
      %1223 = vmatmul.mubr.bf16.gmra.mrb[0].mxu0 %v1145
      %v1224 = vpop.f32.mrb[0].mxu0
      %v1225 = vadd.f32 0.0, %v1224
      %v1226 = vpop.f32.mrb[0].mxu0
      %v1227 = vadd.f32 0.0, %v1226
      %v1228 = vpop.f32.mrb[0].mxu0
      %v1229 = vadd.f32 0.0, %v1228
      %v1230 = vpop.f32.mrb[0].mxu0
      %v1231 = vadd.f32 0.0, %v1230
      %1232 = vdwg.mxu0
      %v1233 = vpack.c.bf16 %v1186, %v1182
      %v1234 = vpack.c.bf16 %v1188, %v1184
      %v1235 = vpack.c.bf16 %v1229, %v1225
      %v1236 = vpack.c.bf16 %v1231, %v1227
      %v1239 = vunpack.c.l.b16 %v1038
      %v1240 = vunpack.c.h.b16 %v1038
      %v1241 = vunpack.c.l.b16 %v1039
      %v1242 = vunpack.c.h.b16 %v1039
      %v1243 = vpack.c.b16 %v1239, %v1239
      %v1244 = vpack.c.b16 %v1240, %v1240
      %v1245 = vpack.c.b16 %v1241, %v1241
      %v1246 = vpack.c.b16 %v1242, %v1242
      %v1248 = vpack.i.b16 %v1243, %v1243
      %v1250 = vlaneseq
      %v1251 = vshrl.u32 %v1250, 7
      %v1252 = vsub.s32 0, %v1251
      %v1253 = vrot.slane %v1248, %v1252
      %v1255 = vpack.i.b16 %v1244, %v1244
      %v1257 = vlaneseq
      %v1258 = vshrl.u32 %v1257, 7
      %v1259 = vsub.s32 0, %v1258
      %v1260 = vrot.slane %v1255, %v1259
      %v1262 = vpack.i.b16 %v1245, %v1245
      %v1264 = vlaneseq
      %v1265 = vshrl.u32 %v1264, 7
      %v1266 = vsub.s32 0, %v1265
      %v1267 = vrot.slane %v1262, %v1266
      %v1269 = vpack.i.b16 %v1246, %v1246
      %v1271 = vlaneseq
      %v1272 = vshrl.u32 %v1271, 7
      %v1273 = vsub.s32 0, %v1272
      %v1274 = vrot.slane %v1269, %v1273
      %v1275 = vadd.bf16 %v1233, %v1253
      %v1276 = vadd.bf16 %v1234, %v1260
      %v1277 = vadd.bf16 %v1235, %v1267
      %v1278 = vadd.bf16 %v1236, %v1274
      %v1279 = vmax.bf16 %v1275, 0
      %v1280 = vmax.bf16 %v1276, 0
      %v1281 = vmax.bf16 %v1277, 0
      %v1282 = vmax.bf16 %v1278, 0
      %v1283 = vld [vmem:[%s389 + $0x10] sm:$0xff]
      %v1284 = vld [vmem:[%s389 + $0x18] sm:$0xff]
      %v1285 = vld [vmem:[%s389 + $0x50] sm:$0xff]
      %v1286 = vld [vmem:[%s389 + $0x58] sm:$0xff]
      %v1287 = vld [vmem:[%s389 + $0x90] sm:$0xff]
      %v1288 = vld [vmem:[%s389 + $0x98] sm:$0xff]
      %v1289 = vld [vmem:[%s389 + $0xd0] sm:$0xff]
      %v1290 = vld [vmem:[%s389 + $0xd8] sm:$0xff]
      %v1291 = vld [vmem:[%s389 + $0x110] sm:$0x11]
      %v1292 = vld [vmem:[%s389 + $0x118] sm:$0x11]
      %v1293 = vld [vmem:[%s394 + $0x100] sm:$0xf]
      %v1294 = vld [vmem:[%s394 + $0x104] sm:$0xf]
      %v1295 = vld [vmem:[%s394 + $0x108] sm:$0xf]
      %v1296 = vld [vmem:[%s394 + $0x10c] sm:$0xf]
      %v1297 = vld [vmem:[%s394 + $0x110] sm:$0xf]
      %v1298 = vld [vmem:[%s394 + $0x114] sm:$0xf]
      %v1299 = vld [vmem:[%s394 + $0x118] sm:$0xf]
      %v1300 = vld [vmem:[%s394 + $0x11c] sm:$0xf]
      %v1301 = vld [vmem:[%s394 + $0x120] sm:$0xf]
      %v1302 = vld [vmem:[%s394 + $0x124] sm:$0xf]
      %v1303 = vld [vmem:[%s394 + $0x128] sm:$0xf]
      %v1304 = vld [vmem:[%s394 + $0x12c] sm:$0xf]
      %v1305 = vld [vmem:[%s394 + $0x130] sm:$0xf]
      %v1306 = vld [vmem:[%s394 + $0x134] sm:$0xf]
      %v1307 = vld [vmem:[%s394 + $0x138] sm:$0xf]
      %v1308 = vld [vmem:[%s394 + $0x13c] sm:$0xf]
      %v1309 = vld [vmem:[%s394 + $0x140] sm:$0xf]
      %v1310 = vld [vmem:[%s394 + $0x144] sm:$0xf]
      %v1311 = vld [vmem:[%s394 + $0x148] sm:$0xf]
      %v1312 = vld [vmem:[%s394 + $0x14c] sm:$0xf]
      %v1313 = vld [vmem:[%s394 + $0x150] sm:$0xf]
      %v1314 = vld [vmem:[%s394 + $0x154] sm:$0xf]
      %v1315 = vld [vmem:[%s394 + $0x158] sm:$0xf]
      %v1316 = vld [vmem:[%s394 + $0x15c] sm:$0xf]
      %v1317 = vld [vmem:[%s394 + $0x160] sm:$0xf]
      %v1318 = vld [vmem:[%s394 + $0x164] sm:$0xf]
      %v1319 = vld [vmem:[%s394 + $0x168] sm:$0xf]
      %v1320 = vld [vmem:[%s394 + $0x16c] sm:$0xf]
      %v1321 = vld [vmem:[%s394 + $0x170] sm:$0xf]
      %v1322 = vld [vmem:[%s394 + $0x174] sm:$0xf]
      %v1323 = vld [vmem:[%s394 + $0x178] sm:$0xf]
      %v1324 = vld [vmem:[%s394 + $0x17c] sm:$0xf]
      %v1325 = vld [vmem:[%s394 + $0x180] sm:$0xf]
      %v1326 = vld [vmem:[%s394 + $0x184] sm:$0xf]
      %v1327 = vld [vmem:[%s394 + $0x188] sm:$0xf]
      %v1328 = vld [vmem:[%s394 + $0x18c] sm:$0xf]
      %v1329 = vld [vmem:[%s394 + $0x190] sm:$0xf]
      %v1330 = vld [vmem:[%s394 + $0x194] sm:$0xf]
      %v1331 = vld [vmem:[%s394 + $0x198] sm:$0xf]
      %v1332 = vld [vmem:[%s394 + $0x19c] sm:$0xf]
      %v1333 = vld [vmem:[%s394 + $0x1a0] sm:$0xf]
      %v1334 = vld [vmem:[%s394 + $0x1a4] sm:$0xf]
      %v1335 = vld [vmem:[%s394 + $0x1a8] sm:$0xf]
      %v1336 = vld [vmem:[%s394 + $0x1ac] sm:$0xf]
      %v1337 = vld [vmem:[%s394 + $0x1b0] sm:$0xf]
      %v1338 = vld [vmem:[%s394 + $0x1b4] sm:$0xf]
      %v1339 = vld [vmem:[%s394 + $0x1b8] sm:$0xf]
      %v1340 = vld [vmem:[%s394 + $0x1bc] sm:$0xf]
      %v1341 = vld [vmem:[%s394 + $0x1c0] sm:$0xf]
      %v1342 = vld [vmem:[%s394 + $0x1c4] sm:$0xf]
      %v1343 = vld [vmem:[%s394 + $0x1c8] sm:$0xf]
      %v1344 = vld [vmem:[%s394 + $0x1cc] sm:$0xf]
      %v1345 = vld [vmem:[%s394 + $0x1d0] sm:$0xf]
      %v1346 = vld [vmem:[%s394 + $0x1d4] sm:$0xf]
      %v1347 = vld [vmem:[%s394 + $0x1d8] sm:$0xf]
      %v1348 = vld [vmem:[%s394 + $0x1dc] sm:$0xf]
      %v1349 = vld [vmem:[%s394 + $0x1e0] sm:$0xf]
      %v1350 = vld [vmem:[%s394 + $0x1e4] sm:$0xf]
      %v1351 = vld [vmem:[%s394 + $0x1e8] sm:$0xf]
      %v1352 = vld [vmem:[%s394 + $0x1ec] sm:$0xf]
      %v1353 = vld [vmem:[%s394 + $0x1f0] sm:$0xf]
      %v1354 = vld [vmem:[%s394 + $0x1f4] sm:$0xf]
      %v1355 = vld [vmem:[%s394 + $0x1f8] sm:$0xf]
      %v1356 = vld [vmem:[%s394 + $0x1fc] sm:$0xf]
      %v1365 = vunpack.c.l.b16 %v1283
      %v1366 = vunpack.c.h.b16 %v1283
      %v1367 = vunpack.c.l.b16 %v1284
      %v1368 = vunpack.c.h.b16 %v1284
      %v1369 = vunpack.c.l.b16 %v1285
      %v1370 = vunpack.c.h.b16 %v1285
      %v1371 = vunpack.c.l.b16 %v1286
      %v1372 = vunpack.c.h.b16 %v1286
      %v1373 = vunpack.c.l.b16 %v1287
      %v1374 = vunpack.c.h.b16 %v1287
      %v1375 = vunpack.c.l.b16 %v1288
      %v1376 = vunpack.c.h.b16 %v1288
      %v1377 = vunpack.c.l.b16 %v1289
      %v1378 = vunpack.c.h.b16 %v1289
      %v1379 = vunpack.c.l.b16 %v1290
      %v1380 = vunpack.c.h.b16 %v1290
      %v1381 = vpack.c.b16 %v1369, %v1365
      %v1382 = vpack.c.b16 %v1370, %v1366
      %v1383 = vpack.c.b16 %v1371, %v1367
      %v1384 = vpack.c.b16 %v1372, %v1368
      %v1385 = vpack.c.b16 %v1377, %v1373
      %v1386 = vpack.c.b16 %v1378, %v1374
      %v1387 = vpack.c.b16 %v1379, %v1375
      %v1388 = vpack.c.b16 %v1380, %v1376
      %1397 = vmatprep.subr.bf16.mxu0 %v1382
      %1398 = vmatpush1.bf16.msra.mxu0 %v1381
      %1399 = vmatprep.subr.bf16.mxu0 %v1386
      %1400 = vmatpush1.bf16.msra.mxu0 %v1385
      %1401 = vmatprep.subr.bf16.mxu0 0
      %1402 = vmatpush1.bf16.msra.mxu0 0
      %1403 = vmatprep.subr.bf16.mxu0 0
      %1404 = vmatpush1.bf16.msra.mxu0 0
      %1405 = vmatprep.subr.bf16.mxu0 0
      %1406 = vmatpush1.bf16.msra.mxu0 0
      %1407 = vmatprep.subr.bf16.mxu0 0
      %1408 = vmatpush1.bf16.msra.mxu0 0
      %1409 = vmatprep.subr.bf16.mxu0 0
      %1410 = vmatpush1.bf16.msra.mxu0 0
      %1411 = vmatprep.subr.bf16.mxu0 0
      %1412 = vmatpush1.bf16.msra.mxu0 0
      %1413 = vmatprep.subr.bf16.mxu0 0
      %1414 = vmatpush1.bf16.msra.mxu0 0
      %1415 = vmatprep.subr.bf16.mxu0 0
      %1416 = vmatpush1.bf16.msra.mxu0 0
      %1417 = vmatprep.subr.bf16.mxu0 0
      %1418 = vmatpush1.bf16.msra.mxu0 0
      %1419 = vmatprep.subr.bf16.mxu0 0
      %1420 = vmatpush1.bf16.msra.mxu0 0
      %1421 = vmatprep.subr.bf16.mxu0 0
      %1422 = vmatpush1.bf16.msra.mxu0 0
      %1423 = vmatprep.subr.bf16.mxu0 0
      %1424 = vmatpush1.bf16.msra.mxu0 0
      %1425 = vmatprep.subr.bf16.mxu0 0
      %1426 = vmatpush1.bf16.msra.mxu0 0
      %1427 = vmatprep.subr.bf16.mxu0 0
      %1428 = vmatpush1.bf16.msra.mxu0 0
      %1429 = vmatprep.mubr.bf16.mxu0 0
      %1430 = vmatmul.mubr.bf16.gmra.mrb[0].mxu0 %v1145
      %v1431 = vpop.f32.mrb[0].mxu0
      %v1432 = vadd.f32 0.0, %v1431
      %v1433 = vpop.f32.mrb[0].mxu0
      %v1434 = vadd.f32 0.0, %v1433
      %v1435 = vpop.f32.mrb[0].mxu0
      %v1436 = vadd.f32 0.0, %v1435
      %v1437 = vpop.f32.mrb[0].mxu0
      %v1438 = vadd.f32 0.0, %v1437
      %1439 = vdwg.mxu0
      %1440 = vmatprep.subr.bf16.mxu0 %v1384
      %1441 = vmatpush1.bf16.msra.mxu0 %v1383
      %1442 = vmatprep.subr.bf16.mxu0 %v1388
      %1443 = vmatpush1.bf16.msra.mxu0 %v1387
      %1444 = vmatprep.subr.bf16.mxu0 0
      %1445 = vmatpush1.bf16.msra.mxu0 0
      %1446 = vmatprep.subr.bf16.mxu0 0
      %1447 = vmatpush1.bf16.msra.mxu0 0
      %1448 = vmatprep.subr.bf16.mxu0 0
      %1449 = vmatpush1.bf16.msra.mxu0 0
      %1450 = vmatprep.subr.bf16.mxu0 0
      %1451 = vmatpush1.bf16.msra.mxu0 0
      %1452 = vmatprep.subr.bf16.mxu0 0
      %1453 = vmatpush1.bf16.msra.mxu0 0
      %1454 = vmatprep.subr.bf16.mxu0 0
      %1455 = vmatpush1.bf16.msra.mxu0 0
      %1456 = vmatprep.subr.bf16.mxu0 0
      %1457 = vmatpush1.bf16.msra.mxu0 0
      %1458 = vmatprep.subr.bf16.mxu0 0
      %1459 = vmatpush1.bf16.msra.mxu0 0
      %1460 = vmatprep.subr.bf16.mxu0 0
      %1461 = vmatpush1.bf16.msra.mxu0 0
      %1462 = vmatprep.subr.bf16.mxu0 0
      %1463 = vmatpush1.bf16.msra.mxu0 0
      %1464 = vmatprep.subr.bf16.mxu0 0
      %1465 = vmatpush1.bf16.msra.mxu0 0
      %1466 = vmatprep.subr.bf16.mxu0 0
      %1467 = vmatpush1.bf16.msra.mxu0 0
      %1468 = vmatprep.subr.bf16.mxu0 0
      %1469 = vmatpush1.bf16.msra.mxu0 0
      %1470 = vmatprep.subr.bf16.mxu0 0
      %1471 = vmatpush1.bf16.msra.mxu0 0
      %1472 = vmatprep.mubr.bf16.mxu0 0
      %1473 = vmatmul.mubr.bf16.gmra.mrb[0].mxu0 %v1145
      %v1474 = vpop.f32.mrb[0].mxu0
      %v1475 = vadd.f32 0.0, %v1474
      %v1476 = vpop.f32.mrb[0].mxu0
      %v1477 = vadd.f32 0.0, %v1476
      %v1478 = vpop.f32.mrb[0].mxu0
      %v1479 = vadd.f32 0.0, %v1478
      %v1480 = vpop.f32.mrb[0].mxu0
      %v1481 = vadd.f32 0.0, %v1480
      %1482 = vdwg.mxu0
      %v1483 = vpack.c.bf16 %v1436, %v1432
      %v1484 = vpack.c.bf16 %v1438, %v1434
      %v1485 = vpack.c.bf16 %v1479, %v1475
      %v1486 = vpack.c.bf16 %v1481, %v1477
      %v1489 = vunpack.c.l.b16 %v1291
      %v1490 = vunpack.c.h.b16 %v1291
      %v1491 = vunpack.c.l.b16 %v1292
      %v1492 = vunpack.c.h.b16 %v1292
      %v1493 = vpack.c.b16 %v1489, %v1489
      %v1494 = vpack.c.b16 %v1490, %v1490
      %v1495 = vpack.c.b16 %v1491, %v1491
      %v1496 = vpack.c.b16 %v1492, %v1492
      %v1498 = vpack.i.b16 %v1493, %v1493
      %v1500 = vlaneseq
      %v1501 = vshrl.u32 %v1500, 7
      %v1502 = vsub.s32 0, %v1501
      %v1503 = vrot.slane %v1498, %v1502
      %v1505 = vpack.i.b16 %v1494, %v1494
      %v1507 = vlaneseq
      %v1508 = vshrl.u32 %v1507, 7
      %v1509 = vsub.s32 0, %v1508
      %v1510 = vrot.slane %v1505, %v1509
      %v1512 = vpack.i.b16 %v1495, %v1495
      %v1514 = vlaneseq
      %v1515 = vshrl.u32 %v1514, 7
      %v1516 = vsub.s32 0, %v1515
      %v1517 = vrot.slane %v1512, %v1516
      %v1519 = vpack.i.b16 %v1496, %v1496
      %v1521 = vlaneseq
      %v1522 = vshrl.u32 %v1521, 7
      %v1523 = vsub.s32 0, %v1522
      %v1524 = vrot.slane %v1519, %v1523
      %v1525 = vadd.bf16 %v1483, %v1503
      %v1526 = vadd.bf16 %v1484, %v1510
      %v1527 = vadd.bf16 %v1485, %v1517
      %v1528 = vadd.bf16 %v1486, %v1524
      %v1529 = vmax.bf16 %v1525, 0
      %v1530 = vmax.bf16 %v1526, 0
      %v1531 = vmax.bf16 %v1527, 0
      %v1532 = vmax.bf16 %v1528, 0
      %v1597 = vunpack.c.l.b16 %v1293
      %v1598 = vunpack.c.l.b16 %v1294
      %v1599 = vunpack.c.l.b16 %v1295
      %v1600 = vunpack.c.l.b16 %v1296
      %v1601 = vunpack.c.l.b16 %v1297
      %v1602 = vunpack.c.l.b16 %v1298
      %v1603 = vunpack.c.l.b16 %v1299
      %v1604 = vunpack.c.l.b16 %v1300
      %v1605 = vunpack.c.l.b16 %v1301
      %v1606 = vunpack.c.l.b16 %v1302
      %v1607 = vunpack.c.l.b16 %v1303
      %v1608 = vunpack.c.l.b16 %v1304
      %v1609 = vunpack.c.l.b16 %v1305
      %v1610 = vunpack.c.l.b16 %v1306
      %v1611 = vunpack.c.l.b16 %v1307
      %v1612 = vunpack.c.l.b16 %v1308
      %v1613 = vunpack.c.l.b16 %v1309
      %v1614 = vunpack.c.l.b16 %v1310
      %v1615 = vunpack.c.l.b16 %v1311
      %v1616 = vunpack.c.l.b16 %v1312
      %v1617 = vunpack.c.l.b16 %v1313
      %v1618 = vunpack.c.l.b16 %v1314
      %v1619 = vunpack.c.l.b16 %v1315
      %v1620 = vunpack.c.l.b16 %v1316
      %v1621 = vunpack.c.l.b16 %v1317
      %v1622 = vunpack.c.l.b16 %v1318
      %v1623 = vunpack.c.l.b16 %v1319
      %v1624 = vunpack.c.l.b16 %v1320
      %v1625 = vunpack.c.l.b16 %v1321
      %v1626 = vunpack.c.l.b16 %v1322
      %v1627 = vunpack.c.l.b16 %v1323
      %v1628 = vunpack.c.l.b16 %v1324
      %v1629 = vunpack.c.l.b16 %v1325
      %v1630 = vunpack.c.l.b16 %v1326
      %v1631 = vunpack.c.l.b16 %v1327
      %v1632 = vunpack.c.l.b16 %v1328
      %v1633 = vunpack.c.l.b16 %v1329
      %v1634 = vunpack.c.l.b16 %v1330
      %v1635 = vunpack.c.l.b16 %v1331
      %v1636 = vunpack.c.l.b16 %v1332
      %v1637 = vunpack.c.l.b16 %v1333
      %v1638 = vunpack.c.l.b16 %v1334
      %v1639 = vunpack.c.l.b16 %v1335
      %v1640 = vunpack.c.l.b16 %v1336
      %v1641 = vunpack.c.l.b16 %v1337
      %v1642 = vunpack.c.l.b16 %v1338
      %v1643 = vunpack.c.l.b16 %v1339
      %v1644 = vunpack.c.l.b16 %v1340
      %v1645 = vunpack.c.l.b16 %v1341
      %v1646 = vunpack.c.l.b16 %v1342
      %v1647 = vunpack.c.l.b16 %v1343
      %v1648 = vunpack.c.l.b16 %v1344
      %v1649 = vunpack.c.l.b16 %v1345
      %v1650 = vunpack.c.l.b16 %v1346
      %v1651 = vunpack.c.l.b16 %v1347
      %v1652 = vunpack.c.l.b16 %v1348
      %v1653 = vunpack.c.l.b16 %v1349
      %v1654 = vunpack.c.l.b16 %v1350
      %v1655 = vunpack.c.l.b16 %v1351
      %v1656 = vunpack.c.l.b16 %v1352
      %v1657 = vunpack.c.l.b16 %v1353
      %v1658 = vunpack.c.l.b16 %v1354
      %v1659 = vunpack.c.l.b16 %v1355
      %v1660 = vunpack.c.l.b16 %v1356
      %v1661 = vpack.c.b16 %v1598, %v1597
      %v1662 = vpack.c.b16 %v1600, %v1599
      %v1663 = vpack.c.b16 %v1602, %v1601
      %v1664 = vpack.c.b16 %v1604, %v1603
      %v1665 = vpack.c.b16 %v1606, %v1605
      %v1666 = vpack.c.b16 %v1608, %v1607
      %v1667 = vpack.c.b16 %v1610, %v1609
      %v1668 = vpack.c.b16 %v1612, %v1611
      %v1669 = vpack.c.b16 %v1614, %v1613
      %v1670 = vpack.c.b16 %v1616, %v1615
      %v1671 = vpack.c.b16 %v1618, %v1617
      %v1672 = vpack.c.b16 %v1620, %v1619
      %v1673 = vpack.c.b16 %v1622, %v1621
      %v1674 = vpack.c.b16 %v1624, %v1623
      %v1675 = vpack.c.b16 %v1626, %v1625
      %v1676 = vpack.c.b16 %v1628, %v1627
      %v1677 = vpack.c.b16 %v1630, %v1629
      %v1678 = vpack.c.b16 %v1632, %v1631
      %v1679 = vpack.c.b16 %v1634, %v1633
      %v1680 = vpack.c.b16 %v1636, %v1635
      %v1681 = vpack.c.b16 %v1638, %v1637
      %v1682 = vpack.c.b16 %v1640, %v1639
      %v1683 = vpack.c.b16 %v1642, %v1641
      %v1684 = vpack.c.b16 %v1644, %v1643
      %v1685 = vpack.c.b16 %v1646, %v1645
      %v1686 = vpack.c.b16 %v1648, %v1647
      %v1687 = vpack.c.b16 %v1650, %v1649
      %v1688 = vpack.c.b16 %v1652, %v1651
      %v1689 = vpack.c.b16 %v1654, %v1653
      %v1690 = vpack.c.b16 %v1656, %v1655
      %v1691 = vpack.c.b16 %v1658, %v1657
      %v1692 = vpack.c.b16 %v1660, %v1659
      %1725 = vmatprep.subr.bf16.mxu0 0
      %1726 = vmatpush1.bf16.msra.mxu0 %v1661
      %1727 = vmatprep.subr.bf16.mxu0 0
      %1728 = vmatpush1.bf16.msra.mxu0 %v1662
      %1729 = vmatprep.subr.bf16.mxu0 0
      %1730 = vmatpush1.bf16.msra.mxu0 %v1663
      %1731 = vmatprep.subr.bf16.mxu0 0
      %1732 = vmatpush1.bf16.msra.mxu0 %v1664
      %1733 = vmatprep.subr.bf16.mxu0 0
      %1734 = vmatpush1.bf16.msra.mxu0 %v1665
      %1735 = vmatprep.subr.bf16.mxu0 0
      %1736 = vmatpush1.bf16.msra.mxu0 %v1666
      %1737 = vmatprep.subr.bf16.mxu0 0
      %1738 = vmatpush1.bf16.msra.mxu0 %v1667
      %1739 = vmatprep.subr.bf16.mxu0 0
      %1740 = vmatpush1.bf16.msra.mxu0 %v1668
      %1741 = vmatprep.subr.bf16.mxu0 0
      %1742 = vmatpush1.bf16.msra.mxu0 %v1669
      %1743 = vmatprep.subr.bf16.mxu0 0
      %1744 = vmatpush1.bf16.msra.mxu0 %v1670
      %1745 = vmatprep.subr.bf16.mxu0 0
      %1746 = vmatpush1.bf16.msra.mxu0 %v1671
      %1747 = vmatprep.subr.bf16.mxu0 0
      %1748 = vmatpush1.bf16.msra.mxu0 %v1672
      %1749 = vmatprep.subr.bf16.mxu0 0
      %1750 = vmatpush1.bf16.msra.mxu0 %v1673
      %1751 = vmatprep.subr.bf16.mxu0 0
      %1752 = vmatpush1.bf16.msra.mxu0 %v1674
      %1753 = vmatprep.subr.bf16.mxu0 0
      %1754 = vmatpush1.bf16.msra.mxu0 %v1675
      %1755 = vmatprep.subr.bf16.mxu0 0
      %1756 = vmatpush1.bf16.msra.mxu0 %v1676
      %1757 = vmatprep.mubr.bf16.mxu0 %v1530
      %1758 = vmatmul.mubr.bf16.gmra.mrb[0].mxu0 %v1529
      %v1759 = vpop.f32.mrb[0].mxu0
      %v1760 = vadd.f32 0.0, %v1759
      %v1761 = vpop.f32.mrb[0].mxu0
      %v1762 = vpop.f32.mrb[0].mxu0
      %v1763 = vadd.f32 0.0, %v1762
      %v1764 = vpop.f32.mrb[0].mxu0
      %1765 = vdwg.mxu0
      %1766 = vmatprep.subr.bf16.mxu0 0
      %1767 = vmatpush1.bf16.msra.mxu0 %v1677
      %1768 = vmatprep.subr.bf16.mxu0 0
      %1769 = vmatpush1.bf16.msra.mxu0 %v1678
      %1770 = vmatprep.subr.bf16.mxu0 0
      %1771 = vmatpush1.bf16.msra.mxu0 %v1679
      %1772 = vmatprep.subr.bf16.mxu0 0
      %1773 = vmatpush1.bf16.msra.mxu0 %v1680
      %1774 = vmatprep.subr.bf16.mxu0 0
      %1775 = vmatpush1.bf16.msra.mxu0 %v1681
      %1776 = vmatprep.subr.bf16.mxu0 0
      %1777 = vmatpush1.bf16.msra.mxu0 %v1682
      %1778 = vmatprep.subr.bf16.mxu0 0
      %1779 = vmatpush1.bf16.msra.mxu0 %v1683
      %1780 = vmatprep.subr.bf16.mxu0 0
      %1781 = vmatpush1.bf16.msra.mxu0 %v1684
      %1782 = vmatprep.subr.bf16.mxu0 0
      %1783 = vmatpush1.bf16.msra.mxu0 %v1685
      %1784 = vmatprep.subr.bf16.mxu0 0
      %1785 = vmatpush1.bf16.msra.mxu0 %v1686
      %1786 = vmatprep.subr.bf16.mxu0 0
      %1787 = vmatpush1.bf16.msra.mxu0 %v1687
      %1788 = vmatprep.subr.bf16.mxu0 0
      %1789 = vmatpush1.bf16.msra.mxu0 %v1688
      %1790 = vmatprep.subr.bf16.mxu0 0
      %1791 = vmatpush1.bf16.msra.mxu0 %v1689
      %1792 = vmatprep.subr.bf16.mxu0 0
      %1793 = vmatpush1.bf16.msra.mxu0 %v1690
      %1794 = vmatprep.subr.bf16.mxu0 0
      %1795 = vmatpush1.bf16.msra.mxu0 %v1691
      %1796 = vmatprep.subr.bf16.mxu0 0
      %1797 = vmatpush1.bf16.msra.mxu0 %v1692
      %1798 = vmatprep.mubr.bf16.mxu0 %v1532
      %1799 = vmatmul.mubr.bf16.gmra.mrb[0].mxu0 %v1531
      %v1800 = vpop.f32.mrb[0].mxu0
      %v1801 = vadd.f32 %v1760, %v1800
      %v1802 = vpop.f32.mrb[0].mxu0
      %v1803 = vpop.f32.mrb[0].mxu0
      %v1804 = vadd.f32 %v1763, %v1803
      %v1805 = vpop.f32.mrb[0].mxu0
      %1806 = vdwg.mxu0
      %v1871 = vunpack.c.l.b16 %v1040
      %v1872 = vunpack.c.l.b16 %v1041
      %v1873 = vunpack.c.l.b16 %v1042
      %v1874 = vunpack.c.l.b16 %v1043
      %v1875 = vunpack.c.l.b16 %v1044
      %v1876 = vunpack.c.l.b16 %v1045
      %v1877 = vunpack.c.l.b16 %v1046
      %v1878 = vunpack.c.l.b16 %v1047
      %v1879 = vunpack.c.l.b16 %v1048
      %v1880 = vunpack.c.l.b16 %v1049
      %v1881 = vunpack.c.l.b16 %v1050
      %v1882 = vunpack.c.l.b16 %v1051
      %v1883 = vunpack.c.l.b16 %v1052
      %v1884 = vunpack.c.l.b16 %v1053
      %v1885 = vunpack.c.l.b16 %v1054
      %v1886 = vunpack.c.l.b16 %v1055
      %v1887 = vunpack.c.l.b16 %v1056
      %v1888 = vunpack.c.l.b16 %v1057
      %v1889 = vunpack.c.l.b16 %v1058
      %v1890 = vunpack.c.l.b16 %v1059
      %v1891 = vunpack.c.l.b16 %v1060
      %v1892 = vunpack.c.l.b16 %v1061
      %v1893 = vunpack.c.l.b16 %v1062
      %v1894 = vunpack.c.l.b16 %v1063
      %v1895 = vunpack.c.l.b16 %v1064
      %v1896 = vunpack.c.l.b16 %v1065
      %v1897 = vunpack.c.l.b16 %v1066
      %v1898 = vunpack.c.l.b16 %v1067
      %v1899 = vunpack.c.l.b16 %v1068
      %v1900 = vunpack.c.l.b16 %v1069
      %v1901 = vunpack.c.l.b16 %v1070
      %v1902 = vunpack.c.l.b16 %v1071
      %v1903 = vunpack.c.l.b16 %v1072
      %v1904 = vunpack.c.l.b16 %v1073
      %v1905 = vunpack.c.l.b16 %v1074
      %v1906 = vunpack.c.l.b16 %v1075
      %v1907 = vunpack.c.l.b16 %v1076
      %v1908 = vunpack.c.l.b16 %v1077
      %v1909 = vunpack.c.l.b16 %v1078
      %v1910 = vunpack.c.l.b16 %v1079
      %v1911 = vunpack.c.l.b16 %v1080
      %v1912 = vunpack.c.l.b16 %v1081
      %v1913 = vunpack.c.l.b16 %v1082
      %v1914 = vunpack.c.l.b16 %v1083
      %v1915 = vunpack.c.l.b16 %v1084
      %v1916 = vunpack.c.l.b16 %v1085
      %v1917 = vunpack.c.l.b16 %v1086
      %v1918 = vunpack.c.l.b16 %v1087
      %v1919 = vunpack.c.l.b16 %v1088
      %v1920 = vunpack.c.l.b16 %v1089
      %v1921 = vunpack.c.l.b16 %v1090
      %v1922 = vunpack.c.l.b16 %v1091
      %v1923 = vunpack.c.l.b16 %v1092
      %v1924 = vunpack.c.l.b16 %v1093
      %v1925 = vunpack.c.l.b16 %v1094
      %v1926 = vunpack.c.l.b16 %v1095
      %v1927 = vunpack.c.l.b16 %v1096
      %v1928 = vunpack.c.l.b16 %v1097
      %v1929 = vunpack.c.l.b16 %v1098
      %v1930 = vunpack.c.l.b16 %v1099
      %v1931 = vunpack.c.l.b16 %v1100
      %v1932 = vunpack.c.l.b16 %v1101
      %v1933 = vunpack.c.l.b16 %v1102
      %v1934 = vunpack.c.l.b16 %v1103
      %v1935 = vpack.c.b16 %v1872, %v1871
      %v1936 = vpack.c.b16 %v1874, %v1873
      %v1937 = vpack.c.b16 %v1876, %v1875
      %v1938 = vpack.c.b16 %v1878, %v1877
      %v1939 = vpack.c.b16 %v1880, %v1879
      %v1940 = vpack.c.b16 %v1882, %v1881
      %v1941 = vpack.c.b16 %v1884, %v1883
      %v1942 = vpack.c.b16 %v1886, %v1885
      %v1943 = vpack.c.b16 %v1888, %v1887
      %v1944 = vpack.c.b16 %v1890, %v1889
      %v1945 = vpack.c.b16 %v1892, %v1891
      %v1946 = vpack.c.b16 %v1894, %v1893
      %v1947 = vpack.c.b16 %v1896, %v1895
      %v1948 = vpack.c.b16 %v1898, %v1897
      %v1949 = vpack.c.b16 %v1900, %v1899
      %v1950 = vpack.c.b16 %v1902, %v1901
      %v1951 = vpack.c.b16 %v1904, %v1903
      %v1952 = vpack.c.b16 %v1906, %v1905
      %v1953 = vpack.c.b16 %v1908, %v1907
      %v1954 = vpack.c.b16 %v1910, %v1909
      %v1955 = vpack.c.b16 %v1912, %v1911
      %v1956 = vpack.c.b16 %v1914, %v1913
      %v1957 = vpack.c.b16 %v1916, %v1915
      %v1958 = vpack.c.b16 %v1918, %v1917
      %v1959 = vpack.c.b16 %v1920, %v1919
      %v1960 = vpack.c.b16 %v1922, %v1921
      %v1961 = vpack.c.b16 %v1924, %v1923
      %v1962 = vpack.c.b16 %v1926, %v1925
      %v1963 = vpack.c.b16 %v1928, %v1927
      %v1964 = vpack.c.b16 %v1930, %v1929
      %v1965 = vpack.c.b16 %v1932, %v1931
      %v1966 = vpack.c.b16 %v1934, %v1933
      %1999 = vmatprep.subr.bf16.mxu0 0
      %2000 = vmatpush1.bf16.msra.mxu0 %v1935
      %2001 = vmatprep.subr.bf16.mxu0 0
      %2002 = vmatpush1.bf16.msra.mxu0 %v1936
      %2003 = vmatprep.subr.bf16.mxu0 0
      %2004 = vmatpush1.bf16.msra.mxu0 %v1937
      %2005 = vmatprep.subr.bf16.mxu0 0
      %2006 = vmatpush1.bf16.msra.mxu0 %v1938
      %2007 = vmatprep.subr.bf16.mxu0 0
      %2008 = vmatpush1.bf16.msra.mxu0 %v1939
      %2009 = vmatprep.subr.bf16.mxu0 0
      %2010 = vmatpush1.bf16.msra.mxu0 %v1940
      %2011 = vmatprep.subr.bf16.mxu0 0
      %2012 = vmatpush1.bf16.msra.mxu0 %v1941
      %2013 = vmatprep.subr.bf16.mxu0 0
      %2014 = vmatpush1.bf16.msra.mxu0 %v1942
      %2015 = vmatprep.subr.bf16.mxu0 0
      %2016 = vmatpush1.bf16.msra.mxu0 %v1943
      %2017 = vmatprep.subr.bf16.mxu0 0
      %2018 = vmatpush1.bf16.msra.mxu0 %v1944
      %2019 = vmatprep.subr.bf16.mxu0 0
      %2020 = vmatpush1.bf16.msra.mxu0 %v1945
      %2021 = vmatprep.subr.bf16.mxu0 0
      %2022 = vmatpush1.bf16.msra.mxu0 %v1946
      %2023 = vmatprep.subr.bf16.mxu0 0
      %2024 = vmatpush1.bf16.msra.mxu0 %v1947
      %2025 = vmatprep.subr.bf16.mxu0 0
      %2026 = vmatpush1.bf16.msra.mxu0 %v1948
      %2027 = vmatprep.subr.bf16.mxu0 0
      %2028 = vmatpush1.bf16.msra.mxu0 %v1949
      %2029 = vmatprep.subr.bf16.mxu0 0
      %2030 = vmatpush1.bf16.msra.mxu0 %v1950
      %2031 = vmatprep.mubr.bf16.mxu0 %v1280
      %2032 = vmatmul.mubr.bf16.gmra.mrb[0].mxu0 %v1279
      %v2033 = vpop.f32.mrb[0].mxu0
      %v2034 = vadd.f32 %v1801, %v2033
      %v2035 = vpop.f32.mrb[0].mxu0
      %v2036 = vpop.f32.mrb[0].mxu0
      %v2037 = vadd.f32 %v1804, %v2036
      %v2038 = vpop.f32.mrb[0].mxu0
      %2039 = vdwg.mxu0
      %2040 = vmatprep.subr.bf16.mxu0 0
      %2041 = vmatpush1.bf16.msra.mxu0 %v1951
      %2042 = vmatprep.subr.bf16.mxu0 0
      %2043 = vmatpush1.bf16.msra.mxu0 %v1952
      %2044 = vmatprep.subr.bf16.mxu0 0
      %2045 = vmatpush1.bf16.msra.mxu0 %v1953
      %2046 = vmatprep.subr.bf16.mxu0 0
      %2047 = vmatpush1.bf16.msra.mxu0 %v1954
      %2048 = vmatprep.subr.bf16.mxu0 0
      %2049 = vmatpush1.bf16.msra.mxu0 %v1955
      %2050 = vmatprep.subr.bf16.mxu0 0
      %2051 = vmatpush1.bf16.msra.mxu0 %v1956
      %2052 = vmatprep.subr.bf16.mxu0 0
      %2053 = vmatpush1.bf16.msra.mxu0 %v1957
      %2054 = vmatprep.subr.bf16.mxu0 0
      %2055 = vmatpush1.bf16.msra.mxu0 %v1958
      %2056 = vmatprep.subr.bf16.mxu0 0
      %2057 = vmatpush1.bf16.msra.mxu0 %v1959
      %2058 = vmatprep.subr.bf16.mxu0 0
      %2059 = vmatpush1.bf16.msra.mxu0 %v1960
      %2060 = vmatprep.subr.bf16.mxu0 0
      %2061 = vmatpush1.bf16.msra.mxu0 %v1961
      %2062 = vmatprep.subr.bf16.mxu0 0
      %2063 = vmatpush1.bf16.msra.mxu0 %v1962
      %2064 = vmatprep.subr.bf16.mxu0 0
      %2065 = vmatpush1.bf16.msra.mxu0 %v1963
      %2066 = vmatprep.subr.bf16.mxu0 0
      %2067 = vmatpush1.bf16.msra.mxu0 %v1964
      %2068 = vmatprep.subr.bf16.mxu0 0
      %2069 = vmatpush1.bf16.msra.mxu0 %v1965
      %2070 = vmatprep.subr.bf16.mxu0 0
      %2071 = vmatpush1.bf16.msra.mxu0 %v1966
      %2072 = vmatprep.mubr.bf16.mxu0 %v1282
      %2073 = vmatmul.mubr.bf16.gmra.mrb[0].mxu0 %v1281
      %v2074 = vpop.f32.mrb[0].mxu0
      %v2075 = vadd.f32 %v2034, %v2074
      %v2076 = vpop.f32.mrb[0].mxu0
      %v2077 = vpop.f32.mrb[0].mxu0
      %v2078 = vadd.f32 %v2037, %v2077
      %v2079 = vpop.f32.mrb[0].mxu0
      %2080 = vdwg.mxu0
      %v2081 = vld [vmem:[%s389 + $0x20] sm:$0xff]
      %v2082 = vld [vmem:[%s389 + $0x28] sm:$0xff]
      %v2083 = vld [vmem:[%s389 + $0x60] sm:$0xff]
      %v2084 = vld [vmem:[%s389 + $0x68] sm:$0xff]
      %v2085 = vld [vmem:[%s389 + $0xa0] sm:$0xff]
      %v2086 = vld [vmem:[%s389 + $0xa8] sm:$0xff]
      %v2087 = vld [vmem:[%s389 + $0xe0] sm:$0xff]
      %v2088 = vld [vmem:[%s389 + $0xe8] sm:$0xff]
      %v2089 = vld [vmem:[%s389 + $0x120] sm:$0x11]
      %v2090 = vld [vmem:[%s389 + $0x128] sm:$0x11]
      %v2091 = vld [vmem:[%s394 + $0x200] sm:$0xf]
      %v2092 = vld [vmem:[%s394 + $0x204] sm:$0xf]
      %v2093 = vld [vmem:[%s394 + $0x208] sm:$0xf]
      %v2094 = vld [vmem:[%s394 + $0x20c] sm:$0xf]
      %v2095 = vld [vmem:[%s394 + $0x210] sm:$0xf]
      %v2096 = vld [vmem:[%s394 + $0x214] sm:$0xf]
      %v2097 = vld [vmem:[%s394 + $0x218] sm:$0xf]
      %v2098 = vld [vmem:[%s394 + $0x21c] sm:$0xf]
      %v2099 = vld [vmem:[%s394 + $0x220] sm:$0xf]
      %v2100 = vld [vmem:[%s394 + $0x224] sm:$0xf]
      %v2101 = vld [vmem:[%s394 + $0x228] sm:$0xf]
      %v2102 = vld [vmem:[%s394 + $0x22c] sm:$0xf]
      %v2103 = vld [vmem:[%s394 + $0x230] sm:$0xf]
      %v2104 = vld [vmem:[%s394 + $0x234] sm:$0xf]
      %v2105 = vld [vmem:[%s394 + $0x238] sm:$0xf]
      %v2106 = vld [vmem:[%s394 + $0x23c] sm:$0xf]
      %v2107 = vld [vmem:[%s394 + $0x240] sm:$0xf]
      %v2108 = vld [vmem:[%s394 + $0x244] sm:$0xf]
      %v2109 = vld [vmem:[%s394 + $0x248] sm:$0xf]
      %v2110 = vld [vmem:[%s394 + $0x24c] sm:$0xf]
      %v2111 = vld [vmem:[%s394 + $0x250] sm:$0xf]
      %v2112 = vld [vmem:[%s394 + $0x254] sm:$0xf]
      %v2113 = vld [vmem:[%s394 + $0x258] sm:$0xf]
      %v2114 = vld [vmem:[%s394 + $0x25c] sm:$0xf]
      %v2115 = vld [vmem:[%s394 + $0x260] sm:$0xf]
      %v2116 = vld [vmem:[%s394 + $0x264] sm:$0xf]
      %v2117 = vld [vmem:[%s394 + $0x268] sm:$0xf]
      %v2118 = vld [vmem:[%s394 + $0x26c] sm:$0xf]
      %v2119 = vld [vmem:[%s394 + $0x270] sm:$0xf]
      %v2120 = vld [vmem:[%s394 + $0x274] sm:$0xf]
      %v2121 = vld [vmem:[%s394 + $0x278] sm:$0xf]
      %v2122 = vld [vmem:[%s394 + $0x27c] sm:$0xf]
      %v2123 = vld [vmem:[%s394 + $0x280] sm:$0xf]
      %v2124 = vld [vmem:[%s394 + $0x284] sm:$0xf]
      %v2125 = vld [vmem:[%s394 + $0x288] sm:$0xf]
      %v2126 = vld [vmem:[%s394 + $0x28c] sm:$0xf]
      %v2127 = vld [vmem:[%s394 + $0x290] sm:$0xf]
      %v2128 = vld [vmem:[%s394 + $0x294] sm:$0xf]
      %v2129 = vld [vmem:[%s394 + $0x298] sm:$0xf]
      %v2130 = vld [vmem:[%s394 + $0x29c] sm:$0xf]
      %v2131 = vld [vmem:[%s394 + $0x2a0] sm:$0xf]
      %v2132 = vld [vmem:[%s394 + $0x2a4] sm:$0xf]
      %v2133 = vld [vmem:[%s394 + $0x2a8] sm:$0xf]
      %v2134 = vld [vmem:[%s394 + $0x2ac] sm:$0xf]
      %v2135 = vld [vmem:[%s394 + $0x2b0] sm:$0xf]
      %v2136 = vld [vmem:[%s394 + $0x2b4] sm:$0xf]
      %v2137 = vld [vmem:[%s394 + $0x2b8] sm:$0xf]
      %v2138 = vld [vmem:[%s394 + $0x2bc] sm:$0xf]
      %v2139 = vld [vmem:[%s394 + $0x2c0] sm:$0xf]
      %v2140 = vld [vmem:[%s394 + $0x2c4] sm:$0xf]
      %v2141 = vld [vmem:[%s394 + $0x2c8] sm:$0xf]
      %v2142 = vld [vmem:[%s394 + $0x2cc] sm:$0xf]
      %v2143 = vld [vmem:[%s394 + $0x2d0] sm:$0xf]
      %v2144 = vld [vmem:[%s394 + $0x2d4] sm:$0xf]
      %v2145 = vld [vmem:[%s394 + $0x2d8] sm:$0xf]
      %v2146 = vld [vmem:[%s394 + $0x2dc] sm:$0xf]
      %v2147 = vld [vmem:[%s394 + $0x2e0] sm:$0xf]
      %v2148 = vld [vmem:[%s394 + $0x2e4] sm:$0xf]
      %v2149 = vld [vmem:[%s394 + $0x2e8] sm:$0xf]
      %v2150 = vld [vmem:[%s394 + $0x2ec] sm:$0xf]
      %v2151 = vld [vmem:[%s394 + $0x2f0] sm:$0xf]
      %v2152 = vld [vmem:[%s394 + $0x2f4] sm:$0xf]
      %v2153 = vld [vmem:[%s394 + $0x2f8] sm:$0xf]
      %v2154 = vld [vmem:[%s394 + $0x2fc] sm:$0xf]
      %v2163 = vunpack.c.l.b16 %v2081
      %v2164 = vunpack.c.h.b16 %v2081
      %v2165 = vunpack.c.l.b16 %v2082
      %v2166 = vunpack.c.h.b16 %v2082
      %v2167 = vunpack.c.l.b16 %v2083
      %v2168 = vunpack.c.h.b16 %v2083
      %v2169 = vunpack.c.l.b16 %v2084
      %v2170 = vunpack.c.h.b16 %v2084
      %v2171 = vunpack.c.l.b16 %v2085
      %v2172 = vunpack.c.h.b16 %v2085
      %v2173 = vunpack.c.l.b16 %v2086
      %v2174 = vunpack.c.h.b16 %v2086
      %v2175 = vunpack.c.l.b16 %v2087
      %v2176 = vunpack.c.h.b16 %v2087
      %v2177 = vunpack.c.l.b16 %v2088
      %v2178 = vunpack.c.h.b16 %v2088
      %v2179 = vpack.c.b16 %v2167, %v2163
      %v2180 = vpack.c.b16 %v2168, %v2164
      %v2181 = vpack.c.b16 %v2169, %v2165
      %v2182 = vpack.c.b16 %v2170, %v2166
      %v2183 = vpack.c.b16 %v2175, %v2171
      %v2184 = vpack.c.b16 %v2176, %v2172
      %v2185 = vpack.c.b16 %v2177, %v2173
      %v2186 = vpack.c.b16 %v2178, %v2174
      %2195 = vmatprep.subr.bf16.mxu0 %v2180
      %2196 = vmatpush1.bf16.msra.mxu0 %v2179
      %2197 = vmatprep.subr.bf16.mxu0 %v2184
      %2198 = vmatpush1.bf16.msra.mxu0 %v2183
      %2199 = vmatprep.subr.bf16.mxu0 0
      %2200 = vmatpush1.bf16.msra.mxu0 0
      %2201 = vmatprep.subr.bf16.mxu0 0
      %2202 = vmatpush1.bf16.msra.mxu0 0
      %2203 = vmatprep.subr.bf16.mxu0 0
      %2204 = vmatpush1.bf16.msra.mxu0 0
      %2205 = vmatprep.subr.bf16.mxu0 0
      %2206 = vmatpush1.bf16.msra.mxu0 0
      %2207 = vmatprep.subr.bf16.mxu0 0
      %2208 = vmatpush1.bf16.msra.mxu0 0
      %2209 = vmatprep.subr.bf16.mxu0 0
      %2210 = vmatpush1.bf16.msra.mxu0 0
      %2211 = vmatprep.subr.bf16.mxu0 0
      %2212 = vmatpush1.bf16.msra.mxu0 0
      %2213 = vmatprep.subr.bf16.mxu0 0
      %2214 = vmatpush1.bf16.msra.mxu0 0
      %2215 = vmatprep.subr.bf16.mxu0 0
      %2216 = vmatpush1.bf16.msra.mxu0 0
      %2217 = vmatprep.subr.bf16.mxu0 0
      %2218 = vmatpush1.bf16.msra.mxu0 0
      %2219 = vmatprep.subr.bf16.mxu0 0
      %2220 = vmatpush1.bf16.msra.mxu0 0
      %2221 = vmatprep.subr.bf16.mxu0 0
      %2222 = vmatpush1.bf16.msra.mxu0 0
      %2223 = vmatprep.subr.bf16.mxu0 0
      %2224 = vmatpush1.bf16.msra.mxu0 0
      %2225 = vmatprep.subr.bf16.mxu0 0
      %2226 = vmatpush1.bf16.msra.mxu0 0
      %2227 = vmatprep.mubr.bf16.mxu0 0
      %2228 = vmatmul.mubr.bf16.gmra.mrb[0].mxu0 %v1145
      %v2229 = vpop.f32.mrb[0].mxu0
      %v2230 = vadd.f32 0.0, %v2229
      %v2231 = vpop.f32.mrb[0].mxu0
      %v2232 = vadd.f32 0.0, %v2231
      %v2233 = vpop.f32.mrb[0].mxu0
      %v2234 = vadd.f32 0.0, %v2233
      %v2235 = vpop.f32.mrb[0].mxu0
      %v2236 = vadd.f32 0.0, %v2235
      %2237 = vdwg.mxu0
      %2238 = vmatprep.subr.bf16.mxu0 %v2182
      %2239 = vmatpush1.bf16.msra.mxu0 %v2181
      %2240 = vmatprep.subr.bf16.mxu0 %v2186
      %2241 = vmatpush1.bf16.msra.mxu0 %v2185
      %2242 = vmatprep.subr.bf16.mxu0 0
      %2243 = vmatpush1.bf16.msra.mxu0 0
      %2244 = vmatprep.subr.bf16.mxu0 0
      %2245 = vmatpush1.bf16.msra.mxu0 0
      %2246 = vmatprep.subr.bf16.mxu0 0
      %2247 = vmatpush1.bf16.msra.mxu0 0
      %2248 = vmatprep.subr.bf16.mxu0 0
      %2249 = vmatpush1.bf16.msra.mxu0 0
      %2250 = vmatprep.subr.bf16.mxu0 0
      %2251 = vmatpush1.bf16.msra.mxu0 0
      %2252 = vmatprep.subr.bf16.mxu0 0
      %2253 = vmatpush1.bf16.msra.mxu0 0
      %2254 = vmatprep.subr.bf16.mxu0 0
      %2255 = vmatpush1.bf16.msra.mxu0 0
      %2256 = vmatprep.subr.bf16.mxu0 0
      %2257 = vmatpush1.bf16.msra.mxu0 0
      %2258 = vmatprep.subr.bf16.mxu0 0
      %2259 = vmatpush1.bf16.msra.mxu0 0
      %2260 = vmatprep.subr.bf16.mxu0 0
      %2261 = vmatpush1.bf16.msra.mxu0 0
      %2262 = vmatprep.subr.bf16.mxu0 0
      %2263 = vmatpush1.bf16.msra.mxu0 0
      %2264 = vmatprep.subr.bf16.mxu0 0
      %2265 = vmatpush1.bf16.msra.mxu0 0
      %2266 = vmatprep.subr.bf16.mxu0 0
      %2267 = vmatpush1.bf16.msra.mxu0 0
      %2268 = vmatprep.subr.bf16.mxu0 0
      %2269 = vmatpush1.bf16.msra.mxu0 0
      %2270 = vmatprep.mubr.bf16.mxu0 0
      %2271 = vmatmul.mubr.bf16.gmra.mrb[0].mxu0 %v1145
      %v2272 = vpop.f32.mrb[0].mxu0
      %v2273 = vadd.f32 0.0, %v2272
      %v2274 = vpop.f32.mrb[0].mxu0
      %v2275 = vadd.f32 0.0, %v2274
      %v2276 = vpop.f32.mrb[0].mxu0
      %v2277 = vadd.f32 0.0, %v2276
      %v2278 = vpop.f32.mrb[0].mxu0
      %v2279 = vadd.f32 0.0, %v2278
      %2280 = vdwg.mxu0
      %v2281 = vpack.c.bf16 %v2234, %v2230
      %v2282 = vpack.c.bf16 %v2236, %v2232
      %v2283 = vpack.c.bf16 %v2277, %v2273
      %v2284 = vpack.c.bf16 %v2279, %v2275
      %v2287 = vunpack.c.l.b16 %v2089
      %v2288 = vunpack.c.h.b16 %v2089
      %v2289 = vunpack.c.l.b16 %v2090
      %v2290 = vunpack.c.h.b16 %v2090
      %v2291 = vpack.c.b16 %v2287, %v2287
      %v2292 = vpack.c.b16 %v2288, %v2288
      %v2293 = vpack.c.b16 %v2289, %v2289
      %v2294 = vpack.c.b16 %v2290, %v2290
      %v2296 = vpack.i.b16 %v2291, %v2291
      %v2298 = vlaneseq
      %v2299 = vshrl.u32 %v2298, 7
      %v2300 = vsub.s32 0, %v2299
      %v2301 = vrot.slane %v2296, %v2300
      %v2303 = vpack.i.b16 %v2292, %v2292
      %v2305 = vlaneseq
      %v2306 = vshrl.u32 %v2305, 7
      %v2307 = vsub.s32 0, %v2306
      %v2308 = vrot.slane %v2303, %v2307
      %v2310 = vpack.i.b16 %v2293, %v2293
      %v2312 = vlaneseq
      %v2313 = vshrl.u32 %v2312, 7
      %v2314 = vsub.s32 0, %v2313
      %v2315 = vrot.slane %v2310, %v2314
      %v2317 = vpack.i.b16 %v2294, %v2294
      %v2319 = vlaneseq
      %v2320 = vshrl.u32 %v2319, 7
      %v2321 = vsub.s32 0, %v2320
      %v2322 = vrot.slane %v2317, %v2321
      %v2323 = vadd.bf16 %v2281, %v2301
      %v2324 = vadd.bf16 %v2282, %v2308
      %v2325 = vadd.bf16 %v2283, %v2315
      %v2326 = vadd.bf16 %v2284, %v2322
      %v2327 = vmax.bf16 %v2323, 0
      %v2328 = vmax.bf16 %v2324, 0
      %v2329 = vmax.bf16 %v2325, 0
      %v2330 = vmax.bf16 %v2326, 0
      %v2395 = vunpack.c.l.b16 %v2091
      %v2396 = vunpack.c.l.b16 %v2092
      %v2397 = vunpack.c.l.b16 %v2093
      %v2398 = vunpack.c.l.b16 %v2094
      %v2399 = vunpack.c.l.b16 %v2095
      %v2400 = vunpack.c.l.b16 %v2096
      %v2401 = vunpack.c.l.b16 %v2097
      %v2402 = vunpack.c.l.b16 %v2098
      %v2403 = vunpack.c.l.b16 %v2099
      %v2404 = vunpack.c.l.b16 %v2100
      %v2405 = vunpack.c.l.b16 %v2101
      %v2406 = vunpack.c.l.b16 %v2102
      %v2407 = vunpack.c.l.b16 %v2103
      %v2408 = vunpack.c.l.b16 %v2104
      %v2409 = vunpack.c.l.b16 %v2105
      %v2410 = vunpack.c.l.b16 %v2106
      %v2411 = vunpack.c.l.b16 %v2107
      %v2412 = vunpack.c.l.b16 %v2108
      %v2413 = vunpack.c.l.b16 %v2109
      %v2414 = vunpack.c.l.b16 %v2110
      %v2415 = vunpack.c.l.b16 %v2111
      %v2416 = vunpack.c.l.b16 %v2112
      %v2417 = vunpack.c.l.b16 %v2113
      %v2418 = vunpack.c.l.b16 %v2114
      %v2419 = vunpack.c.l.b16 %v2115
      %v2420 = vunpack.c.l.b16 %v2116
      %v2421 = vunpack.c.l.b16 %v2117
      %v2422 = vunpack.c.l.b16 %v2118
      %v2423 = vunpack.c.l.b16 %v2119
      %v2424 = vunpack.c.l.b16 %v2120
      %v2425 = vunpack.c.l.b16 %v2121
      %v2426 = vunpack.c.l.b16 %v2122
      %v2427 = vunpack.c.l.b16 %v2123
      %v2428 = vunpack.c.l.b16 %v2124
      %v2429 = vunpack.c.l.b16 %v2125
      %v2430 = vunpack.c.l.b16 %v2126
      %v2431 = vunpack.c.l.b16 %v2127
      %v2432 = vunpack.c.l.b16 %v2128
      %v2433 = vunpack.c.l.b16 %v2129
      %v2434 = vunpack.c.l.b16 %v2130
      %v2435 = vunpack.c.l.b16 %v2131
      %v2436 = vunpack.c.l.b16 %v2132
      %v2437 = vunpack.c.l.b16 %v2133
      %v2438 = vunpack.c.l.b16 %v2134
      %v2439 = vunpack.c.l.b16 %v2135
      %v2440 = vunpack.c.l.b16 %v2136
      %v2441 = vunpack.c.l.b16 %v2137
      %v2442 = vunpack.c.l.b16 %v2138
      %v2443 = vunpack.c.l.b16 %v2139
      %v2444 = vunpack.c.l.b16 %v2140
      %v2445 = vunpack.c.l.b16 %v2141
      %v2446 = vunpack.c.l.b16 %v2142
      %v2447 = vunpack.c.l.b16 %v2143
      %v2448 = vunpack.c.l.b16 %v2144
      %v2449 = vunpack.c.l.b16 %v2145
      %v2450 = vunpack.c.l.b16 %v2146
      %v2451 = vunpack.c.l.b16 %v2147
      %v2452 = vunpack.c.l.b16 %v2148
      %v2453 = vunpack.c.l.b16 %v2149
      %v2454 = vunpack.c.l.b16 %v2150
      %v2455 = vunpack.c.l.b16 %v2151
      %v2456 = vunpack.c.l.b16 %v2152
      %v2457 = vunpack.c.l.b16 %v2153
      %v2458 = vunpack.c.l.b16 %v2154
      %v2459 = vpack.c.b16 %v2396, %v2395
      %v2460 = vpack.c.b16 %v2398, %v2397
      %v2461 = vpack.c.b16 %v2400, %v2399
      %v2462 = vpack.c.b16 %v2402, %v2401
      %v2463 = vpack.c.b16 %v2404, %v2403
      %v2464 = vpack.c.b16 %v2406, %v2405
      %v2465 = vpack.c.b16 %v2408, %v2407
      %v2466 = vpack.c.b16 %v2410, %v2409
      %v2467 = vpack.c.b16 %v2412, %v2411
      %v2468 = vpack.c.b16 %v2414, %v2413
      %v2469 = vpack.c.b16 %v2416, %v2415
      %v2470 = vpack.c.b16 %v2418, %v2417
      %v2471 = vpack.c.b16 %v2420, %v2419
      %v2472 = vpack.c.b16 %v2422, %v2421
      %v2473 = vpack.c.b16 %v2424, %v2423
      %v2474 = vpack.c.b16 %v2426, %v2425
      %v2475 = vpack.c.b16 %v2428, %v2427
      %v2476 = vpack.c.b16 %v2430, %v2429
      %v2477 = vpack.c.b16 %v2432, %v2431
      %v2478 = vpack.c.b16 %v2434, %v2433
      %v2479 = vpack.c.b16 %v2436, %v2435
      %v2480 = vpack.c.b16 %v2438, %v2437
      %v2481 = vpack.c.b16 %v2440, %v2439
      %v2482 = vpack.c.b16 %v2442, %v2441
      %v2483 = vpack.c.b16 %v2444, %v2443
      %v2484 = vpack.c.b16 %v2446, %v2445
      %v2485 = vpack.c.b16 %v2448, %v2447
      %v2486 = vpack.c.b16 %v2450, %v2449
      %v2487 = vpack.c.b16 %v2452, %v2451
      %v2488 = vpack.c.b16 %v2454, %v2453
      %v2489 = vpack.c.b16 %v2456, %v2455
      %v2490 = vpack.c.b16 %v2458, %v2457
      %2523 = vmatprep.subr.bf16.mxu0 0
      %2524 = vmatpush1.bf16.msra.mxu0 %v2459
      %2525 = vmatprep.subr.bf16.mxu0 0
      %2526 = vmatpush1.bf16.msra.mxu0 %v2460
      %2527 = vmatprep.subr.bf16.mxu0 0
      %2528 = vmatpush1.bf16.msra.mxu0 %v2461
      %2529 = vmatprep.subr.bf16.mxu0 0
      %2530 = vmatpush1.bf16.msra.mxu0 %v2462
      %2531 = vmatprep.subr.bf16.mxu0 0
      %2532 = vmatpush1.bf16.msra.mxu0 %v2463
      %2533 = vmatprep.subr.bf16.mxu0 0
      %2534 = vmatpush1.bf16.msra.mxu0 %v2464
      %2535 = vmatprep.subr.bf16.mxu0 0
      %2536 = vmatpush1.bf16.msra.mxu0 %v2465
      %2537 = vmatprep.subr.bf16.mxu0 0
      %2538 = vmatpush1.bf16.msra.mxu0 %v2466
      %2539 = vmatprep.subr.bf16.mxu0 0
      %2540 = vmatpush1.bf16.msra.mxu0 %v2467
      %2541 = vmatprep.subr.bf16.mxu0 0
      %2542 = vmatpush1.bf16.msra.mxu0 %v2468
      %2543 = vmatprep.subr.bf16.mxu0 0
      %2544 = vmatpush1.bf16.msra.mxu0 %v2469
      %2545 = vmatprep.subr.bf16.mxu0 0
      %2546 = vmatpush1.bf16.msra.mxu0 %v2470
      %2547 = vmatprep.subr.bf16.mxu0 0
      %2548 = vmatpush1.bf16.msra.mxu0 %v2471
      %2549 = vmatprep.subr.bf16.mxu0 0
      %2550 = vmatpush1.bf16.msra.mxu0 %v2472
      %2551 = vmatprep.subr.bf16.mxu0 0
      %2552 = vmatpush1.bf16.msra.mxu0 %v2473
      %2553 = vmatprep.subr.bf16.mxu0 0
      %2554 = vmatpush1.bf16.msra.mxu0 %v2474
      %2555 = vmatprep.mubr.bf16.mxu0 %v2328
      %2556 = vmatmul.mubr.bf16.gmra.mrb[0].mxu0 %v2327
      %v2557 = vpop.f32.mrb[0].mxu0
      %v2558 = vadd.f32 0.0, %v2557
      %v2559 = vpop.f32.mrb[0].mxu0
      %v2560 = vpop.f32.mrb[0].mxu0
      %v2561 = vadd.f32 0.0, %v2560
      %v2562 = vpop.f32.mrb[0].mxu0
      %2563 = vdwg.mxu0
      %2564 = vmatprep.subr.bf16.mxu0 0
      %2565 = vmatpush1.bf16.msra.mxu0 %v2475
      %2566 = vmatprep.subr.bf16.mxu0 0
      %2567 = vmatpush1.bf16.msra.mxu0 %v2476
      %2568 = vmatprep.subr.bf16.mxu0 0
      %2569 = vmatpush1.bf16.msra.mxu0 %v2477
      %2570 = vmatprep.subr.bf16.mxu0 0
      %2571 = vmatpush1.bf16.msra.mxu0 %v2478
      %2572 = vmatprep.subr.bf16.mxu0 0
      %2573 = vmatpush1.bf16.msra.mxu0 %v2479
      %2574 = vmatprep.subr.bf16.mxu0 0
      %2575 = vmatpush1.bf16.msra.mxu0 %v2480
      %2576 = vmatprep.subr.bf16.mxu0 0
      %2577 = vmatpush1.bf16.msra.mxu0 %v2481
      %2578 = vmatprep.subr.bf16.mxu0 0
      %2579 = vmatpush1.bf16.msra.mxu0 %v2482
      %2580 = vmatprep.subr.bf16.mxu0 0
      %2581 = vmatpush1.bf16.msra.mxu0 %v2483
      %2582 = vmatprep.subr.bf16.mxu0 0
      %2583 = vmatpush1.bf16.msra.mxu0 %v2484
      %2584 = vmatprep.subr.bf16.mxu0 0
      %2585 = vmatpush1.bf16.msra.mxu0 %v2485
      %2586 = vmatprep.subr.bf16.mxu0 0
      %2587 = vmatpush1.bf16.msra.mxu0 %v2486
      %2588 = vmatprep.subr.bf16.mxu0 0
      %2589 = vmatpush1.bf16.msra.mxu0 %v2487
      %2590 = vmatprep.subr.bf16.mxu0 0
      %2591 = vmatpush1.bf16.msra.mxu0 %v2488
      %2592 = vmatprep.subr.bf16.mxu0 0
      %2593 = vmatpush1.bf16.msra.mxu0 %v2489
      %2594 = vmatprep.subr.bf16.mxu0 0
      %2595 = vmatpush1.bf16.msra.mxu0 %v2490
      %2596 = vmatprep.mubr.bf16.mxu0 %v2330
      %2597 = vmatmul.mubr.bf16.gmra.mrb[0].mxu0 %v2329
      %v2598 = vpop.f32.mrb[0].mxu0
      %v2599 = vadd.f32 %v2558, %v2598
      %v2600 = vpop.f32.mrb[0].mxu0
      %v2601 = vpop.f32.mrb[0].mxu0
      %v2602 = vadd.f32 %v2561, %v2601
      %v2603 = vpop.f32.mrb[0].mxu0
      %2604 = vdwg.mxu0
      %v2605 = vadd.f32 %v2075, %v2599
      %v2606 = vadd.f32 %v2078, %v2602
      %v2607 = vld [vmem:[%s389 + $0x30] sm:$0xff]
      %v2608 = vld [vmem:[%s389 + $0x38] sm:$0xff]
      %v2609 = vld [vmem:[%s389 + $0x70] sm:$0xff]
      %v2610 = vld [vmem:[%s389 + $0x78] sm:$0xff]
      %v2611 = vld [vmem:[%s389 + $0xb0] sm:$0xff]
      %v2612 = vld [vmem:[%s389 + $0xb8] sm:$0xff]
      %v2613 = vld [vmem:[%s389 + $0xf0] sm:$0xff]
      %v2614 = vld [vmem:[%s389 + $0xf8] sm:$0xff]
      %v2615 = vld [vmem:[%s389 + $0x130] sm:$0x11]
      %v2616 = vld [vmem:[%s389 + $0x138] sm:$0x11]
      %v2617 = vld [vmem:[%s394 + $0x300] sm:$0xf]
      %v2618 = vld [vmem:[%s394 + $0x304] sm:$0xf]
      %v2619 = vld [vmem:[%s394 + $0x308] sm:$0xf]
      %v2620 = vld [vmem:[%s394 + $0x30c] sm:$0xf]
      %v2621 = vld [vmem:[%s394 + $0x310] sm:$0xf]
      %v2622 = vld [vmem:[%s394 + $0x314] sm:$0xf]
      %v2623 = vld [vmem:[%s394 + $0x318] sm:$0xf]
      %v2624 = vld [vmem:[%s394 + $0x31c] sm:$0xf]
      %v2625 = vld [vmem:[%s394 + $0x320] sm:$0xf]
      %v2626 = vld [vmem:[%s394 + $0x324] sm:$0xf]
      %v2627 = vld [vmem:[%s394 + $0x328] sm:$0xf]
      %v2628 = vld [vmem:[%s394 + $0x32c] sm:$0xf]
      %v2629 = vld [vmem:[%s394 + $0x330] sm:$0xf]
      %v2630 = vld [vmem:[%s394 + $0x334] sm:$0xf]
      %v2631 = vld [vmem:[%s394 + $0x338] sm:$0xf]
      %v2632 = vld [vmem:[%s394 + $0x33c] sm:$0xf]
      %v2633 = vld [vmem:[%s394 + $0x340] sm:$0xf]
      %v2634 = vld [vmem:[%s394 + $0x344] sm:$0xf]
      %v2635 = vld [vmem:[%s394 + $0x348] sm:$0xf]
      %v2636 = vld [vmem:[%s394 + $0x34c] sm:$0xf]
      %v2637 = vld [vmem:[%s394 + $0x350] sm:$0xf]
      %v2638 = vld [vmem:[%s394 + $0x354] sm:$0xf]
      %v2639 = vld [vmem:[%s394 + $0x358] sm:$0xf]
      %v2640 = vld [vmem:[%s394 + $0x35c] sm:$0xf]
      %v2641 = vld [vmem:[%s394 + $0x360] sm:$0xf]
      %v2642 = vld [vmem:[%s394 + $0x364] sm:$0xf]
      %v2643 = vld [vmem:[%s394 + $0x368] sm:$0xf]
      %v2644 = vld [vmem:[%s394 + $0x36c] sm:$0xf]
      %v2645 = vld [vmem:[%s394 + $0x370] sm:$0xf]
      %v2646 = vld [vmem:[%s394 + $0x374] sm:$0xf]
      %v2647 = vld [vmem:[%s394 + $0x378] sm:$0xf]
      %v2648 = vld [vmem:[%s394 + $0x37c] sm:$0xf]
      %v2649 = vld [vmem:[%s394 + $0x380] sm:$0xf]
      %v2650 = vld [vmem:[%s394 + $0x384] sm:$0xf]
      %v2651 = vld [vmem:[%s394 + $0x388] sm:$0xf]
      %v2652 = vld [vmem:[%s394 + $0x38c] sm:$0xf]
      %v2653 = vld [vmem:[%s394 + $0x390] sm:$0xf]
      %v2654 = vld [vmem:[%s394 + $0x394] sm:$0xf]
      %v2655 = vld [vmem:[%s394 + $0x398] sm:$0xf]
      %v2656 = vld [vmem:[%s394 + $0x39c] sm:$0xf]
      %v2657 = vld [vmem:[%s394 + $0x3a0] sm:$0xf]
      %v2658 = vld [vmem:[%s394 + $0x3a4] sm:$0xf]
      %v2659 = vld [vmem:[%s394 + $0x3a8] sm:$0xf]
      %v2660 = vld [vmem:[%s394 + $0x3ac] sm:$0xf]
      %v2661 = vld [vmem:[%s394 + $0x3b0] sm:$0xf]
      %v2662 = vld [vmem:[%s394 + $0x3b4] sm:$0xf]
      %v2663 = vld [vmem:[%s394 + $0x3b8] sm:$0xf]
      %v2664 = vld [vmem:[%s394 + $0x3bc] sm:$0xf]
      %v2665 = vld [vmem:[%s394 + $0x3c0] sm:$0xf]
      %v2666 = vld [vmem:[%s394 + $0x3c4] sm:$0xf]
      %v2667 = vld [vmem:[%s394 + $0x3c8] sm:$0xf]
      %v2668 = vld [vmem:[%s394 + $0x3cc] sm:$0xf]
      %v2669 = vld [vmem:[%s394 + $0x3d0] sm:$0xf]
      %v2670 = vld [vmem:[%s394 + $0x3d4] sm:$0xf]
      %v2671 = vld [vmem:[%s394 + $0x3d8] sm:$0xf]
      %v2672 = vld [vmem:[%s394 + $0x3dc] sm:$0xf]
      %v2673 = vld [vmem:[%s394 + $0x3e0] sm:$0xf]
      %v2674 = vld [vmem:[%s394 + $0x3e4] sm:$0xf]
      %v2675 = vld [vmem:[%s394 + $0x3e8] sm:$0xf]
      %v2676 = vld [vmem:[%s394 + $0x3ec] sm:$0xf]
      %v2677 = vld [vmem:[%s394 + $0x3f0] sm:$0xf]
      %v2678 = vld [vmem:[%s394 + $0x3f4] sm:$0xf]
      %v2679 = vld [vmem:[%s394 + $0x3f8] sm:$0xf]
      %v2680 = vld [vmem:[%s394 + $0x3fc] sm:$0xf]
      %v2689 = vunpack.c.l.b16 %v2607
      %v2690 = vunpack.c.h.b16 %v2607
      %v2691 = vunpack.c.l.b16 %v2608
      %v2692 = vunpack.c.h.b16 %v2608
      %v2693 = vunpack.c.l.b16 %v2609
      %v2694 = vunpack.c.h.b16 %v2609
      %v2695 = vunpack.c.l.b16 %v2610
      %v2696 = vunpack.c.h.b16 %v2610
      %v2697 = vunpack.c.l.b16 %v2611
      %v2698 = vunpack.c.h.b16 %v2611
      %v2699 = vunpack.c.l.b16 %v2612
      %v2700 = vunpack.c.h.b16 %v2612
      %v2701 = vunpack.c.l.b16 %v2613
      %v2702 = vunpack.c.h.b16 %v2613
      %v2703 = vunpack.c.l.b16 %v2614
      %v2704 = vunpack.c.h.b16 %v2614
      %v2705 = vpack.c.b16 %v2693, %v2689
      %v2706 = vpack.c.b16 %v2694, %v2690
      %v2707 = vpack.c.b16 %v2695, %v2691
      %v2708 = vpack.c.b16 %v2696, %v2692
      %v2709 = vpack.c.b16 %v2701, %v2697
      %v2710 = vpack.c.b16 %v2702, %v2698
      %v2711 = vpack.c.b16 %v2703, %v2699
      %v2712 = vpack.c.b16 %v2704, %v2700
      %2721 = vmatprep.subr.bf16.mxu0 %v2706
      %2722 = vmatpush1.bf16.msra.mxu0 %v2705
      %2723 = vmatprep.subr.bf16.mxu0 %v2710
      %2724 = vmatpush1.bf16.msra.mxu0 %v2709
      %2725 = vmatprep.subr.bf16.mxu0 0
      %2726 = vmatpush1.bf16.msra.mxu0 0
      %2727 = vmatprep.subr.bf16.mxu0 0
      %2728 = vmatpush1.bf16.msra.mxu0 0
      %2729 = vmatprep.subr.bf16.mxu0 0
      %2730 = vmatpush1.bf16.msra.mxu0 0
      %2731 = vmatprep.subr.bf16.mxu0 0
      %2732 = vmatpush1.bf16.msra.mxu0 0
      %2733 = vmatprep.subr.bf16.mxu0 0
      %2734 = vmatpush1.bf16.msra.mxu0 0
      %2735 = vmatprep.subr.bf16.mxu0 0
      %2736 = vmatpush1.bf16.msra.mxu0 0
      %2737 = vmatprep.subr.bf16.mxu0 0
      %2738 = vmatpush1.bf16.msra.mxu0 0
      %2739 = vmatprep.subr.bf16.mxu0 0
      %2740 = vmatpush1.bf16.msra.mxu0 0
      %2741 = vmatprep.subr.bf16.mxu0 0
      %2742 = vmatpush1.bf16.msra.mxu0 0
      %2743 = vmatprep.subr.bf16.mxu0 0
      %2744 = vmatpush1.bf16.msra.mxu0 0
      %2745 = vmatprep.subr.bf16.mxu0 0
      %2746 = vmatpush1.bf16.msra.mxu0 0
      %2747 = vmatprep.subr.bf16.mxu0 0
      %2748 = vmatpush1.bf16.msra.mxu0 0
      %2749 = vmatprep.subr.bf16.mxu0 0
      %2750 = vmatpush1.bf16.msra.mxu0 0
      %2751 = vmatprep.subr.bf16.mxu0 0
      %2752 = vmatpush1.bf16.msra.mxu0 0
      %2753 = vmatprep.mubr.bf16.mxu0 0
      %2754 = vmatmul.mubr.bf16.gmra.mrb[0].mxu0 %v1145
      %v2755 = vpop.f32.mrb[0].mxu0
      %v2756 = vadd.f32 0.0, %v2755
      %v2757 = vpop.f32.mrb[0].mxu0
      %v2758 = vadd.f32 0.0, %v2757
      %v2759 = vpop.f32.mrb[0].mxu0
      %v2760 = vadd.f32 0.0, %v2759
      %v2761 = vpop.f32.mrb[0].mxu0
      %v2762 = vadd.f32 0.0, %v2761
      %2763 = vdwg.mxu0
      %2764 = vmatprep.subr.bf16.mxu0 %v2708
      %2765 = vmatpush1.bf16.msra.mxu0 %v2707
      %2766 = vmatprep.subr.bf16.mxu0 %v2712
      %2767 = vmatpush1.bf16.msra.mxu0 %v2711
      %2768 = vmatprep.subr.bf16.mxu0 0
      %2769 = vmatpush1.bf16.msra.mxu0 0
      %2770 = vmatprep.subr.bf16.mxu0 0
      %2771 = vmatpush1.bf16.msra.mxu0 0
      %2772 = vmatprep.subr.bf16.mxu0 0
      %2773 = vmatpush1.bf16.msra.mxu0 0
      %2774 = vmatprep.subr.bf16.mxu0 0
      %2775 = vmatpush1.bf16.msra.mxu0 0
      %2776 = vmatprep.subr.bf16.mxu0 0
      %2777 = vmatpush1.bf16.msra.mxu0 0
      %2778 = vmatprep.subr.bf16.mxu0 0
      %2779 = vmatpush1.bf16.msra.mxu0 0
      %2780 = vmatprep.subr.bf16.mxu0 0
      %2781 = vmatpush1.bf16.msra.mxu0 0
      %2782 = vmatprep.subr.bf16.mxu0 0
      %2783 = vmatpush1.bf16.msra.mxu0 0
      %2784 = vmatprep.subr.bf16.mxu0 0
      %2785 = vmatpush1.bf16.msra.mxu0 0
      %2786 = vmatprep.subr.bf16.mxu0 0
      %2787 = vmatpush1.bf16.msra.mxu0 0
      %2788 = vmatprep.subr.bf16.mxu0 0
      %2789 = vmatpush1.bf16.msra.mxu0 0
      %2790 = vmatprep.subr.bf16.mxu0 0
      %2791 = vmatpush1.bf16.msra.mxu0 0
      %2792 = vmatprep.subr.bf16.mxu0 0
      %2793 = vmatpush1.bf16.msra.mxu0 0
      %2794 = vmatprep.subr.bf16.mxu0 0
      %2795 = vmatpush1.bf16.msra.mxu0 0
      %2796 = vmatprep.mubr.bf16.mxu0 0
      %2797 = vmatmul.mubr.bf16.gmra.mrb[0].mxu0 %v1145
      %v2798 = vpop.f32.mrb[0].mxu0
      %v2799 = vadd.f32 0.0, %v2798
      %v2800 = vpop.f32.mrb[0].mxu0
      %v2801 = vadd.f32 0.0, %v2800
      %v2802 = vpop.f32.mrb[0].mxu0
      %v2803 = vadd.f32 0.0, %v2802
      %v2804 = vpop.f32.mrb[0].mxu0
      %v2805 = vadd.f32 0.0, %v2804
      %2806 = vdwg.mxu0
      %v2807 = vpack.c.bf16 %v2760, %v2756
      %v2808 = vpack.c.bf16 %v2762, %v2758
      %v2809 = vpack.c.bf16 %v2803, %v2799
      %v2810 = vpack.c.bf16 %v2805, %v2801
      %v2813 = vunpack.c.l.b16 %v2615
      %v2814 = vunpack.c.h.b16 %v2615
      %v2815 = vunpack.c.l.b16 %v2616
      %v2816 = vunpack.c.h.b16 %v2616
      %v2817 = vpack.c.b16 %v2813, %v2813
      %v2818 = vpack.c.b16 %v2814, %v2814
      %v2819 = vpack.c.b16 %v2815, %v2815
      %v2820 = vpack.c.b16 %v2816, %v2816
      %v2822 = vpack.i.b16 %v2817, %v2817
      %v2824 = vlaneseq
      %v2825 = vshrl.u32 %v2824, 7
      %v2826 = vsub.s32 0, %v2825
      %v2827 = vrot.slane %v2822, %v2826
      %v2829 = vpack.i.b16 %v2818, %v2818
      %v2831 = vlaneseq
      %v2832 = vshrl.u32 %v2831, 7
      %v2833 = vsub.s32 0, %v2832
      %v2834 = vrot.slane %v2829, %v2833
      %v2836 = vpack.i.b16 %v2819, %v2819
      %v2838 = vlaneseq
      %v2839 = vshrl.u32 %v2838, 7
      %v2840 = vsub.s32 0, %v2839
      %v2841 = vrot.slane %v2836, %v2840
      %v2843 = vpack.i.b16 %v2820, %v2820
      %v2845 = vlaneseq
      %v2846 = vshrl.u32 %v2845, 7
      %v2847 = vsub.s32 0, %v2846
      %v2848 = vrot.slane %v2843, %v2847
      %v2849 = vadd.bf16 %v2807, %v2827
      %v2850 = vadd.bf16 %v2808, %v2834
      %v2851 = vadd.bf16 %v2809, %v2841
      %v2852 = vadd.bf16 %v2810, %v2848
      %v2853 = vmax.bf16 %v2849, 0
      %v2854 = vmax.bf16 %v2850, 0
      %v2855 = vmax.bf16 %v2851, 0
      %v2856 = vmax.bf16 %v2852, 0
      %v2921 = vunpack.c.l.b16 %v2617
      %v2922 = vunpack.c.l.b16 %v2618
      %v2923 = vunpack.c.l.b16 %v2619
      %v2924 = vunpack.c.l.b16 %v2620
      %v2925 = vunpack.c.l.b16 %v2621
      %v2926 = vunpack.c.l.b16 %v2622
      %v2927 = vunpack.c.l.b16 %v2623
      %v2928 = vunpack.c.l.b16 %v2624
      %v2929 = vunpack.c.l.b16 %v2625
      %v2930 = vunpack.c.l.b16 %v2626
      %v2931 = vunpack.c.l.b16 %v2627
      %v2932 = vunpack.c.l.b16 %v2628
      %v2933 = vunpack.c.l.b16 %v2629
      %v2934 = vunpack.c.l.b16 %v2630
      %v2935 = vunpack.c.l.b16 %v2631
      %v2936 = vunpack.c.l.b16 %v2632
      %v2937 = vunpack.c.l.b16 %v2633
      %v2938 = vunpack.c.l.b16 %v2634
      %v2939 = vunpack.c.l.b16 %v2635
      %v2940 = vunpack.c.l.b16 %v2636
      %v2941 = vunpack.c.l.b16 %v2637
      %v2942 = vunpack.c.l.b16 %v2638
      %v2943 = vunpack.c.l.b16 %v2639
      %v2944 = vunpack.c.l.b16 %v2640
      %v2945 = vunpack.c.l.b16 %v2641
      %v2946 = vunpack.c.l.b16 %v2642
      %v2947 = vunpack.c.l.b16 %v2643
      %v2948 = vunpack.c.l.b16 %v2644
      %v2949 = vunpack.c.l.b16 %v2645
      %v2950 = vunpack.c.l.b16 %v2646
      %v2951 = vunpack.c.l.b16 %v2647
      %v2952 = vunpack.c.l.b16 %v2648
      %v2953 = vunpack.c.l.b16 %v2649
      %v2954 = vunpack.c.l.b16 %v2650
      %v2955 = vunpack.c.l.b16 %v2651
      %v2956 = vunpack.c.l.b16 %v2652
      %v2957 = vunpack.c.l.b16 %v2653
      %v2958 = vunpack.c.l.b16 %v2654
      %v2959 = vunpack.c.l.b16 %v2655
      %v2960 = vunpack.c.l.b16 %v2656
      %v2961 = vunpack.c.l.b16 %v2657
      %v2962 = vunpack.c.l.b16 %v2658
      %v2963 = vunpack.c.l.b16 %v2659
      %v2964 = vunpack.c.l.b16 %v2660
      %v2965 = vunpack.c.l.b16 %v2661
      %v2966 = vunpack.c.l.b16 %v2662
      %v2967 = vunpack.c.l.b16 %v2663
      %v2968 = vunpack.c.l.b16 %v2664
      %v2969 = vunpack.c.l.b16 %v2665
      %v2970 = vunpack.c.l.b16 %v2666
      %v2971 = vunpack.c.l.b16 %v2667
      %v2972 = vunpack.c.l.b16 %v2668
      %v2973 = vunpack.c.l.b16 %v2669
      %v2974 = vunpack.c.l.b16 %v2670
      %v2975 = vunpack.c.l.b16 %v2671
      %v2976 = vunpack.c.l.b16 %v2672
      %v2977 = vunpack.c.l.b16 %v2673
      %v2978 = vunpack.c.l.b16 %v2674
      %v2979 = vunpack.c.l.b16 %v2675
      %v2980 = vunpack.c.l.b16 %v2676
      %v2981 = vunpack.c.l.b16 %v2677
      %v2982 = vunpack.c.l.b16 %v2678
      %v2983 = vunpack.c.l.b16 %v2679
      %v2984 = vunpack.c.l.b16 %v2680
      %v2985 = vpack.c.b16 %v2922, %v2921
      %v2986 = vpack.c.b16 %v2924, %v2923
      %v2987 = vpack.c.b16 %v2926, %v2925
      %v2988 = vpack.c.b16 %v2928, %v2927
      %v2989 = vpack.c.b16 %v2930, %v2929
      %v2990 = vpack.c.b16 %v2932, %v2931
      %v2991 = vpack.c.b16 %v2934, %v2933
      %v2992 = vpack.c.b16 %v2936, %v2935
      %v2993 = vpack.c.b16 %v2938, %v2937
      %v2994 = vpack.c.b16 %v2940, %v2939
      %v2995 = vpack.c.b16 %v2942, %v2941
      %v2996 = vpack.c.b16 %v2944, %v2943
      %v2997 = vpack.c.b16 %v2946, %v2945
      %v2998 = vpack.c.b16 %v2948, %v2947
      %v2999 = vpack.c.b16 %v2950, %v2949
      %v3000 = vpack.c.b16 %v2952, %v2951
      %v3001 = vpack.c.b16 %v2954, %v2953
      %v3002 = vpack.c.b16 %v2956, %v2955
      %v3003 = vpack.c.b16 %v2958, %v2957
      %v3004 = vpack.c.b16 %v2960, %v2959
      %v3005 = vpack.c.b16 %v2962, %v2961
      %v3006 = vpack.c.b16 %v2964, %v2963
      %v3007 = vpack.c.b16 %v2966, %v2965
      %v3008 = vpack.c.b16 %v2968, %v2967
      %v3009 = vpack.c.b16 %v2970, %v2969
      %v3010 = vpack.c.b16 %v2972, %v2971
      %v3011 = vpack.c.b16 %v2974, %v2973
      %v3012 = vpack.c.b16 %v2976, %v2975
      %v3013 = vpack.c.b16 %v2978, %v2977
      %v3014 = vpack.c.b16 %v2980, %v2979
      %v3015 = vpack.c.b16 %v2982, %v2981
      %v3016 = vpack.c.b16 %v2984, %v2983
      %3049 = vmatprep.subr.bf16.mxu0 0
      %3050 = vmatpush1.bf16.msra.mxu0 %v2985
      %3051 = vmatprep.subr.bf16.mxu0 0
      %3052 = vmatpush1.bf16.msra.mxu0 %v2986
      %3053 = vmatprep.subr.bf16.mxu0 0
      %3054 = vmatpush1.bf16.msra.mxu0 %v2987
      %3055 = vmatprep.subr.bf16.mxu0 0
      %3056 = vmatpush1.bf16.msra.mxu0 %v2988
      %3057 = vmatprep.subr.bf16.mxu0 0
      %3058 = vmatpush1.bf16.msra.mxu0 %v2989
      %3059 = vmatprep.subr.bf16.mxu0 0
      %3060 = vmatpush1.bf16.msra.mxu0 %v2990
      %3061 = vmatprep.subr.bf16.mxu0 0
      %3062 = vmatpush1.bf16.msra.mxu0 %v2991
      %3063 = vmatprep.subr.bf16.mxu0 0
      %3064 = vmatpush1.bf16.msra.mxu0 %v2992
      %3065 = vmatprep.subr.bf16.mxu0 0
      %3066 = vmatpush1.bf16.msra.mxu0 %v2993
      %3067 = vmatprep.subr.bf16.mxu0 0
      %3068 = vmatpush1.bf16.msra.mxu0 %v2994
      %3069 = vmatprep.subr.bf16.mxu0 0
      %3070 = vmatpush1.bf16.msra.mxu0 %v2995
      %3071 = vmatprep.subr.bf16.mxu0 0
      %3072 = vmatpush1.bf16.msra.mxu0 %v2996
      %3073 = vmatprep.subr.bf16.mxu0 0
      %3074 = vmatpush1.bf16.msra.mxu0 %v2997
      %3075 = vmatprep.subr.bf16.mxu0 0
      %3076 = vmatpush1.bf16.msra.mxu0 %v2998
      %3077 = vmatprep.subr.bf16.mxu0 0
      %3078 = vmatpush1.bf16.msra.mxu0 %v2999
      %3079 = vmatprep.subr.bf16.mxu0 0
      %3080 = vmatpush1.bf16.msra.mxu0 %v3000
      %3081 = vmatprep.mubr.bf16.mxu0 %v2854
      %3082 = vmatmul.mubr.bf16.gmra.mrb[0].mxu0 %v2853
      %v3083 = vpop.f32.mrb[0].mxu0
      %v3084 = vadd.f32 0.0, %v3083
      %v3085 = vpop.f32.mrb[0].mxu0
      %v3086 = vpop.f32.mrb[0].mxu0
      %v3087 = vadd.f32 0.0, %v3086
      %v3088 = vpop.f32.mrb[0].mxu0
      %3089 = vdwg.mxu0
      %3090 = vmatprep.subr.bf16.mxu0 0
      %3091 = vmatpush1.bf16.msra.mxu0 %v3001
      %3092 = vmatprep.subr.bf16.mxu0 0
      %3093 = vmatpush1.bf16.msra.mxu0 %v3002
      %3094 = vmatprep.subr.bf16.mxu0 0
      %3095 = vmatpush1.bf16.msra.mxu0 %v3003
      %3096 = vmatprep.subr.bf16.mxu0 0
      %3097 = vmatpush1.bf16.msra.mxu0 %v3004
      %3098 = vmatprep.subr.bf16.mxu0 0
      %3099 = vmatpush1.bf16.msra.mxu0 %v3005
      %3100 = vmatprep.subr.bf16.mxu0 0
      %3101 = vmatpush1.bf16.msra.mxu0 %v3006
      %3102 = vmatprep.subr.bf16.mxu0 0
      %3103 = vmatpush1.bf16.msra.mxu0 %v3007
      %3104 = vmatprep.subr.bf16.mxu0 0
      %3105 = vmatpush1.bf16.msra.mxu0 %v3008
      %3106 = vmatprep.subr.bf16.mxu0 0
      %3107 = vmatpush1.bf16.msra.mxu0 %v3009
      %3108 = vmatprep.subr.bf16.mxu0 0
      %3109 = vmatpush1.bf16.msra.mxu0 %v3010
      %3110 = vmatprep.subr.bf16.mxu0 0
      %3111 = vmatpush1.bf16.msra.mxu0 %v3011
      %3112 = vmatprep.subr.bf16.mxu0 0
      %3113 = vmatpush1.bf16.msra.mxu0 %v3012
      %3114 = vmatprep.subr.bf16.mxu0 0
      %3115 = vmatpush1.bf16.msra.mxu0 %v3013
      %3116 = vmatprep.subr.bf16.mxu0 0
      %3117 = vmatpush1.bf16.msra.mxu0 %v3014
      %3118 = vmatprep.subr.bf16.mxu0 0
      %3119 = vmatpush1.bf16.msra.mxu0 %v3015
      %3120 = vmatprep.subr.bf16.mxu0 0
      %3121 = vmatpush1.bf16.msra.mxu0 %v3016
      %3122 = vmatprep.mubr.bf16.mxu0 %v2856
      %3123 = vmatmul.mubr.bf16.gmra.mrb[0].mxu0 %v2855
      %v3124 = vpop.f32.mrb[0].mxu0
      %v3125 = vadd.f32 %v3084, %v3124
      %v3126 = vpop.f32.mrb[0].mxu0
      %v3127 = vpop.f32.mrb[0].mxu0
      %v3128 = vadd.f32 %v3087, %v3127
      %v3129 = vpop.f32.mrb[0].mxu0
      %3130 = vdwg.mxu0
      %v3131 = vadd.f32 %v2605, %v3125
      %v3132 = vadd.f32 %v2606, %v3128
      %v3133 = vlaneseq
      %v3134 = vshrl.u32 %v3133, 7
      %v3135 = vsub.s32 4, %v3134
      %v3136 = vrot.slane %v423, %v3135
      %v3137 = vadd.f32 %v3131, %v3136
      %v3138 = vadd.f32 %v3132, %v3136
      %v3139 = vadd.f32 %v1027, %v3137
      %v3140 = vadd.f32 %v1028, %v3138
      %v3141 = vsel %vm432, %v3139, 0.0
      %3142 = vadd.xlane.f32.xlu0 %v3141
      %v3143 = vpop.xlane.xlu0 %3142
      %v3144 = vsel %vm432, %v3140, 0.0
      %3145 = vadd.xlane.f32.xlu0 %v3144
      %v3146 = vpop.xlane.xlu0 %3145
      %v3147 = vmul.f32 %v3143, %v996
      %v3148 = vmul.f32 %v3146, %v996
      %v3149 = vsub.f32 %v3139, %v3147
      %v3150 = vsub.f32 %v3140, %v3148
      %v3151 = vmul.f32 %v3149, %v3149
      %v3152 = vmul.f32 %v3150, %v3150
      %v3153 = vsel %vm432, %v3151, 0.0
      %3154 = vadd.xlane.f32.xlu0 %v3153
      %v3155 = vpop.xlane.xlu0 %3154
      %v3156 = vsel %vm432, %v3152, 0.0
      %3157 = vadd.xlane.f32.xlu0 %v3156
      %v3158 = vpop.xlane.xlu0 %3157
      %v3159 = vmul.f32 %v3155, %v996
      %v3160 = vmul.f32 %v3158, %v996
      %v3161 = vadd.f32 %v3159, 1e-05
      %v3162 = vadd.f32 %v3160, 1e-05
      %v3163 = vrsqrt.pop %v3161
      %v3164 = vrsqrt.pop %v3162
      %v3165 = vmul.f32 %v3149, %v3163
      %v3166 = vmul.f32 %v3150, %v3164
      %v3167 = vlaneseq
      %v3168 = vshrl.u32 %v3167, 7
      %v3169 = vsub.s32 5, %v3168
      %v3170 = vrot.slane %v423, %v3169
      %v3171 = vmul.f32 %v3165, %v3170
      %v3172 = vmul.f32 %v3166, %v3170
      %v3173 = vlaneseq
      %v3174 = vshrl.u32 %v3173, 7
      %v3175 = vsub.s32 6, %v3174
      %v3176 = vrot.slane %v423, %v3175
      %v3177 = vadd.f32 %v3171, %v3176
      %v3178 = vadd.f32 %v3172, %v3176
      %3179 = vst.msk [vmem:[#allocation2] sm:$0xff] %vm432, %v3177
      %3180 = vst.msk [vmem:[#allocation2 + $0x8] sm:$0xff] %vm432, %v3178
      %p3181 = scmp.eq.s32.totalorder %s20, 1
      // Predicated region
      $region61: #{transformer_model_forward.1} parent=55 // pred_check
        %p3182 = pneg %p3181
      $region62: #{transformer_model_forward.1} parent=55 // pred_check_branch
        %3184 = sbr.rel (%p3182) target = $region64
      $region63: #{transformer_model_forward.1} parent=55 // pred_region
        %v3185 = vld [vmem:[%s8] sm:$0xff]
        %v3186 = vld [vmem:[%s8 + $0x8] sm:$0xff]
        %v3187 = vld [vmem:[%s8 + $0x10] sm:$0xff]
        %v3188 = vld [vmem:[%s8 + $0x18] sm:$0xff]
        %v3189 = vld [vmem:[%s8 + $0x20] sm:$0xff]
        %v3190 = vlaneseq
        %v3191 = vshrl.u32 %v3190, 7
        %v3192 = vsub.s32 0, %v3191
        %v3193 = vrot.slane %v3189, %v3192
        %v3195 = vsel %vm432, %v3177, 0
        %v3198 = vsel %vm432, %v3178, 0
        %3200 = vmatprep.subr.mxu0 0.0
        %3201 = vmatpush1.msra.mxu0 %v3185
        %3202 = vmatprep.subr.mxu0 0.0
        %3203 = vmatpush1.msra.mxu0 %v3186
        %3204 = vmatprep.subr.mxu0 0.0
        %3205 = vmatpush1.msra.mxu0 %v3187
        %3206 = vmatprep.subr.mxu0 0.0
        %3207 = vmatpush1.msra.mxu0 %v3188
        %3208 = vmatprep.subr.mxu0 0.0
        %3209 = vmatpush1.msra.mxu0 0.0
        %3210 = vmatprep.subr.mxu0 0.0
        %3211 = vmatpush1.msra.mxu0 0.0
        %3212 = vmatprep.subr.mxu0 0.0
        %3213 = vmatpush1.msra.mxu0 0.0
        %3214 = vmatprep.subr.mxu0 0.0
        %3215 = vmatpush1.msra.mxu0 0.0
        %3216 = vmatprep.subr.mxu0 0.0
        %3217 = vmatpush1.msra.mxu0 0.0
        %3218 = vmatprep.subr.mxu0 0.0
        %3219 = vmatpush1.msra.mxu0 0.0
        %3220 = vmatprep.subr.mxu0 0.0
        %3221 = vmatpush1.msra.mxu0 0.0
        %3222 = vmatprep.subr.mxu0 0.0
        %3223 = vmatpush1.msra.mxu0 0.0
        %3224 = vmatprep.subr.mxu0 0.0
        %3225 = vmatpush1.msra.mxu0 0.0
        %3226 = vmatprep.subr.mxu0 0.0
        %3227 = vmatpush1.msra.mxu0 0.0
        %3228 = vmatprep.subr.mxu0 0.0
        %3229 = vmatpush1.msra.mxu0 0.0
        %3230 = vmatprep.subr.mxu0 0.0
        %3231 = vmatpush1.msra.mxu0 0.0
        %3232 = vmatprep.subr.mxu0 0.0
        %3233 = vmatpush1.msra.mxu0 0.0
        %3234 = vmatprep.subr.mxu0 0.0
        %3235 = vmatpush1.msra.mxu0 0.0
        %3236 = vmatprep.subr.mxu0 0.0
        %3237 = vmatpush1.msra.mxu0 0.0
        %3238 = vmatprep.subr.mxu0 0.0
        %3239 = vmatpush1.msra.mxu0 0.0
        %3240 = vmatprep.subr.mxu0 0.0
        %3241 = vmatpush1.msra.mxu0 0.0
        %3242 = vmatprep.subr.mxu0 0.0
        %3243 = vmatpush1.msra.mxu0 0.0
        %3244 = vmatprep.subr.mxu0 0.0
        %3245 = vmatpush1.msra.mxu0 0.0
        %3246 = vmatprep.subr.mxu0 0.0
        %3247 = vmatpush1.msra.mxu0 0.0
        %3248 = vmatprep.subr.mxu0 0.0
        %3249 = vmatpush1.msra.mxu0 0.0
        %3250 = vmatprep.subr.mxu0 0.0
        %3251 = vmatpush1.msra.mxu0 0.0
        %3252 = vmatprep.subr.mxu0 0.0
        %3253 = vmatpush1.msra.mxu0 0.0
        %3254 = vmatprep.subr.mxu0 0.0
        %3255 = vmatpush1.msra.mxu0 0.0
        %3256 = vmatprep.subr.mxu0 0.0
        %3257 = vmatpush1.msra.mxu0 0.0
        %3258 = vmatprep.subr.mxu0 0.0
        %3259 = vmatpush1.msra.mxu0 0.0
        %3260 = vmatprep.subr.mxu0 0.0
        %3261 = vmatpush1.msra.mxu0 0.0
        %3262 = vmatprep.subr.mxu0 0.0
        %3263 = vmatpush1.msra.mxu0 0.0
        %3264 = vmatprep.mubr.f32.mxu0 0.0
        %3265 = vmatmul.mubr.f32.gmra.mrb[0].mxu0 %v3195
        %v3266 = vpop.f32.mrb[0].mxu0
        %v3267 = vadd.f32 %v3193, %v3266
        %v3268 = vpop.f32.mrb[0].mxu0
        %3269 = vmatprep.mubr.f32.mxu0 0.0
        %3270 = vmatmul.mubr.f32.gmra.mrb[0].mxu0 %v3198
        %v3271 = vpop.f32.mrb[0].mxu0
        %v3272 = vadd.f32 %v3193, %v3271
        %v3273 = vpop.f32.mrb[0].mxu0
        %3274 = vdwg.mxu0
        %3275 = vst [vmem:[%s9] sm:$0xff] %v3267
        %3276 = vst [vmem:[%s9 + $0x8] sm:$0xff] %v3272
      $region64: #{transformer_model_forward.1} parent=55 // pred_fallthru
        _
      // Predicated region
      $region65: #{transformer_model_forward.1} parent=55 // pred_check
        %p3277 = pneg %p247
      $region66: #{transformer_model_forward.1} parent=55 // pred_check_branch
        %3279 = sbr.rel (%p3277) target = $region68
      $region67: #{transformer_model_forward.1} parent=55 // pred_region
        _
      $region68: #{transformer_model_forward.1} parent=55 // pred_fallthru
        _
      // Predicated region
      $region69: #{transformer_model_forward.1} parent=55 // pred_check
        %p3280 = pneg %p247
      $region70: #{transformer_model_forward.1} parent=55 // pred_check_branch
        %3282 = sbr.rel (%p3280) target = $region72
      $region71: #{transformer_model_forward.1} parent=55 // pred_region
        _
      $region72: #{transformer_model_forward.1} parent=55 // pred_fallthru
        _
    $region56: #{transformer_model_forward.1} parent=5 // pred_fallthru
      _
    %p3283 = scmp.le.s32.totalorder 2, %s15
    // Predicated region
    $region73: #{transformer_model_forward.1} parent=5 // pred_check
      %p3284 = pneg %p3283
    $region74: #{transformer_model_forward.1} parent=5 // pred_check_branch
      %3286 = sbr.rel (%p3284) target = $region76
    $region75: #{transformer_model_forward.1} parent=5 // pred_region
      %s3287 = ssub.s32 %s15, 2
    $region76: #{transformer_model_forward.1} parent=5 // pred_fallthru
      _
  $region6: #{transformer_model_forward.1} parent=0 // loop_footer
    %s19 = sadd.s32 1, %s15
  $region7: #{transformer_model_forward.1} parent=0 // loop_footer_branch
    %14 = sbr.rel target = $region3
  $region8: #{transformer_model_forward.1} parent=0 // loop_exit
    _

</llo_original>
